<compile_context>
chip_gen: v5e
topology: v5e:2x2
jax: 0.10.0
libtpu: 0.0.40
codegen_flags: <defaults>
</compile_context>

<pallas_src>
import math
import functools

import jax
import jax.numpy as jnp
from jax import lax
from jax.experimental import pallas as pl
from jax.experimental.pallas import tpu as pltpu


MW1_PAD = 16  # bf16 sublane-tile aligned start row of mw2 inside the motion weight slab


# ---------------------------------------------------------------------------
# In-kernel helpers (f32 VPU/EUP math)
# ---------------------------------------------------------------------------
def _ln(x, g, b, eps=1e-5):
    mu = jnp.mean(x, axis=-1, keepdims=True)
    var = jnp.mean((x - mu) * (x - mu), axis=-1, keepdims=True)
    return (x - mu) * lax.rsqrt(var + eps) * g + b


def _quick_gelu(x):
    return x * jax.nn.sigmoid(1.702 * x)


# ---------------------------------------------------------------------------
# Fused kernel: motion encoder (masked mean-pool + 2-layer MLP) and CLIP-style
# text encoder (pre-LN MHA block + MLP, final LN, EOT pooling, text projection).
# One grid step == one batch element (TB = 1).
# ---------------------------------------------------------------------------
def fused_align_kernel(len_ref, eot_ref,                       # scalar prefetch (SMEM)
                       motion_ref, x_ref, pbias_ref,           # batch-tiled activations
                       mw_ref, wqkv_ref, wo_ref, wfc1_ref, wfc2_ref, wproj_ref,
                       rowb_ref, vecd_ref,                     # resident weight slabs
                       mout_ref, tout_ref,                     # lane-dense outputs
                       *, n_heads):
    b = pl.program_id(0)
    f32, bf16 = jnp.float32, jnp.bfloat16

    _, T, Dm = motion_ref.shape
    _, S, D = x_ref.shape
    F = wfc1_ref.shape[1]
    H = mw_ref.shape[1]
    hd = D // n_heads
    scale = 1.0 / math.sqrt(hd)

    # packed f32 slabs (static, lane-aligned slices)
    ln1_g = vecd_ref[0:1, :]
    ln1_b = vecd_ref[1:2, :]
    ln2_g = vecd_ref[2:3, :]
    ln2_b = vecd_ref[3:4, :]
    lnf_g = vecd_ref[4:5, :]
    lnf_b = vecd_ref[5:6, :]
    b_o = vecd_ref[6:7, :]
    b_fc2 = vecd_ref[7:8, :]
    mb1 = vecd_ref[8:9, 0:H]
    mb2 = vecd_ref[9:10, 0:H]
    b_qkv = rowb_ref[0:1, :]
    b_fc1 = rowb_ref[1:2, 0:F]

    # ============ motion encoder: masked mean-pool (VPU) + 2-layer MLP ============
    motion = motion_ref[0]                                        # (T, Dm) f32
    length = len_ref[b]
    frame_valid = (lax.broadcasted_iota(jnp.int32, (T, 1), 0) < length).astype(f32)
    pooled_m = jnp.sum(motion * frame_valid, axis=0, keepdims=True)       # (1, Dm)
    pooled_m = pooled_m * (1.0 / jnp.maximum(length, 1).astype(f32))

    mw1 = mw_ref[0:Dm, :]                                         # (Dm, H) bf16
    mw2 = mw_ref[MW1_PAD:MW1_PAD + H, :]                          # (H, Em) bf16
    hm = jnp.dot(pooled_m.astype(bf16), mw1, preferred_element_type=f32) + mb1
    hm = jnp.maximum(hm, 0.0)                                     # ReLU
    motion_emb = jnp.dot(hm.astype(bf16), mw2, preferred_element_type=f32) + mb2
    mout_ref[0] = motion_emb                                      # (1, Em) lane-dense

    # ============ CLIP text block: pre-LN MHA + MLP, final LN, EOT pool ============
    x = x_ref[0]                                                  # (S, D) f32 residual

    # --- multi-head self-attention, fused QKV projection ---
    h1 = _ln(x, ln1_g, ln1_b)
    qkv = jnp.dot(h1.astype(bf16), wqkv_ref[...],
                  preferred_element_type=f32) + b_qkv             # (S, 3D)
    q = qkv[:, 0 * D:1 * D]
    k = qkv[:, 1 * D:2 * D]
    v = qkv[:, 2 * D:3 * D]

    rows = lax.broadcasted_iota(jnp.int32, (S, S), 0)
    cols = lax.broadcasted_iota(jnp.int32, (S, S), 1)
    causal = (cols > rows).astype(f32) * (-1e9)                   # CLIP text is causal
    bias = causal + pbias_ref[0]                                  # + padding bias (1, S)

    heads = []
    for hh in range(n_heads):                                     # static unroll; hd % 128 == 0
        sl = slice(hh * hd, (hh + 1) * hd)
        qh = q[:, sl].astype(bf16)
        kh = k[:, sl].astype(bf16)
        vh = v[:, sl].astype(bf16)
        sc = jnp.einsum('sd,td->st', qh, kh,
                        preferred_element_type=f32) * scale + bias
        m = jnp.max(sc, axis=-1, keepdims=True)
        p = jnp.exp(sc - m)
        # exact reciprocal (approx=True costs ~1e-3 rel. error vs PyTorch parity)
        p = p * pl.reciprocal(jnp.sum(p, axis=-1, keepdims=True), approx=False)
        heads.append(jnp.dot(p.astype(bf16), vh, preferred_element_type=f32))
    attn = jnp.concatenate(heads, axis=1)                         # (S, D), 128-aligned
    attn = jnp.dot(attn.astype(bf16), wo_ref[...],
                   preferred_element_type=f32) + b_o
    x = x + attn

    # --- MLP block (quick-GELU) ---
    h2 = _ln(x, ln2_g, ln2_b)
    mlp = jnp.dot(h2.astype(bf16), wfc1_ref[...],
                  preferred_element_type=f32) + b_fc1
    mlp = _quick_gelu(mlp)
    mlp = jnp.dot(mlp.astype(bf16), wfc2_ref[...],
                  preferred_element_type=f32) + b_fc2
    x = x + mlp

    # --- final LN, EOT pooling via SMEM index (VPU select + sum), projection ---
    xf = _ln(x, lnf_g, lnf_b)
    eot = eot_ref[b]
    sel = (lax.broadcasted_iota(jnp.int32, (S, 1), 0) == eot).astype(f32)
    pooled_t = jnp.sum(xf * sel, axis=0, keepdims=True)           # (1, D)
    text_emb = jnp.dot(pooled_t.astype(bf16), wproj_ref[...],
                       preferred_element_type=f32)                # (1, Et)
    tout_ref[0] = text_emb                                        # lane-dense store


# ---------------------------------------------------------------------------
# Wrapper (JAX glue: embedding gather, EOT index, padding bias)
# ---------------------------------------------------------------------------
def clip_motion_align_pallas(params, motion, lengths, input_ids, attention_mask,
                             *, n_heads=2):
    mp, tp = params["motion"], params["text"]
    B, T, Dm = motion.shape
    S = input_ids.shape[1]
    D = tp["w_qkv"].shape[0]
    F = tp["w_fc1"].shape[1]
    H = mp["w_slab"].shape[1]
    Em = H
    Et = tp["w_proj"].shape[1]

    # text glue: token + positional embedding gather stays in JAX
    x = (tp["tok_emb"][input_ids] + tp["pos_emb"][None, :S, :]).astype(jnp.float32)
    eot_idx = jnp.argmax(input_ids, axis=-1).astype(jnp.int32)         # CLIP EOT pooling
    pad_bias = (attention_mask.astype(jnp.float32) - 1.0)[:, None, :] * 1e9   # (B,1,S)

    TB = 1                    # batch tile; keep working set small (v7x 64 MiB VMEM)
    grid = (B // TB,)
    batch3 = lambda b, lens, eot: (b, 0, 0)
    const2 = lambda b, lens, eot: (0, 0)

    grid_spec = pltpu.PrefetchScalarGridSpec(
        num_scalar_prefetch=2,
        grid=grid,
        in_specs=[
            pl.BlockSpec((TB, T, Dm), batch3),            # motion (streamed)
            pl.BlockSpec((TB, S, D), batch3),             # token+pos embeddings
            pl.BlockSpec((TB, 1, S), batch3),             # padding attention bias
            pl.BlockSpec(mp["w_slab"].shape, const2),     # motion MLP weight slab
            pl.BlockSpec((D, 3 * D), const2),             # fused QKV weight
            pl.BlockSpec((D, D), const2),                 # attn output proj
            pl.BlockSpec((D, F), const2),                 # fc1
            pl.BlockSpec((F, D), const2),                 # fc2
            pl.BlockSpec((D, Et), const2),                # text projection
            pl.BlockSpec(tp["row_slab"].shape, const2),   # b_qkv / b_fc1 slab
            pl.BlockSpec(tp["vec_slab"].shape, const2),   # LN params + bias slab
        ],
        out_specs=[
            pl.BlockSpec((TB, 1, Em), batch3),
            pl.BlockSpec((TB, 1, Et), batch3),
        ],
    )

    # rough cost estimate so XLA schedules the gather / mask ops around the call
    hd = D // n_heads
    flops = B * (2 * S * D * 3 * D                 # QKV
                 + 2 * n_heads * (2 * S * S * hd)  # scores + attn*V
                 + 2 * S * D * D                   # out proj
                 + 2 * 2 * S * D * F               # fc1 + fc2
                 + 2 * D * Et                      # text projection
                 + 2 * T * Dm + 2 * Dm * H + 2 * H * Em)   # motion pool + MLP
    transcendentals = B * (n_heads * S * S + S * F + 3 * S)
    weight_ops = (mp["w_slab"], tp["w_qkv"], tp["w_o"], tp["w_fc1"],
                  tp["w_fc2"], tp["w_proj"], tp["row_slab"], tp["vec_slab"])
    bytes_accessed = int(
        sum(int(a.size) * jnp.dtype(a.dtype).itemsize
            for a in (motion, x, pad_bias) + weight_ops)
        + B * (Em + Et) * 4)

    mout, tout = pl.pallas_call(
        functools.partial(fused_align_kernel, n_heads=n_heads),
        out_shape=(jax.ShapeDtypeStruct((B, 1, Em), jnp.float32),
                   jax.ShapeDtypeStruct((B, 1, Et), jnp.float32)),
        grid_spec=grid_spec,
        compiler_params=pltpu.CompilerParams(
            dimension_semantics=("parallel",),        # shards batch over v7x's 2 TCs
            vmem_limit_bytes=32 * 1024 * 1024),       # explicit budget (v7x-safe)
        cost_estimate=pl.CostEstimate(flops=int(flops),
                                      transcendentals=int(transcendentals),
                                      bytes_accessed=bytes_accessed),
    )(lengths.astype(jnp.int32), eot_idx,
      motion, x, pad_bias,
      mp["w_slab"], tp["w_qkv"], tp["w_o"], tp["w_fc1"], tp["w_fc2"], tp["w_proj"],
      tp["row_slab"], tp["vec_slab"])

    return mout[:, 0, :], tout[:, 0, :]


# ---------------------------------------------------------------------------
# Parameter init (synthetic, deterministic) — bf16 matmul slabs, f32 bias slabs
# ---------------------------------------------------------------------------
def init_params(key, *, dm=8, motion_hidden=128, d=256, e=128, ffn=512,
                n_heads=2, vocab=64, max_seq=8, temperature=0.07):
    assert d % 128 == 0 and ffn % 128 == 0 and e % 128 == 0 and motion_hidden % 128 == 0
    assert d % n_heads == 0 and (d // n_heads) % 128 == 0
    assert e == motion_hidden       # mw1 / mw2 share one (rows, H) slab
    assert 3 * d >= ffn             # b_fc1 fits in the (2, 3d) row-bias slab
    assert dm <= MW1_PAD

    ks = jax.random.split(key, 12)
    f32, bf16 = jnp.float32, jnp.bfloat16
    s = lambda fan: 1.0 / math.sqrt(fan)

    # motion encoder (masked mean-pool + 2-layer MLP) weights, packed in one slab
    mw1 = jax.random.normal(ks[0], (dm, motion_hidden), f32) * s(dm)
    mw2 = jax.random.normal(ks[1], (motion_hidden, e), f32) * s(motion_hidden)
    mw_slab = jnp.zeros((MW1_PAD + motion_hidden, motion_hidden), f32)
    mw_slab = mw_slab.at[0:dm, :].set(mw1)
    mw_slab = mw_slab.at[MW1_PAD:MW1_PAD + motion_hidden, :].set(mw2)

    # text encoder weights
    wq = jax.random.normal(ks[2], (d, d), f32) * s(d)
    wk = jax.random.normal(ks[3], (d, d), f32) * s(d)
    wv = jax.random.normal(ks[4], (d, d), f32) * s(d)
    wo = jax.random.normal(ks[5], (d, d), f32) * s(d)
    w_fc1 = jax.random.normal(ks[6], (d, ffn), f32) * s(d)
    w_fc2 = jax.random.normal(ks[7], (ffn, d), f32) * s(ffn)
    w_proj = jax.random.normal(ks[8], (d, e), f32) * s(d)

    # packed f32 slabs: LN params + small biases
    ones_d, zeros_d = jnp.ones((1, d), f32), jnp.zeros((1, d), f32)
    pad_lane = lambda v: jnp.pad(v, ((0, 0), (0, d - v.shape[1])))
    vec_slab = jnp.concatenate(
        [ones_d, zeros_d,                       # ln1 gamma / beta
         ones_d, zeros_d,                       # ln2 gamma / beta
         ones_d, zeros_d,                       # final ln gamma / beta
         zeros_d, zeros_d,                      # attn-out bias, fc2 bias
         pad_lane(jnp.zeros((1, motion_hidden), f32)),   # motion b1
         pad_lane(jnp.zeros((1, e), f32))], axis=0)      # motion b2   -> (10, d)
    row_slab = jnp.concatenate(
        [jnp.zeros((1, 3 * d), f32),                             # fused QKV bias
         jnp.pad(jnp.zeros((1, ffn), f32), ((0, 0), (0, 3 * d - ffn)))],
        axis=0)                                                  # (2, 3d)

    return {
        "motion": {"w_slab": mw_slab.astype(bf16)},
        "text": {
            "tok_emb": jax.random.normal(ks[9], (vocab, d), f32) * 0.02,
            "pos_emb": jax.random.normal(ks[10], (max_seq, d), f32) * 0.01,
            "w_qkv": jnp.concatenate([wq, wk, wv], axis=1).astype(bf16),  # (d, 3d)
            "w_o": wo.astype(bf16),
            "w_fc1": w_fc1.astype(bf16),
            "w_fc2": w_fc2.astype(bf16),
            "w_proj": w_proj.astype(bf16),
            "vec_slab": vec_slab,
            "row_slab": row_slab,
        },
        # nn.Parameter(log(1/temperature)) — defined but unused in forward()
        "logit_scale": jnp.log(jnp.float32(1.0 / temperature)),
    }


@functools.partial(jax.jit, static_argnames=("n_heads",))
def clip_motion_align_forward(params, motion, lengths, input_ids, attention_mask,
                              *, n_heads=2):
    """Mirrors ClipMotionAlignModel.forward -> (motion_emb, text_emb)."""
    return clip_motion_align_pallas(params, motion, lengths, input_ids,
                                    attention_mask, n_heads=n_heads)


if __name__ == "__main__":
    key = jax.random.PRNGKey(0)
    kp, km, ki = jax.random.split(key, 3)

    B, T, Dm = 2, 16, 8            # motion: (batch, frames, motion-feature)
    S, vocab = 8, 64               # text:   (batch, tokens)
    D, FFN, E, H, NH = 256, 512, 128, 128, 2   # 128-aligned model dims

    params = init_params(kp, dm=Dm, motion_hidden=H, d=D, e=E, ffn=FFN,
                         n_heads=NH, vocab=vocab, max_seq=S)

    motion = jax.random.normal(km, (B, T, Dm), jnp.float32)
    lengths = jnp.array([12, 16], jnp.int32)
    input_ids = jax.random.randint(ki, (B, S), 1, vocab, jnp.int32)
    attention_mask = jnp.stack([
        (jnp.arange(S) < 6).astype(jnp.int32),
        (jnp.arange(S) < 8).astype(jnp.int32),
    ])

    motion_emb, text_emb = clip_motion_align_forward(
        params, motion, lengths, input_ids, attention_mask, n_heads=NH)
    jax.block_until_ready((motion_emb, text_emb))

    assert motion_emb.shape == (B, E) and text_emb.shape == (B, E)
    assert bool(jnp.all(jnp.isfinite(motion_emb))) and bool(jnp.all(jnp.isfinite(text_emb)))
    print("KERNEL_OK")
</pallas_src>

<mosaic_0001>
module attributes {stable_mosaic.version = 11 : i64} {
  func.func @fused_align_kernel(%arg0: i32, %arg1: memref<2xi32, #tpu.memory_space<smem>>, %arg2: memref<2xi32, #tpu.memory_space<smem>>, %arg3: memref<1x16x8xf32, #tpu.memory_space<vmem>>, %arg4: memref<1x8x256xf32, #tpu.memory_space<vmem>>, %arg5: memref<1x1x8xf32, #tpu.memory_space<vmem>>, %arg6: memref<144x128xbf16, #tpu.memory_space<vmem>>, %arg7: memref<256x768xbf16, #tpu.memory_space<vmem>>, %arg8: memref<256x256xbf16, #tpu.memory_space<vmem>>, %arg9: memref<256x512xbf16, #tpu.memory_space<vmem>>, %arg10: memref<512x256xbf16, #tpu.memory_space<vmem>>, %arg11: memref<256x128xbf16, #tpu.memory_space<vmem>>, %arg12: memref<2x768xf32, #tpu.memory_space<vmem>>, %arg13: memref<10x256xf32, #tpu.memory_space<vmem>>, %arg14: memref<1x1x128xf32, #tpu.memory_space<vmem>>, %arg15: memref<1x1x128xf32, #tpu.memory_space<vmem>>) attributes {dimension_semantics = [#tpu.dimension_semantics<parallel>], iteration_bounds = array<i64: 2>, scalar_prefetch = 2 : i64, scratch_operands = 0 : i64, tpu.core_type = #tpu.core_type<tc>, window_params = [{transform_indices = @transform_0, window_bounds = array<i64: 1, 16, 8>}, {transform_indices = @transform_1, window_bounds = array<i64: 1, 8, 256>}, {transform_indices = @transform_2, window_bounds = array<i64: 1, 1, 8>}, {pipeline_mode = #tpu.pipeline_mode<synchronous>, transform_indices = @transform_3, window_bounds = array<i64: 144, 128>}, {pipeline_mode = #tpu.pipeline_mode<synchronous>, transform_indices = @transform_4, window_bounds = array<i64: 256, 768>}, {pipeline_mode = #tpu.pipeline_mode<synchronous>, transform_indices = @transform_5, window_bounds = array<i64: 256, 256>}, {pipeline_mode = #tpu.pipeline_mode<synchronous>, transform_indices = @transform_6, window_bounds = array<i64: 256, 512>}, {pipeline_mode = #tpu.pipeline_mode<synchronous>, transform_indices = @transform_7, window_bounds = array<i64: 512, 256>}, {pipeline_mode = #tpu.pipeline_mode<synchronous>, transform_indices = @transform_8, window_bounds = array<i64: 256, 128>}, {pipeline_mode = #tpu.pipeline_mode<synchronous>, transform_indices = @transform_9, window_bounds = array<i64: 2, 768>}, {pipeline_mode = #tpu.pipeline_mode<synchronous>, transform_indices = @transform_10, window_bounds = array<i64: 10, 256>}, {transform_indices = @transform_11, window_bounds = array<i64: 1, 1, 128>}, {transform_indices = @transform_12, window_bounds = array<i64: 1, 1, 128>}]} {
    %c0 = arith.constant 0 : index
    %c0_0 = arith.constant 0 : index
    %0 = vector.load %arg13[%c0, %c0_0] : memref<10x256xf32, #tpu.memory_space<vmem>>, vector<1x256xf32>
    %c1 = arith.constant 1 : index
    %c0_1 = arith.constant 0 : index
    %1 = vector.load %arg13[%c1, %c0_1] : memref<10x256xf32, #tpu.memory_space<vmem>>, vector<1x256xf32>
    %c2 = arith.constant 2 : index
    %c0_2 = arith.constant 0 : index
    %2 = vector.load %arg13[%c2, %c0_2] : memref<10x256xf32, #tpu.memory_space<vmem>>, vector<1x256xf32>
    %c3 = arith.constant 3 : index
    %c0_3 = arith.constant 0 : index
    %3 = vector.load %arg13[%c3, %c0_3] : memref<10x256xf32, #tpu.memory_space<vmem>>, vector<1x256xf32>
    %c4 = arith.constant 4 : index
    %c0_4 = arith.constant 0 : index
    %4 = vector.load %arg13[%c4, %c0_4] : memref<10x256xf32, #tpu.memory_space<vmem>>, vector<1x256xf32>
    %c5 = arith.constant 5 : index
    %c0_5 = arith.constant 0 : index
    %5 = vector.load %arg13[%c5, %c0_5] : memref<10x256xf32, #tpu.memory_space<vmem>>, vector<1x256xf32>
    %c6 = arith.constant 6 : index
    %c0_6 = arith.constant 0 : index
    %6 = vector.load %arg13[%c6, %c0_6] : memref<10x256xf32, #tpu.memory_space<vmem>>, vector<1x256xf32>
    %c7 = arith.constant 7 : index
    %c0_7 = arith.constant 0 : index
    %7 = vector.load %arg13[%c7, %c0_7] : memref<10x256xf32, #tpu.memory_space<vmem>>, vector<1x256xf32>
    %c8 = arith.constant 8 : index
    %c0_8 = arith.constant 0 : index
    %8 = vector.load %arg13[%c8, %c0_8] : memref<10x256xf32, #tpu.memory_space<vmem>>, vector<1x128xf32>
    %c9 = arith.constant 9 : index
    %c0_9 = arith.constant 0 : index
    %9 = vector.load %arg13[%c9, %c0_9] : memref<10x256xf32, #tpu.memory_space<vmem>>, vector<1x128xf32>
    %c0_10 = arith.constant 0 : index
    %c0_11 = arith.constant 0 : index
    %10 = vector.load %arg12[%c0_10, %c0_11] : memref<2x768xf32, #tpu.memory_space<vmem>>, vector<1x768xf32>
    %c1_12 = arith.constant 1 : index
    %c0_13 = arith.constant 0 : index
    %11 = vector.load %arg12[%c1_12, %c0_13] : memref<2x768xf32, #tpu.memory_space<vmem>>, vector<1x512xf32>
    %c0_14 = arith.constant 0 : index
    %c0_15 = arith.constant 0 : index
    %c0_16 = arith.constant 0 : index
    %12 = vector.load %arg3[%c0_14, %c0_15, %c0_16] : memref<1x16x8xf32, #tpu.memory_space<vmem>>, vector<1x16x8xf32>
    %13 = vector.shape_cast %12 : vector<1x16x8xf32> to vector<16x8xf32>
    %14 = arith.index_cast %arg0 : i32 to index
    %15 = memref.load %arg1[%14] : memref<2xi32, #tpu.memory_space<smem>>
    %16 = tpu.iota {dimensions = array<i32: 0>} : vector<16x1xi32>
    %17 = vector.broadcast %15 : i32 to vector<16x1xi32>
    %18 = arith.cmpi slt, %16, %17 : vector<16x1xi32>
    %19 = arith.extui %18 : vector<16x1xi1> to vector<16x1xi32>
    %20 = arith.sitofp %19 : vector<16x1xi32> to vector<16x1xf32>
    %21 = vector.broadcast %20 : vector<16x1xf32> to vector<16x8xf32>
    %22 = arith.mulf %13, %21 : vector<16x8xf32>
    %cst = arith.constant dense<0.000000e+00> : vector<8xf32>
    %23 = vector.multi_reduction <add>, %22, %cst [0] : vector<16x8xf32> to vector<8xf32>
    %24 = vector.shape_cast %23 : vector<8xf32> to vector<1x8xf32>
    %c1_i32 = arith.constant 1 : i32
    %25 = arith.maxsi %15, %c1_i32 : i32
    %26 = arith.sitofp %25 : i32 to f32
    %cst_17 = arith.constant 1.000000e+00 : f32
    %27 = arith.divf %cst_17, %26 : f32
    %28 = vector.broadcast %27 : f32 to vector<1x8xf32>
    %29 = arith.mulf %24, %28 : vector<1x8xf32>
    %c0_18 = arith.constant 0 : index
    %c0_19 = arith.constant 0 : index
    %30 = vector.load %arg6[%c0_18, %c0_19] : memref<144x128xbf16, #tpu.memory_space<vmem>>, vector<8x128xbf16>
    %c16 = arith.constant 16 : index
    %c0_20 = arith.constant 0 : index
    %31 = vector.load %arg6[%c16, %c0_20] : memref<144x128xbf16, #tpu.memory_space<vmem>>, vector<128x128xbf16>
    %32 = arith.truncf %29 : vector<1x8xf32> to vector<1x8xbf16>
    %cst_21 = arith.constant dense<0.000000e+00> : vector<1x128xf32>
    %33 = tpu.matmul %32, %30, %cst_21 {dimension_numbers = #tpu.dot_dimension_numbers<[1], [0], [0], [1], [0, 0, 1, 1], [], []>} : vector<1x8xbf16>, vector<8x128xbf16>, vector<1x128xf32> -> vector<1x128xf32>
    %34 = arith.addf %33, %8 : vector<1x128xf32>
    %cst_22 = arith.constant 0.000000e+00 : f32
    %35 = vector.broadcast %cst_22 : f32 to vector<1x128xf32>
    %36 = arith.maximumf %34, %35 : vector<1x128xf32>
    %37 = arith.truncf %36 : vector<1x128xf32> to vector<1x128xbf16>
    %cst_23 = arith.constant dense<0.000000e+00> : vector<1x128xf32>
    %38 = tpu.matmul %37, %31, %cst_23 {dimension_numbers = #tpu.dot_dimension_numbers<[1], [0], [0], [1], [0, 0, 1, 1], [], []>} : vector<1x128xbf16>, vector<128x128xbf16>, vector<1x128xf32> -> vector<1x128xf32>
    %39 = arith.addf %38, %9 : vector<1x128xf32>
    %c0_24 = arith.constant 0 : index
    %c0_25 = arith.constant 0 : index
    %c0_26 = arith.constant 0 : index
    %40 = vector.load %arg14[%c0_24, %c0_25, %c0_26] : memref<1x1x128xf32, #tpu.memory_space<vmem>>, vector<1x1x128xf32>
    %41 = vector.shape_cast %40 : vector<1x1x128xf32> to vector<1x128xf32>
    %42 = vector.shape_cast %39 : vector<1x128xf32> to vector<1x1x128xf32>
    tpu.vector_store %arg14[%c0_24, %c0_25, %c0_26], %42 {strides = array<i32>} : memref<1x1x128xf32, #tpu.memory_space<vmem>>, vector<1x1x128xf32>,
    %c0_27 = arith.constant 0 : index
    %c0_28 = arith.constant 0 : index
    %c0_29 = arith.constant 0 : index
    %43 = vector.load %arg4[%c0_27, %c0_28, %c0_29] : memref<1x8x256xf32, #tpu.memory_space<vmem>>, vector<1x8x256xf32>
    %44 = vector.shape_cast %43 : vector<1x8x256xf32> to vector<8x256xf32>
    %cst_30 = arith.constant dense<0.000000e+00> : vector<8xf32>
    %45 = vector.multi_reduction <add>, %44, %cst_30 [1] : vector<8x256xf32> to vector<8xf32>
    %46 = vector.shape_cast %45 : vector<8xf32> to vector<8x1xf32>
    %cst_31 = arith.constant 2.560000e+02 : f32
    %47 = vector.broadcast %cst_31 : f32 to vector<8x1xf32>
    %48 = arith.divf %46, %47 : vector<8x1xf32>
    %49 = vector.broadcast %48 : vector<8x1xf32> to vector<8x256xf32>
    %50 = arith.subf %44, %49 : vector<8x256xf32>
    %51 = vector.broadcast %48 : vector<8x1xf32> to vector<8x256xf32>
    %52 = arith.subf %44, %51 : vector<8x256xf32>
    %53 = arith.mulf %50, %52 : vector<8x256xf32>
    %cst_32 = arith.constant dense<0.000000e+00> : vector<8xf32>
    %54 = vector.multi_reduction <add>, %53, %cst_32 [1] : vector<8x256xf32> to vector<8xf32>
    %55 = vector.shape_cast %54 : vector<8xf32> to vector<8x1xf32>
    %cst_33 = arith.constant 2.560000e+02 : f32
    %56 = vector.broadcast %cst_33 : f32 to vector<8x1xf32>
    %57 = arith.divf %55, %56 : vector<8x1xf32>
    %58 = vector.broadcast %48 : vector<8x1xf32> to vector<8x256xf32>
    %59 = arith.subf %44, %58 : vector<8x256xf32>
    %cst_34 = arith.constant 9.99999974E-6 : f32
    %60 = vector.broadcast %cst_34 : f32 to vector<8x1xf32>
    %61 = arith.addf %57, %60 : vector<8x1xf32>
    %62 = math.rsqrt %61 : vector<8x1xf32>
    %63 = vector.broadcast %62 : vector<8x1xf32> to vector<8x256xf32>
    %64 = arith.mulf %59, %63 : vector<8x256xf32>
    %65 = vector.broadcast %0 : vector<1x256xf32> to vector<8x256xf32>
    %66 = arith.mulf %64, %65 : vector<8x256xf32>
    %67 = vector.broadcast %1 : vector<1x256xf32> to vector<8x256xf32>
    %68 = arith.addf %66, %67 : vector<8x256xf32>
    %69 = arith.truncf %68 : vector<8x256xf32> to vector<8x256xbf16>
    %c0_35 = arith.constant 0 : index
    %c0_36 = arith.constant 0 : index
    %70 = vector.load %arg7[%c0_35, %c0_36] : memref<256x768xbf16, #tpu.memory_space<vmem>>, vector<256x768xbf16>
    %cst_37 = arith.constant dense<0.000000e+00> : vector<8x768xf32>
    %71 = tpu.matmul %69, %70, %cst_37 {dimension_numbers = #tpu.dot_dimension_numbers<[1], [0], [0], [1], [0, 0, 1, 1], [], []>} : vector<8x256xbf16>, vector<256x768xbf16>, vector<8x768xf32> -> vector<8x768xf32>
    %72 = vector.broadcast %10 : vector<1x768xf32> to vector<8x768xf32>
    %73 = arith.addf %71, %72 : vector<8x768xf32>
    %74 = vector.extract_strided_slice %73 {offsets = [0, 0], sizes = [8, 256], strides = [1, 1]} : vector<8x768xf32> to vector<8x256xf32>
    %75 = vector.extract_strided_slice %73 {offsets = [0, 256], sizes = [8, 256], strides = [1, 1]} : vector<8x768xf32> to vector<8x256xf32>
    %76 = vector.extract_strided_slice %73 {offsets = [0, 512], sizes = [8, 256], strides = [1, 1]} : vector<8x768xf32> to vector<8x256xf32>
    %77 = tpu.iota {dimensions = array<i32: 0>} : vector<8x8xi32>
    %78 = tpu.iota {dimensions = array<i32: 1>} : vector<8x8xi32>
    %79 = arith.cmpi sgt, %78, %77 : vector<8x8xi32>
    %80 = arith.extui %79 : vector<8x8xi1> to vector<8x8xi32>
    %81 = arith.sitofp %80 : vector<8x8xi32> to vector<8x8xf32>
    %cst_38 = arith.constant -1.000000e+09 : f32
    %82 = vector.broadcast %cst_38 : f32 to vector<8x8xf32>
    %83 = arith.mulf %81, %82 : vector<8x8xf32>
    %c0_39 = arith.constant 0 : index
    %c0_40 = arith.constant 0 : index
    %c0_41 = arith.constant 0 : index
    %84 = vector.load %arg5[%c0_39, %c0_40, %c0_41] : memref<1x1x8xf32, #tpu.memory_space<vmem>>, vector<1x1x8xf32>
    %85 = vector.shape_cast %84 : vector<1x1x8xf32> to vector<1x8xf32>
    %86 = vector.broadcast %85 : vector<1x8xf32> to vector<8x8xf32>
    %87 = arith.addf %83, %86 : vector<8x8xf32>
    %88 = vector.extract_strided_slice %74 {offsets = [0, 0], sizes = [8, 128], strides = [1, 1]} : vector<8x256xf32> to vector<8x128xf32>
    %89 = arith.truncf %88 : vector<8x128xf32> to vector<8x128xbf16>
    %90 = vector.extract_strided_slice %75 {offsets = [0, 0], sizes = [8, 128], strides = [1, 1]} : vector<8x256xf32> to vector<8x128xf32>
    %91 = arith.truncf %90 : vector<8x128xf32> to vector<8x128xbf16>
    %92 = vector.extract_strided_slice %76 {offsets = [0, 0], sizes = [8, 128], strides = [1, 1]} : vector<8x256xf32> to vector<8x128xf32>
    %93 = arith.truncf %92 : vector<8x128xf32> to vector<8x128xbf16>
    "tpu.trace_start"() <{level = 10 : i32, message = "sd,td->st"}> : () -> ()
    %cst_42 = arith.constant dense<0.000000e+00> : vector<8x8xf32>
    %94 = tpu.matmul %89, %91, %cst_42 {dimension_numbers = #tpu.dot_dimension_numbers<[1], [1], [0], [0], [0, 0, 1, 0], [], []>} : vector<8x128xbf16>, vector<8x128xbf16>, vector<8x8xf32> -> vector<8x8xf32>
    "tpu.trace_stop"() : () -> ()
    %cst_43 = arith.constant 0.0883883461 : f32
    %95 = vector.broadcast %cst_43 : f32 to vector<8x8xf32>
    %96 = arith.mulf %94, %95 : vector<8x8xf32>
    %97 = arith.addf %96, %87 : vector<8x8xf32>
    %cst_44 = arith.constant dense<0xFF800000> : vector<8xf32>
    %98 = vector.multi_reduction <maximumf>, %97, %cst_44 [1] : vector<8x8xf32> to vector<8xf32>
    %99 = vector.shape_cast %98 : vector<8xf32> to vector<8x1xf32>
    %100 = vector.broadcast %99 : vector<8x1xf32> to vector<8x8xf32>
    %101 = arith.subf %97, %100 : vector<8x8xf32>
    %102 = math.exp %101 : vector<8x8xf32>
    %cst_45 = arith.constant dense<0.000000e+00> : vector<8xf32>
    %103 = vector.multi_reduction <add>, %102, %cst_45 [1] : vector<8x8xf32> to vector<8xf32>
    %104 = vector.shape_cast %103 : vector<8xf32> to vector<8x1xf32>
    %105 = tpu.reciprocal %104 : vector<8x1xf32> -> vector<8x1xf32>
    %106 = vector.broadcast %105 : vector<8x1xf32> to vector<8x8xf32>
    %107 = arith.mulf %102, %106 : vector<8x8xf32>
    %108 = arith.truncf %107 : vector<8x8xf32> to vector<8x8xbf16>
    %cst_46 = arith.constant dense<0.000000e+00> : vector<8x128xf32>
    %109 = tpu.matmul %108, %93, %cst_46 {dimension_numbers = #tpu.dot_dimension_numbers<[1], [0], [0], [1], [0, 0, 1, 1], [], []>} : vector<8x8xbf16>, vector<8x128xbf16>, vector<8x128xf32> -> vector<8x128xf32>
    %110 = vector.extract_strided_slice %74 {offsets = [0, 128], sizes = [8, 128], strides = [1, 1]} : vector<8x256xf32> to vector<8x128xf32>
    %111 = arith.truncf %110 : vector<8x128xf32> to vector<8x128xbf16>
    %112 = vector.extract_strided_slice %75 {offsets = [0, 128], sizes = [8, 128], strides = [1, 1]} : vector<8x256xf32> to vector<8x128xf32>
    %113 = arith.truncf %112 : vector<8x128xf32> to vector<8x128xbf16>
    %114 = vector.extract_strided_slice %76 {offsets = [0, 128], sizes = [8, 128], strides = [1, 1]} : vector<8x256xf32> to vector<8x128xf32>
    %115 = arith.truncf %114 : vector<8x128xf32> to vector<8x128xbf16>
    "tpu.trace_start"() <{level = 10 : i32, message = "sd,td->st"}> : () -> ()
    %cst_47 = arith.constant dense<0.000000e+00> : vector<8x8xf32>
    %116 = tpu.matmul %111, %113, %cst_47 {dimension_numbers = #tpu.dot_dimension_numbers<[1], [1], [0], [0], [0, 0, 1, 0], [], []>} : vector<8x128xbf16>, vector<8x128xbf16>, vector<8x8xf32> -> vector<8x8xf32>
    "tpu.trace_stop"() : () -> ()
    %cst_48 = arith.constant 0.0883883461 : f32
    %117 = vector.broadcast %cst_48 : f32 to vector<8x8xf32>
    %118 = arith.mulf %116, %117 : vector<8x8xf32>
    %119 = arith.addf %118, %87 : vector<8x8xf32>
    %cst_49 = arith.constant dense<0xFF800000> : vector<8xf32>
    %120 = vector.multi_reduction <maximumf>, %119, %cst_49 [1] : vector<8x8xf32> to vector<8xf32>
    %121 = vector.shape_cast %120 : vector<8xf32> to vector<8x1xf32>
    %122 = vector.broadcast %121 : vector<8x1xf32> to vector<8x8xf32>
    %123 = arith.subf %119, %122 : vector<8x8xf32>
    %124 = math.exp %123 : vector<8x8xf32>
    %cst_50 = arith.constant dense<0.000000e+00> : vector<8xf32>
    %125 = vector.multi_reduction <add>, %124, %cst_50 [1] : vector<8x8xf32> to vector<8xf32>
    %126 = vector.shape_cast %125 : vector<8xf32> to vector<8x1xf32>
    %127 = tpu.reciprocal %126 : vector<8x1xf32> -> vector<8x1xf32>
    %128 = vector.broadcast %127 : vector<8x1xf32> to vector<8x8xf32>
    %129 = arith.mulf %124, %128 : vector<8x8xf32>
    %130 = arith.truncf %129 : vector<8x8xf32> to vector<8x8xbf16>
    %cst_51 = arith.constant dense<0.000000e+00> : vector<8x128xf32>
    %131 = tpu.matmul %130, %115, %cst_51 {dimension_numbers = #tpu.dot_dimension_numbers<[1], [0], [0], [1], [0, 0, 1, 1], [], []>} : vector<8x8xbf16>, vector<8x128xbf16>, vector<8x128xf32> -> vector<8x128xf32>
    %132 = tpu.concatenate %109, %131 in 1 : vector<8x128xf32>, vector<8x128xf32> -> vector<8x256xf32>
    %133 = arith.truncf %132 : vector<8x256xf32> to vector<8x256xbf16>
    %c0_52 = arith.constant 0 : index
    %c0_53 = arith.constant 0 : index
    %134 = vector.load %arg8[%c0_52, %c0_53] : memref<256x256xbf16, #tpu.memory_space<vmem>>, vector<256x256xbf16>
    %cst_54 = arith.constant dense<0.000000e+00> : vector<8x256xf32>
    %135 = tpu.matmul %133, %134, %cst_54 {dimension_numbers = #tpu.dot_dimension_numbers<[1], [0], [0], [1], [0, 0, 1, 1], [], []>} : vector<8x256xbf16>, vector<256x256xbf16>, vector<8x256xf32> -> vector<8x256xf32>
    %136 = vector.broadcast %6 : vector<1x256xf32> to vector<8x256xf32>
    %137 = arith.addf %135, %136 : vector<8x256xf32>
    %138 = arith.addf %44, %137 : vector<8x256xf32>
    %cst_55 = arith.constant dense<0.000000e+00> : vector<8xf32>
    %139 = vector.multi_reduction <add>, %138, %cst_55 [1] : vector<8x256xf32> to vector<8xf32>
    %140 = vector.shape_cast %139 : vector<8xf32> to vector<8x1xf32>
    %cst_56 = arith.constant 2.560000e+02 : f32
    %141 = vector.broadcast %cst_56 : f32 to vector<8x1xf32>
    %142 = arith.divf %140, %141 : vector<8x1xf32>
    %143 = vector.broadcast %142 : vector<8x1xf32> to vector<8x256xf32>
    %144 = arith.subf %138, %143 : vector<8x256xf32>
    %145 = vector.broadcast %142 : vector<8x1xf32> to vector<8x256xf32>
    %146 = arith.subf %138, %145 : vector<8x256xf32>
    %147 = arith.mulf %144, %146 : vector<8x256xf32>
    %cst_57 = arith.constant dense<0.000000e+00> : vector<8xf32>
    %148 = vector.multi_reduction <add>, %147, %cst_57 [1] : vector<8x256xf32> to vector<8xf32>
    %149 = vector.shape_cast %148 : vector<8xf32> to vector<8x1xf32>
    %cst_58 = arith.constant 2.560000e+02 : f32
    %150 = vector.broadcast %cst_58 : f32 to vector<8x1xf32>
    %151 = arith.divf %149, %150 : vector<8x1xf32>
    %152 = vector.broadcast %142 : vector<8x1xf32> to vector<8x256xf32>
    %153 = arith.subf %138, %152 : vector<8x256xf32>
    %cst_59 = arith.constant 9.99999974E-6 : f32
    %154 = vector.broadcast %cst_59 : f32 to vector<8x1xf32>
    %155 = arith.addf %151, %154 : vector<8x1xf32>
    %156 = math.rsqrt %155 : vector<8x1xf32>
    %157 = vector.broadcast %156 : vector<8x1xf32> to vector<8x256xf32>
    %158 = arith.mulf %153, %157 : vector<8x256xf32>
    %159 = vector.broadcast %2 : vector<1x256xf32> to vector<8x256xf32>
    %160 = arith.mulf %158, %159 : vector<8x256xf32>
    %161 = vector.broadcast %3 : vector<1x256xf32> to vector<8x256xf32>
    %162 = arith.addf %160, %161 : vector<8x256xf32>
    %163 = arith.truncf %162 : vector<8x256xf32> to vector<8x256xbf16>
    %c0_60 = arith.constant 0 : index
    %c0_61 = arith.constant 0 : index
    %164 = vector.load %arg9[%c0_60, %c0_61] : memref<256x512xbf16, #tpu.memory_space<vmem>>, vector<256x512xbf16>
    %cst_62 = arith.constant dense<0.000000e+00> : vector<8x512xf32>
    %165 = tpu.matmul %163, %164, %cst_62 {dimension_numbers = #tpu.dot_dimension_numbers<[1], [0], [0], [1], [0, 0, 1, 1], [], []>} : vector<8x256xbf16>, vector<256x512xbf16>, vector<8x512xf32> -> vector<8x512xf32>
    %166 = vector.broadcast %11 : vector<1x512xf32> to vector<8x512xf32>
    %167 = arith.addf %165, %166 : vector<8x512xf32>
    %cst_63 = arith.constant 1.702000e+00 : f32
    %168 = vector.broadcast %cst_63 : f32 to vector<8x512xf32>
    %169 = arith.mulf %168, %167 : vector<8x512xf32>
    %170 = arith.negf %169 : vector<8x512xf32>
    %171 = math.exp %170 : vector<8x512xf32>
    %cst_64 = arith.constant 1.000000e+00 : f32
    %172 = vector.broadcast %cst_64 : f32 to vector<8x512xf32>
    %173 = arith.addf %172, %171 : vector<8x512xf32>
    %174 = arith.divf %172, %173 : vector<8x512xf32>
    %175 = arith.mulf %167, %174 : vector<8x512xf32>
    %176 = arith.truncf %175 : vector<8x512xf32> to vector<8x512xbf16>
    %c0_65 = arith.constant 0 : index
    %c0_66 = arith.constant 0 : index
    %177 = vector.load %arg10[%c0_65, %c0_66] : memref<512x256xbf16, #tpu.memory_space<vmem>>, vector<512x256xbf16>
    %cst_67 = arith.constant dense<0.000000e+00> : vector<8x256xf32>
    %178 = tpu.matmul %176, %177, %cst_67 {dimension_numbers = #tpu.dot_dimension_numbers<[1], [0], [0], [1], [0, 0, 1, 1], [], []>} : vector<8x512xbf16>, vector<512x256xbf16>, vector<8x256xf32> -> vector<8x256xf32>
    %179 = vector.broadcast %7 : vector<1x256xf32> to vector<8x256xf32>
    %180 = arith.addf %178, %179 : vector<8x256xf32>
    %181 = arith.addf %138, %180 : vector<8x256xf32>
    %cst_68 = arith.constant dense<0.000000e+00> : vector<8xf32>
    %182 = vector.multi_reduction <add>, %181, %cst_68 [1] : vector<8x256xf32> to vector<8xf32>
    %183 = vector.shape_cast %182 : vector<8xf32> to vector<8x1xf32>
    %cst_69 = arith.constant 2.560000e+02 : f32
    %184 = vector.broadcast %cst_69 : f32 to vector<8x1xf32>
    %185 = arith.divf %183, %184 : vector<8x1xf32>
    %186 = vector.broadcast %185 : vector<8x1xf32> to vector<8x256xf32>
    %187 = arith.subf %181, %186 : vector<8x256xf32>
    %188 = vector.broadcast %185 : vector<8x1xf32> to vector<8x256xf32>
    %189 = arith.subf %181, %188 : vector<8x256xf32>
    %190 = arith.mulf %187, %189 : vector<8x256xf32>
    %cst_70 = arith.constant dense<0.000000e+00> : vector<8xf32>
    %191 = vector.multi_reduction <add>, %190, %cst_70 [1] : vector<8x256xf32> to vector<8xf32>
    %192 = vector.shape_cast %191 : vector<8xf32> to vector<8x1xf32>
    %cst_71 = arith.constant 2.560000e+02 : f32
    %193 = vector.broadcast %cst_71 : f32 to vector<8x1xf32>
    %194 = arith.divf %192, %193 : vector<8x1xf32>
    %195 = vector.broadcast %185 : vector<8x1xf32> to vector<8x256xf32>
    %196 = arith.subf %181, %195 : vector<8x256xf32>
    %cst_72 = arith.constant 9.99999974E-6 : f32
    %197 = vector.broadcast %cst_72 : f32 to vector<8x1xf32>
    %198 = arith.addf %194, %197 : vector<8x1xf32>
    %199 = math.rsqrt %198 : vector<8x1xf32>
    %200 = vector.broadcast %199 : vector<8x1xf32> to vector<8x256xf32>
    %201 = arith.mulf %196, %200 : vector<8x256xf32>
    %202 = vector.broadcast %4 : vector<1x256xf32> to vector<8x256xf32>
    %203 = arith.mulf %201, %202 : vector<8x256xf32>
    %204 = vector.broadcast %5 : vector<1x256xf32> to vector<8x256xf32>
    %205 = arith.addf %203, %204 : vector<8x256xf32>
    %206 = arith.index_cast %arg0 : i32 to index
    %207 = memref.load %arg2[%206] : memref<2xi32, #tpu.memory_space<smem>>
    %208 = tpu.iota {dimensions = array<i32: 0>} : vector<8x1xi32>
    %209 = vector.broadcast %207 : i32 to vector<8x1xi32>
    %210 = arith.cmpi eq, %208, %209 : vector<8x1xi32>
    %211 = arith.extui %210 : vector<8x1xi1> to vector<8x1xi32>
    %212 = arith.sitofp %211 : vector<8x1xi32> to vector<8x1xf32>
    %213 = vector.broadcast %212 : vector<8x1xf32> to vector<8x256xf32>
    %214 = arith.mulf %205, %213 : vector<8x256xf32>
    %cst_73 = arith.constant dense<0.000000e+00> : vector<256xf32>
    %215 = vector.multi_reduction <add>, %214, %cst_73 [0] : vector<8x256xf32> to vector<256xf32>
    %216 = vector.shape_cast %215 : vector<256xf32> to vector<1x256xf32>
    %217 = arith.truncf %216 : vector<1x256xf32> to vector<1x256xbf16>
    %c0_74 = arith.constant 0 : index
    %c0_75 = arith.constant 0 : index
    %218 = vector.load %arg11[%c0_74, %c0_75] : memref<256x128xbf16, #tpu.memory_space<vmem>>, vector<256x128xbf16>
    %cst_76 = arith.constant dense<0.000000e+00> : vector<1x128xf32>
    %219 = tpu.matmul %217, %218, %cst_76 {dimension_numbers = #tpu.dot_dimension_numbers<[1], [0], [0], [1], [0, 0, 1, 1], [], []>} : vector<1x256xbf16>, vector<256x128xbf16>, vector<1x128xf32> -> vector<1x128xf32>
    %c0_77 = arith.constant 0 : index
    %c0_78 = arith.constant 0 : index
    %c0_79 = arith.constant 0 : index
    %220 = vector.load %arg15[%c0_77, %c0_78, %c0_79] : memref<1x1x128xf32, #tpu.memory_space<vmem>>, vector<1x1x128xf32>
    %221 = vector.shape_cast %220 : vector<1x1x128xf32> to vector<1x128xf32>
    %222 = vector.shape_cast %219 : vector<1x128xf32> to vector<1x1x128xf32>
    tpu.vector_store %arg15[%c0_77, %c0_78, %c0_79], %222 {strides = array<i32>} : memref<1x1x128xf32, #tpu.memory_space<vmem>>, vector<1x1x128xf32>,
    return
  }
  func.func @transform_0(%arg0: i32, %arg1: memref<2xi32, #tpu.memory_space<smem>>, %arg2: memref<2xi32, #tpu.memory_space<smem>>) -> (i32, i32, i32) {
    %c0_i32 = arith.constant 0 : i32
    %c0_i32_0 = arith.constant 0 : i32
    %c0_i32_1 = arith.constant 0 : i32
    return %arg0, %c0_i32, %c0_i32_0 : i32, i32, i32
  }
  func.func @transform_1(%arg0: i32, %arg1: memref<2xi32, #tpu.memory_space<smem>>, %arg2: memref<2xi32, #tpu.memory_space<smem>>) -> (i32, i32, i32) {
    %c0_i32 = arith.constant 0 : i32
    %c0_i32_0 = arith.constant 0 : i32
    %c0_i32_1 = arith.constant 0 : i32
    return %arg0, %c0_i32, %c0_i32_0 : i32, i32, i32
  }
  func.func @transform_2(%arg0: i32, %arg1: memref<2xi32, #tpu.memory_space<smem>>, %arg2: memref<2xi32, #tpu.memory_space<smem>>) -> (i32, i32, i32) {
    %c0_i32 = arith.constant 0 : i32
    %c0_i32_0 = arith.constant 0 : i32
    %c0_i32_1 = arith.constant 0 : i32
    return %arg0, %c0_i32, %c0_i32_0 : i32, i32, i32
  }
  func.func @transform_3(%arg0: i32, %arg1: memref<2xi32, #tpu.memory_space<smem>>, %arg2: memref<2xi32, #tpu.memory_space<smem>>) -> (i32, i32) {
    %c0_i32 = arith.constant 0 : i32
    %c0_i32_0 = arith.constant 0 : i32
    %c0_i32_1 = arith.constant 0 : i32
    return %c0_i32, %c0_i32_0 : i32, i32
  }
  func.func @transform_4(%arg0: i32, %arg1: memref<2xi32, #tpu.memory_space<smem>>, %arg2: memref<2xi32, #tpu.memory_space<smem>>) -> (i32, i32) {
    %c0_i32 = arith.constant 0 : i32
    %c0_i32_0 = arith.constant 0 : i32
    %c0_i32_1 = arith.constant 0 : i32
    return %c0_i32, %c0_i32_0 : i32, i32
  }
  func.func @transform_5(%arg0: i32, %arg1: memref<2xi32, #tpu.memory_space<smem>>, %arg2: memref<2xi32, #tpu.memory_space<smem>>) -> (i32, i32) {
    %c0_i32 = arith.constant 0 : i32
    %c0_i32_0 = arith.constant 0 : i32
    %c0_i32_1 = arith.constant 0 : i32
    return %c0_i32, %c0_i32_0 : i32, i32
  }
  func.func @transform_6(%arg0: i32, %arg1: memref<2xi32, #tpu.memory_space<smem>>, %arg2: memref<2xi32, #tpu.memory_space<smem>>) -> (i32, i32) {
    %c0_i32 = arith.constant 0 : i32
    %c0_i32_0 = arith.constant 0 : i32
    %c0_i32_1 = arith.constant 0 : i32
    return %c0_i32, %c0_i32_0 : i32, i32
  }
  func.func @transform_7(%arg0: i32, %arg1: memref<2xi32, #tpu.memory_space<smem>>, %arg2: memref<2xi32, #tpu.memory_space<smem>>) -> (i32, i32) {
    %c0_i32 = arith.constant 0 : i32
    %c0_i32_0 = arith.constant 0 : i32
    %c0_i32_1 = arith.constant 0 : i32
    return %c0_i32, %c0_i32_0 : i32, i32
  }
  func.func @transform_8(%arg0: i32, %arg1: memref<2xi32, #tpu.memory_space<smem>>, %arg2: memref<2xi32, #tpu.memory_space<smem>>) -> (i32, i32) {
    %c0_i32 = arith.constant 0 : i32
    %c0_i32_0 = arith.constant 0 : i32
    %c0_i32_1 = arith.constant 0 : i32
    return %c0_i32, %c0_i32_0 : i32, i32
  }
  func.func @transform_9(%arg0: i32, %arg1: memref<2xi32, #tpu.memory_space<smem>>, %arg2: memref<2xi32, #tpu.memory_space<smem>>) -> (i32, i32) {
    %c0_i32 = arith.constant 0 : i32
    %c0_i32_0 = arith.constant 0 : i32
    %c0_i32_1 = arith.constant 0 : i32
    return %c0_i32, %c0_i32_0 : i32, i32
  }
  func.func @transform_10(%arg0: i32, %arg1: memref<2xi32, #tpu.memory_space<smem>>, %arg2: memref<2xi32, #tpu.memory_space<smem>>) -> (i32, i32) {
    %c0_i32 = arith.constant 0 : i32
    %c0_i32_0 = arith.constant 0 : i32
    %c0_i32_1 = arith.constant 0 : i32
    return %c0_i32, %c0_i32_0 : i32, i32
  }
  func.func @transform_11(%arg0: i32, %arg1: memref<2xi32, #tpu.memory_space<smem>>, %arg2: memref<2xi32, #tpu.memory_space<smem>>) -> (i32, i32, i32) {
    %c0_i32 = arith.constant 0 : i32
    %c0_i32_0 = arith.constant 0 : i32
    %c0_i32_1 = arith.constant 0 : i32
    return %arg0, %c0_i32, %c0_i32_0 : i32, i32, i32
  }
  func.func @transform_12(%arg0: i32, %arg1: memref<2xi32, #tpu.memory_space<smem>>, %arg2: memref<2xi32, #tpu.memory_space<smem>>) -> (i32, i32, i32) {
    %c0_i32 = arith.constant 0 : i32
    %c0_i32_0 = arith.constant 0 : i32
    %c0_i32_1 = arith.constant 0 : i32
    return %arg0, %c0_i32, %c0_i32_0 : i32, i32, i32
  }
}

</mosaic_0001>

<llo_original>
// kernel: clip_motion_align_forward.1
$region0: #{clip_motion_align_forward.1}
  #allocation0 [shape = 'u32[]', space=smem, size = 0x4, offset = 0x4, fixed_abs, tag = 'smem constant byte address 0x4 - core index']
  #allocation1 [shape = 'u32[72,128]{1,0:T(1,128)}', space=vmem, size = 0x9000, scoped, tag = 'internal scratch']
  #allocation2 [shape = 's32[1]{0}', space=sflag, size = 0x4, scoped, tag = 'scoped memory for clip_motion_align_forward.1']
  #allocation3 [shape = 'u8[512]{0}', space=smem, size = 0x200, scoped, tag = 'prefetched SMEM operand 0']
  #allocation4 [shape = 'u8[512]{0}', space=smem, size = 0x200, scoped, tag = 'prefetched SMEM operand 1']
  %s0 = inlined_call_operand.vmem [shape: s32[2], index: 0, kind: input, shape index: {}]
  %s1 = inlined_call_operand.vmem [shape: s32[2], index: 1, kind: input, shape index: {}]
  %s2 = inlined_call_operand.vmem [shape: f32[2,16,8], index: 2, kind: input, shape index: {}]
  %s3 = inlined_call_operand.vmem [shape: f32[2,8,256], index: 3, kind: input, shape index: {}]
  %s4 = inlined_call_operand.vmem [shape: f32[2,1,8], index: 4, kind: input, shape index: {}]
  %s5 = inlined_call_operand.hbm [shape: bf16[144,128], index: 5, kind: input, shape index: {}]
  %s6 = inlined_call_operand.hbm [shape: bf16[256,768], index: 6, kind: input, shape index: {}]
  %s7 = inlined_call_operand.vmem [shape: bf16[256,256], index: 7, kind: input, shape index: {}]
  %s8 = inlined_call_operand.hbm [shape: bf16[256,512], index: 8, kind: input, shape index: {}]
  %s9 = inlined_call_operand.hbm [shape: bf16[512,256], index: 9, kind: input, shape index: {}]
  %s10 = inlined_call_operand.vmem [shape: bf16[256,128], index: 10, kind: input, shape index: {}]
  %s11 = inlined_call_operand.hbm [shape: f32[2,768], index: 11, kind: input, shape index: {}]
  %s12 = inlined_call_operand.vmem [shape: f32[10,256], index: 12, kind: input, shape index: {}]
  %s13 = inlined_call_operand.hbm [shape: f32[2,1,128], index: 13, kind: output, shape index: {0}]
  %s14 = inlined_call_operand.hbm [shape: f32[2,1,128], index: 14, kind: output, shape index: {1}]
  %15 = xla_tuple %s13, %s14
  %s16 = sld [smem:[#allocation0]]
  $region105: #{clip_motion_align_forward.1} parent=0
    _
  %s18 = ssub.s32 1, %s16
  %s19 = scalar_select 0, %s18, %s16
  %s21 = sshll.u32 %s0, 4
  %s22 = int_to_ptr.vmem [resolvable:$true] %s21
  %24 = dma.vmem_to_smem %s22, 16, [#allocation3], [#allocation2]
  %s26 = sshll.u32 %s1, 4
  %s27 = int_to_ptr.vmem [resolvable:$true] %s26
  %29 = dma.vmem_to_smem %s27, 16, [#allocation4], [#allocation2]
  %31 = dma.done [#allocation2], 32
  %32 = sfence
  $region1: #{clip_motion_align_forward.1} parent=0
    #allocation5 [shape = 'u8[36864]{0}', space=vmem, size = 0x9000, scoped, tag = 'input window, operand 5, single buffered']
    #allocation6 [shape = 's32[2]{0}', space=sflag, size = 0x8, scoped, tag = 'scoped memory for clip_motion_align_forward.1']
    #allocation7 [shape = 's32[2]{0}', space=sflag, size = 0x8, scoped, tag = 'scoped memory for clip_motion_align_forward.1']
    #allocation8 [shape = 'u8[393216]{0}', space=vmem, size = 0x60000, scoped, tag = 'input window, operand 6, single buffered']
    #allocation9 [shape = 's32[1]{0}', space=sflag, size = 0x4, scoped, tag = 'scoped memory for clip_motion_align_forward.1']
    #allocation10 [shape = 'u8[262144]{0}', space=vmem, size = 0x40000, scoped, tag = 'input window, operand 8, single buffered']
    #allocation11 [shape = 'u8[262144]{0}', space=vmem, size = 0x40000, scoped, tag = 'input window, operand 9, single buffered']
    #allocation12 [shape = 's32[1]{0}', space=sflag, size = 0x4, scoped, tag = 'scoped memory for clip_motion_align_forward.1']
    #allocation13 [shape = 'u8[6144]{0}', space=vmem, size = 0x1800, scoped, tag = 'input window, operand 11, single buffered']
    #allocation14 [shape = 'u8[1024]{0}', space=vmem, size = 0x400, scoped, tag = 'output window, operand 0']
    #allocation15 [shape = 'u8[1024]{0}', space=vmem, size = 0x400, scoped, tag = 'output window, operand 1']
    #allocation16 [shape = 's32[2]{0}', space=sflag, size = 0x8, scoped, tag = 'scoped memory for clip_motion_align_forward.1']
    %33 = vsyncpa [#allocation6], 0
    %34 = vsyncpa [#allocation9], 0
    %35 = vsyncpa [#allocation12], 0
    %36 = vsyncpa [#allocation7], 0
    %s37 = scalar_lea.sflag [#allocation7], 1
    %38 = vsyncpa %s37, 0
    %39 = vsyncpa [#allocation16], 0
    %s40 = scalar_lea.sflag [#allocation16], 1
    %41 = vsyncpa %s40, 0
    loop: start=0, step=1, limit=4
    $region2: #{clip_motion_align_forward.1} parent=1 // loop_pre_header
      _
    $region3: #{clip_motion_align_forward.1} parent=1 // loop_header
      %s43 = sphi 0, %s47
      %p44 = scmp.ge.s32.totalorder %s43, 4
      %s53 = sphi 0, %s55
      %s56 = sphi 0, %s53
      %s57 = sphi 0, %s56
      %s73 = sphi 0, %s57
      %s79 = sphi 0, %s81
      %s82 = sphi 0, %s79
      %s83 = sphi 0, %s82
      %s99 = sphi 0, %s83
      %s105 = sphi 0, %s107
      %s108 = sphi 0, %s105
      %s109 = sphi 0, %s108
      %s125 = sphi 0, %s109
      %s129 = sphi 0, %s129
      %s131 = sphi 0, %s129
      %s132 = sphi 0, %s131
      %s146 = sphi 0, %s132
      %s150 = sphi 0, %s150
      %s152 = sphi 0, %s150
      %s153 = sphi 0, %s152
      %s167 = sphi 0, %s153
      %s171 = sphi 0, %s171
      %s173 = sphi 0, %s171
      %s174 = sphi 0, %s173
      %s188 = sphi 0, %s174
      %s192 = sphi 0, %s192
      %s194 = sphi 0, %s192
      %s195 = sphi 0, %s194
      %s209 = sphi 0, %s195
      %s213 = sphi 0, %s213
      %s215 = sphi 0, %s213
      %s216 = sphi 0, %s215
      %s230 = sphi 0, %s216
      %s234 = sphi 0, %s234
      %s236 = sphi 0, %s234
      %s237 = sphi 0, %s236
      %s251 = sphi 0, %s237
      %s255 = sphi 0, %s255
      %s257 = sphi 0, %s255
      %s258 = sphi 0, %s257
      %s272 = sphi 0, %s258
      %s276 = sphi 0, %s276
      %s278 = sphi 0, %s276
      %s279 = sphi 0, %s278
      %s293 = sphi 0, %s279
      %s299 = sphi 0, %s301
      %s302 = sphi 0, %s299
      %s303 = sphi 0, %s302
      %s319 = sphi 0, %s303
      %s325 = sphi 0, %s327
      %s328 = sphi 0, %s325
      %s329 = sphi 0, %s328
      %s345 = sphi 0, %s329
    $region4: #{clip_motion_align_forward.1} parent=1 // loop_header_branch
      %46 = sbr.rel (%p44) target = $region8
    $region5: #{clip_motion_align_forward.1} parent=1 // loop_body
      %s48 = ssub.s32 %s43, 1
      %s49 = ssub.s32 %s43, 2
      %s50 = sadd.s32 %s43, 1
      %s51 = ssub.s32 %s43, %s50
      %p52 = scmp.eq.s32.totalorder %s51, 0
      %s54 = sadd.s32 %s53, 1
      %s55 = scalar_select %p52, %s53, %s54
      %p58 = pneg %p52
      %p59 = scmp.eq.s32.totalorder %s43, 1
      %p60 = por %p58, %p59
      %p61 = scmp.ne.s32.totalorder %s53, %s56
      %p62 = scmp.eq.s32.totalorder %s43, 0
      %p63 = por %p61, %p62
      %p64 = scmp.ne.s32.totalorder %s53, %s56
      %p65 = scmp.eq.s32.totalorder %s48, 1
      %p66 = por %p64, %p65
      %p67 = scmp.ne.s32.totalorder %s56, %s57
      %p68 = scmp.eq.s32.totalorder %s48, 0
      %p69 = por %p67, %p68
      %p70 = scmp.ne.s32.totalorder %s56, %s57
      %p71 = scmp.eq.s32.totalorder %s49, 1
      %p72 = por %p70, %p71
      %p74 = scmp.ne.s32.totalorder %s57, %s73
      %p75 = scmp.eq.s32.totalorder %s49, 0
      %p76 = por %p74, %p75
      %s77 = ssub.s32 %s43, %s50
      %p78 = scmp.eq.s32.totalorder %s77, 0
      %s80 = sadd.s32 %s79, 1
      %s81 = scalar_select %p78, %s79, %s80
      %p84 = pneg %p78
      %p85 = scmp.eq.s32.totalorder %s43, 1
      %p86 = por %p84, %p85
      %p87 = scmp.ne.s32.totalorder %s79, %s82
      %p88 = scmp.eq.s32.totalorder %s43, 0
      %p89 = por %p87, %p88
      %p90 = scmp.ne.s32.totalorder %s79, %s82
      %p91 = scmp.eq.s32.totalorder %s48, 1
      %p92 = por %p90, %p91
      %p93 = scmp.ne.s32.totalorder %s82, %s83
      %p94 = scmp.eq.s32.totalorder %s48, 0
      %p95 = por %p93, %p94
      %p96 = scmp.ne.s32.totalorder %s82, %s83
      %p97 = scmp.eq.s32.totalorder %s49, 1
      %p98 = por %p96, %p97
      %p100 = scmp.ne.s32.totalorder %s83, %s99
      %p101 = scmp.eq.s32.totalorder %s49, 0
      %p102 = por %p100, %p101
      %s103 = ssub.s32 %s43, %s50
      %p104 = scmp.eq.s32.totalorder %s103, 0
      %s106 = sadd.s32 %s105, 1
      %s107 = scalar_select %p104, %s105, %s106
      %p110 = pneg %p104
      %p111 = scmp.eq.s32.totalorder %s43, 1
      %p112 = por %p110, %p111
      %p113 = scmp.ne.s32.totalorder %s105, %s108
      %p114 = scmp.eq.s32.totalorder %s43, 0
      %p115 = por %p113, %p114
      %p116 = scmp.ne.s32.totalorder %s105, %s108
      %p117 = scmp.eq.s32.totalorder %s48, 1
      %p118 = por %p116, %p117
      %p119 = scmp.ne.s32.totalorder %s108, %s109
      %p120 = scmp.eq.s32.totalorder %s48, 0
      %p121 = por %p119, %p120
      %p122 = scmp.ne.s32.totalorder %s108, %s109
      %p123 = scmp.eq.s32.totalorder %s49, 1
      %p124 = por %p122, %p123
      %p126 = scmp.ne.s32.totalorder %s109, %s125
      %p127 = scmp.eq.s32.totalorder %s49, 0
      %p128 = por %p126, %p127
      %s130 = sadd.s32 %s129, 1
      %p133 = scmp.eq.s32.totalorder %s43, 1
      %p134 = scmp.ne.s32.totalorder %s129, %s131
      %p135 = scmp.eq.s32.totalorder %s43, 0
      %p136 = por %p134, %p135
      %p137 = scmp.ne.s32.totalorder %s129, %s131
      %p138 = scmp.eq.s32.totalorder %s48, 1
      %p139 = por %p137, %p138
      %p140 = scmp.ne.s32.totalorder %s131, %s132
      %p141 = scmp.eq.s32.totalorder %s48, 0
      %p142 = por %p140, %p141
      %p143 = scmp.ne.s32.totalorder %s131, %s132
      %p144 = scmp.eq.s32.totalorder %s49, 1
      %p145 = por %p143, %p144
      %p147 = scmp.ne.s32.totalorder %s132, %s146
      %p148 = scmp.eq.s32.totalorder %s49, 0
      %p149 = por %p147, %p148
      %s151 = sadd.s32 %s150, 1
      %p154 = scmp.eq.s32.totalorder %s43, 1
      %p155 = scmp.ne.s32.totalorder %s150, %s152
      %p156 = scmp.eq.s32.totalorder %s43, 0
      %p157 = por %p155, %p156
      %p158 = scmp.ne.s32.totalorder %s150, %s152
      %p159 = scmp.eq.s32.totalorder %s48, 1
      %p160 = por %p158, %p159
      %p161 = scmp.ne.s32.totalorder %s152, %s153
      %p162 = scmp.eq.s32.totalorder %s48, 0
      %p163 = por %p161, %p162
      %p164 = scmp.ne.s32.totalorder %s152, %s153
      %p165 = scmp.eq.s32.totalorder %s49, 1
      %p166 = por %p164, %p165
      %p168 = scmp.ne.s32.totalorder %s153, %s167
      %p169 = scmp.eq.s32.totalorder %s49, 0
      %p170 = por %p168, %p169
      %s172 = sadd.s32 %s171, 1
      %p175 = scmp.eq.s32.totalorder %s43, 1
      %p176 = scmp.ne.s32.totalorder %s171, %s173
      %p177 = scmp.eq.s32.totalorder %s43, 0
      %p178 = por %p176, %p177
      %p179 = scmp.ne.s32.totalorder %s171, %s173
      %p180 = scmp.eq.s32.totalorder %s48, 1
      %p181 = por %p179, %p180
      %p182 = scmp.ne.s32.totalorder %s173, %s174
      %p183 = scmp.eq.s32.totalorder %s48, 0
      %p184 = por %p182, %p183
      %p185 = scmp.ne.s32.totalorder %s173, %s174
      %p186 = scmp.eq.s32.totalorder %s49, 1
      %p187 = por %p185, %p186
      %p189 = scmp.ne.s32.totalorder %s174, %s188
      %p190 = scmp.eq.s32.totalorder %s49, 0
      %p191 = por %p189, %p190
      %s193 = sadd.s32 %s192, 1
      %p196 = scmp.eq.s32.totalorder %s43, 1
      %p197 = scmp.ne.s32.totalorder %s192, %s194
      %p198 = scmp.eq.s32.totalorder %s43, 0
      %p199 = por %p197, %p198
      %p200 = scmp.ne.s32.totalorder %s192, %s194
      %p201 = scmp.eq.s32.totalorder %s48, 1
      %p202 = por %p200, %p201
      %p203 = scmp.ne.s32.totalorder %s194, %s195
      %p204 = scmp.eq.s32.totalorder %s48, 0
      %p205 = por %p203, %p204
      %p206 = scmp.ne.s32.totalorder %s194, %s195
      %p207 = scmp.eq.s32.totalorder %s49, 1
      %p208 = por %p206, %p207
      %p210 = scmp.ne.s32.totalorder %s195, %s209
      %p211 = scmp.eq.s32.totalorder %s49, 0
      %p212 = por %p210, %p211
      %s214 = sadd.s32 %s213, 1
      %p217 = scmp.eq.s32.totalorder %s43, 1
      %p218 = scmp.ne.s32.totalorder %s213, %s215
      %p219 = scmp.eq.s32.totalorder %s43, 0
      %p220 = por %p218, %p219
      %p221 = scmp.ne.s32.totalorder %s213, %s215
      %p222 = scmp.eq.s32.totalorder %s48, 1
      %p223 = por %p221, %p222
      %p224 = scmp.ne.s32.totalorder %s215, %s216
      %p225 = scmp.eq.s32.totalorder %s48, 0
      %p226 = por %p224, %p225
      %p227 = scmp.ne.s32.totalorder %s215, %s216
      %p228 = scmp.eq.s32.totalorder %s49, 1
      %p229 = por %p227, %p228
      %p231 = scmp.ne.s32.totalorder %s216, %s230
      %p232 = scmp.eq.s32.totalorder %s49, 0
      %p233 = por %p231, %p232
      %s235 = sadd.s32 %s234, 1
      %p238 = scmp.eq.s32.totalorder %s43, 1
      %p239 = scmp.ne.s32.totalorder %s234, %s236
      %p240 = scmp.eq.s32.totalorder %s43, 0
      %p241 = por %p239, %p240
      %p242 = scmp.ne.s32.totalorder %s234, %s236
      %p243 = scmp.eq.s32.totalorder %s48, 1
      %p244 = por %p242, %p243
      %p245 = scmp.ne.s32.totalorder %s236, %s237
      %p246 = scmp.eq.s32.totalorder %s48, 0
      %p247 = por %p245, %p246
      %p248 = scmp.ne.s32.totalorder %s236, %s237
      %p249 = scmp.eq.s32.totalorder %s49, 1
      %p250 = por %p248, %p249
      %p252 = scmp.ne.s32.totalorder %s237, %s251
      %p253 = scmp.eq.s32.totalorder %s49, 0
      %p254 = por %p252, %p253
      %s256 = sadd.s32 %s255, 1
      %p259 = scmp.eq.s32.totalorder %s43, 1
      %p260 = scmp.ne.s32.totalorder %s255, %s257
      %p261 = scmp.eq.s32.totalorder %s43, 0
      %p262 = por %p260, %p261
      %p263 = scmp.ne.s32.totalorder %s255, %s257
      %p264 = scmp.eq.s32.totalorder %s48, 1
      %p265 = por %p263, %p264
      %p266 = scmp.ne.s32.totalorder %s257, %s258
      %p267 = scmp.eq.s32.totalorder %s48, 0
      %p268 = por %p266, %p267
      %p269 = scmp.ne.s32.totalorder %s257, %s258
      %p270 = scmp.eq.s32.totalorder %s49, 1
      %p271 = por %p269, %p270
      %p273 = scmp.ne.s32.totalorder %s258, %s272
      %p274 = scmp.eq.s32.totalorder %s49, 0
      %p275 = por %p273, %p274
      %s277 = sadd.s32 %s276, 1
      %p280 = scmp.eq.s32.totalorder %s43, 1
      %p281 = scmp.ne.s32.totalorder %s276, %s278
      %p282 = scmp.eq.s32.totalorder %s43, 0
      %p283 = por %p281, %p282
      %p284 = scmp.ne.s32.totalorder %s276, %s278
      %p285 = scmp.eq.s32.totalorder %s48, 1
      %p286 = por %p284, %p285
      %p287 = scmp.ne.s32.totalorder %s278, %s279
      %p288 = scmp.eq.s32.totalorder %s48, 0
      %p289 = por %p287, %p288
      %p290 = scmp.ne.s32.totalorder %s278, %s279
      %p291 = scmp.eq.s32.totalorder %s49, 1
      %p292 = por %p290, %p291
      %p294 = scmp.ne.s32.totalorder %s279, %s293
      %p295 = scmp.eq.s32.totalorder %s49, 0
      %p296 = por %p294, %p295
      %s297 = ssub.s32 %s43, %s50
      %p298 = scmp.eq.s32.totalorder %s297, 0
      %s300 = sadd.s32 %s299, 1
      %s301 = scalar_select %p298, %s299, %s300
      %p304 = pneg %p298
      %p305 = scmp.eq.s32.totalorder %s43, 1
      %p306 = por %p304, %p305
      %p307 = scmp.ne.s32.totalorder %s299, %s302
      %p308 = scmp.eq.s32.totalorder %s43, 0
      %p309 = por %p307, %p308
      %p310 = scmp.ne.s32.totalorder %s299, %s302
      %p311 = scmp.eq.s32.totalorder %s48, 1
      %p312 = por %p310, %p311
      %p313 = scmp.ne.s32.totalorder %s302, %s303
      %p314 = scmp.eq.s32.totalorder %s48, 0
      %p315 = por %p313, %p314
      %p316 = scmp.ne.s32.totalorder %s302, %s303
      %p317 = scmp.eq.s32.totalorder %s49, 1
      %p318 = por %p316, %p317
      %p320 = scmp.ne.s32.totalorder %s303, %s319
      %p321 = scmp.eq.s32.totalorder %s49, 0
      %p322 = por %p320, %p321
      %s323 = ssub.s32 %s43, %s50
      %p324 = scmp.eq.s32.totalorder %s323, 0
      %s326 = sadd.s32 %s325, 1
      %s327 = scalar_select %p324, %s325, %s326
      %p330 = pneg %p324
      %p331 = scmp.eq.s32.totalorder %s43, 1
      %p332 = por %p330, %p331
      %p333 = scmp.ne.s32.totalorder %s325, %s328
      %p334 = scmp.eq.s32.totalorder %s43, 0
      %p335 = por %p333, %p334
      %p336 = scmp.ne.s32.totalorder %s325, %s328
      %p337 = scmp.eq.s32.totalorder %s48, 1
      %p338 = por %p336, %p337
      %p339 = scmp.ne.s32.totalorder %s328, %s329
      %p340 = scmp.eq.s32.totalorder %s48, 0
      %p341 = por %p339, %p340
      %p342 = scmp.ne.s32.totalorder %s328, %s329
      %p343 = scmp.eq.s32.totalorder %s49, 1
      %p344 = por %p342, %p343
      %p346 = scmp.ne.s32.totalorder %s329, %s345
      %p347 = scmp.eq.s32.totalorder %s49, 0
      %p348 = por %p346, %p347
      %p349 = scmp.le.s32.totalorder 1, %s43
      %p350 = scmp.lt.s32.totalorder %s43, 3
      %p351 = pnand %p349, %p350
      %p352 = pneg %p351
      // Predicated region
      $region9: #{clip_motion_align_forward.1} parent=5 // pred_check
        _
      $region10: #{clip_motion_align_forward.1} parent=5 // pred_check_branch
        %354 = sbr.rel (%p351) target = $region12
      $region11: #{clip_motion_align_forward.1} parent=5 // pred_region
        %s355 = ssub.s32 %s43, 1
        // Predicated region
        $region13: #{clip_motion_align_forward.1} parent=11 // pred_check
          %p356 = pneg %p142
        $region14: #{clip_motion_align_forward.1} parent=11 // pred_check_branch
          %358 = sbr.rel (%p356) target = $region16
        $region15: #{clip_motion_align_forward.1} parent=11 // pred_region
          %360 = vsyncadd [#allocation6], 0
          %s361 = sshll.u32 %s5, 4
          %s362 = int_to_ptr.hbm [resolvable:$true] %s361
          %s363 = sshll.u32 [#allocation5], 4
          %s364 = int_to_ptr.vmem [resolvable:$true] %s363
          %369 = dma.hbm_to_vmem [thread:$0]  %s362, 1152, %s364, [#allocation6], 64, 64, 4
        $region16: #{clip_motion_align_forward.1} parent=11 // pred_fallthru
          _
        // Predicated region
        $region17: #{clip_motion_align_forward.1} parent=11 // pred_check
          %p370 = pneg %p163
        $region18: #{clip_motion_align_forward.1} parent=11 // pred_check_branch
          %372 = sbr.rel (%p370) target = $region20
        $region19: #{clip_motion_align_forward.1} parent=11 // pred_region
          %374 = vsyncadd [#allocation9], 0
          %s375 = sshll.u32 %s6, 4
          %s376 = int_to_ptr.hbm [resolvable:$true] %s375
          %s377 = sshll.u32 [#allocation8], 4
          %s378 = int_to_ptr.vmem [resolvable:$true] %s377
          %383 = dma.hbm_to_vmem [thread:$0]  %s376, 12288, %s378, [#allocation9], 384, 384, 24
        $region20: #{clip_motion_align_forward.1} parent=11 // pred_fallthru
          _
        // Predicated region
        $region21: #{clip_motion_align_forward.1} parent=11 // pred_check
          %p384 = pneg %p184
        $region22: #{clip_motion_align_forward.1} parent=11 // pred_check_branch
          %386 = sbr.rel (%p384) target = $region24
        $region23: #{clip_motion_align_forward.1} parent=11 // pred_region
          _
        $region24: #{clip_motion_align_forward.1} parent=11 // pred_fallthru
          _
        // Predicated region
        $region25: #{clip_motion_align_forward.1} parent=11 // pred_check
          %p387 = pneg %p205
        $region26: #{clip_motion_align_forward.1} parent=11 // pred_check_branch
          %389 = sbr.rel (%p387) target = $region28
        $region27: #{clip_motion_align_forward.1} parent=11 // pred_region
          %391 = vsyncadd [#allocation9], 0
          %s392 = sshll.u32 %s8, 4
          %s393 = int_to_ptr.hbm [resolvable:$true] %s392
          %s394 = sshll.u32 [#allocation10], 4
          %s395 = int_to_ptr.vmem [resolvable:$true] %s394
          %400 = dma.hbm_to_vmem [thread:$0]  %s393, 8192, %s395, [#allocation9], 256, 256, 16
        $region28: #{clip_motion_align_forward.1} parent=11 // pred_fallthru
          _
        // Predicated region
        $region29: #{clip_motion_align_forward.1} parent=11 // pred_check
          %p401 = pneg %p226
        $region30: #{clip_motion_align_forward.1} parent=11 // pred_check_branch
          %403 = sbr.rel (%p401) target = $region32
        $region31: #{clip_motion_align_forward.1} parent=11 // pred_region
          %405 = vsyncadd [#allocation12], 0
          %s406 = sshll.u32 %s9, 4
          %s407 = int_to_ptr.hbm [resolvable:$true] %s406
          %s408 = sshll.u32 [#allocation11], 4
          %s409 = int_to_ptr.vmem [resolvable:$true] %s408
          %414 = dma.hbm_to_vmem [thread:$0]  %s407, 8192, %s409, [#allocation12], 128, 128, 8
        $region32: #{clip_motion_align_forward.1} parent=11 // pred_fallthru
          _
        // Predicated region
        $region33: #{clip_motion_align_forward.1} parent=11 // pred_check
          %p415 = pneg %p247
        $region34: #{clip_motion_align_forward.1} parent=11 // pred_check_branch
          %417 = sbr.rel (%p415) target = $region36
        $region35: #{clip_motion_align_forward.1} parent=11 // pred_region
          _
        $region36: #{clip_motion_align_forward.1} parent=11 // pred_fallthru
          _
        // Predicated region
        $region37: #{clip_motion_align_forward.1} parent=11 // pred_check
          %p418 = pneg %p268
        $region38: #{clip_motion_align_forward.1} parent=11 // pred_check_branch
          %420 = sbr.rel (%p418) target = $region40
        $region39: #{clip_motion_align_forward.1} parent=11 // pred_region
          %422 = vsyncadd [#allocation12], 0
          %s424 = sshll.u32 %s11, 4
          %s425 = int_to_ptr.hbm [resolvable:$true] %s424
          %s426 = sshll.u32 [#allocation13], 4
          %s427 = int_to_ptr.vmem [resolvable:$true] %s426
          %429 = dma.hbm_to_vmem [thread:$0]  %s425, 192, %s427, [#allocation12]
        $region40: #{clip_motion_align_forward.1} parent=11 // pred_fallthru
          _
        // Predicated region
        $region41: #{clip_motion_align_forward.1} parent=11 // pred_check
          %p430 = pneg %p289
        $region42: #{clip_motion_align_forward.1} parent=11 // pred_check_branch
          %432 = sbr.rel (%p430) target = $region44
        $region43: #{clip_motion_align_forward.1} parent=11 // pred_region
          _
        $region44: #{clip_motion_align_forward.1} parent=11 // pred_fallthru
          _
      $region12: #{clip_motion_align_forward.1} parent=5 // pred_fallthru
        _
      %p433 = scmp.lt.s32.totalorder %s43, 2
      // Predicated region
      $region45: #{clip_motion_align_forward.1} parent=5 // pred_check
        %p434 = pneg %p433
      $region46: #{clip_motion_align_forward.1} parent=5 // pred_check_branch
        %436 = sbr.rel (%p434) target = $region48
      $region47: #{clip_motion_align_forward.1} parent=5 // pred_region
        // Predicated region
        $region49: #{clip_motion_align_forward.1} parent=47 // pred_check
          %p437 = pneg %p63
        $region50: #{clip_motion_align_forward.1} parent=47 // pred_check_branch
          %439 = sbr.rel (%p437) target = $region52
        $region51: #{clip_motion_align_forward.1} parent=47 // pred_region
          %p440 = scmp.lt.s32.totalorder %s43, 1
          %s441 = scalar_select %p440, %s43, 1
          %s442 = smul.addr %s441, 2
          %s443 = smul.addr %s442, 8
          %s444 = scalar_lea.vmem %s2, %s443
        $region52: #{clip_motion_align_forward.1} parent=47 // pred_fallthru
          _
        // Predicated region
        $region53: #{clip_motion_align_forward.1} parent=47 // pred_check
          %p445 = pneg %p89
        $region54: #{clip_motion_align_forward.1} parent=47 // pred_check_branch
          %447 = sbr.rel (%p445) target = $region56
        $region55: #{clip_motion_align_forward.1} parent=47 // pred_region
          %p448 = scmp.lt.s32.totalorder %s43, 1
          %s449 = scalar_select %p448, %s43, 1
          %s450 = smul.addr %s449, 2
          %s451 = smul.addr %s450, 8
          %s452 = scalar_lea.vmem %s3, %s451
        $region56: #{clip_motion_align_forward.1} parent=47 // pred_fallthru
          _
        // Predicated region
        $region57: #{clip_motion_align_forward.1} parent=47 // pred_check
          %p453 = pneg %p115
        $region58: #{clip_motion_align_forward.1} parent=47 // pred_check_branch
          %455 = sbr.rel (%p453) target = $region60
        $region59: #{clip_motion_align_forward.1} parent=47 // pred_region
          %p456 = scmp.lt.s32.totalorder %s43, 1
          %s457 = scalar_select %p456, %s43, 1
          %s458 = scalar_lea.vmem %s4, %s457
        $region60: #{clip_motion_align_forward.1} parent=47 // pred_fallthru
          _
      $region48: #{clip_motion_align_forward.1} parent=5 // pred_fallthru
        _
      %p459 = scmp.le.s32.totalorder 1, %s43
      %p460 = scmp.lt.s32.totalorder %s43, 3
      %p461 = pnand %p459, %p460
      %p462 = pneg %p461
      // Predicated region
      $region61: #{clip_motion_align_forward.1} parent=5 // pred_check
        _
      $region62: #{clip_motion_align_forward.1} parent=5 // pred_check_branch
        %464 = sbr.rel (%p461) target = $region64
      $region63: #{clip_motion_align_forward.1} parent=5 // pred_region
        %s465 = ssub.s32 %s43, 1
        // Predicated region
        $region65: #{clip_motion_align_forward.1} parent=63 // pred_check
          %p466 = pneg %p142
        $region66: #{clip_motion_align_forward.1} parent=63 // pred_check_branch
          %468 = sbr.rel (%p466) target = $region68
        $region67: #{clip_motion_align_forward.1} parent=63 // pred_region
          %470 = dma.done [#allocation6], 1152
        $region68: #{clip_motion_align_forward.1} parent=63 // pred_fallthru
          _
        // Predicated region
        $region69: #{clip_motion_align_forward.1} parent=63 // pred_check
          %p471 = pneg %p163
        $region70: #{clip_motion_align_forward.1} parent=63 // pred_check_branch
          %473 = sbr.rel (%p471) target = $region72
        $region71: #{clip_motion_align_forward.1} parent=63 // pred_region
          %475 = dma.done [#allocation9], 12288
        $region72: #{clip_motion_align_forward.1} parent=63 // pred_fallthru
          _
        // Predicated region
        $region73: #{clip_motion_align_forward.1} parent=63 // pred_check
          %p476 = pneg %p205
        $region74: #{clip_motion_align_forward.1} parent=63 // pred_check_branch
          %478 = sbr.rel (%p476) target = $region76
        $region75: #{clip_motion_align_forward.1} parent=63 // pred_region
          %480 = dma.done [#allocation9], 8192
        $region76: #{clip_motion_align_forward.1} parent=63 // pred_fallthru
          _
        // Predicated region
        $region77: #{clip_motion_align_forward.1} parent=63 // pred_check
          %p481 = pneg %p226
        $region78: #{clip_motion_align_forward.1} parent=63 // pred_check_branch
          %483 = sbr.rel (%p481) target = $region80
        $region79: #{clip_motion_align_forward.1} parent=63 // pred_region
          %485 = dma.done [#allocation12], 8192
        $region80: #{clip_motion_align_forward.1} parent=63 // pred_fallthru
          _
        // Predicated region
        $region81: #{clip_motion_align_forward.1} parent=63 // pred_check
          %p486 = pneg %p268
        $region82: #{clip_motion_align_forward.1} parent=63 // pred_check_branch
          %488 = sbr.rel (%p486) target = $region84
        $region83: #{clip_motion_align_forward.1} parent=63 // pred_region
          %490 = dma.done [#allocation12], 192
        $region84: #{clip_motion_align_forward.1} parent=63 // pred_fallthru
          _
        %p491 = scmp.lt.s32.totalorder %s48, 1
        %s492 = scalar_select %p491, %s48, 1
        %s493 = smul.addr %s492, 2
        %s494 = smul.addr %s493, 8
        %s495 = scalar_lea.vmem %s2, %s494
        %p496 = pneg %p69
        %p497 = pneg %p66
        %p498 = scmp.lt.s32.totalorder %s48, 1
        %s499 = scalar_select %p498, %s48, 1
        %s500 = smul.addr %s499, 2
        %s501 = smul.addr %s500, 8
        %s502 = scalar_lea.vmem %s3, %s501
        %p503 = pneg %p95
        %p504 = pneg %p92
        %p505 = scmp.lt.s32.totalorder %s48, 1
        %s506 = scalar_select %p505, %s48, 1
        %s507 = scalar_lea.vmem %s4, %s506
        %p508 = pneg %p121
        %p509 = pneg %p118
        %p510 = pneg %p142
        %p511 = pneg %p139
        %p512 = pneg %p163
        %p513 = pneg %p160
        %p514 = pneg %p184
        %p515 = pneg %p181
        %p516 = pneg %p205
        %p517 = pneg %p202
        %p518 = pneg %p226
        %p519 = pneg %p223
        %p520 = pneg %p247
        %p521 = pneg %p244
        %p522 = pneg %p268
        %p523 = pneg %p265
        %p524 = pneg %p289
        %p525 = pneg %p286
        %p526 = pneg %p315
        %p527 = pneg %p312
        %s528 = sand.u32 %s302, 1
        %s529 = scalar_lea.sflag [#allocation7], %s528
        %s530 = sand.u32 %s302, 1
        %s531 = scalar_lea.vmem [#allocation14], %s530
        %p532 = pneg %p341
        %p533 = pneg %p338
        %s534 = sand.u32 %s328, 1
        %s535 = scalar_lea.sflag [#allocation16], %s534
        %s536 = sand.u32 %s328, 1
        %s537 = scalar_lea.vmem [#allocation15], %s536
        %p538 = scmp.lt.s32.totalorder %s48, 1
        %s539 = scalar_select %p538, %s48, 1
        %s540 = smul.addr %s539, 2
        %s541 = smul.addr %s540, 8
        %s542 = scalar_lea.vmem %s2, %s541
        %p543 = scmp.lt.s32.totalorder %s48, 1
        %s544 = scalar_select %p543, %s48, 1
        %s545 = smul.addr %s544, 2
        %s546 = smul.addr %s545, 8
        %s547 = scalar_lea.vmem %s3, %s546
        %p548 = scmp.lt.s32.totalorder %s48, 1
        %s549 = scalar_select %p548, %s48, 1
        %s550 = scalar_lea.vmem %s4, %s549
        %v552 = vld [vmem:[%s12] ss:$8 sm:$0x3]
        %s553 = scalar_lea.vmem %s12, 1
        %v554 = vld [vmem:[%s553] ss:$8 sm:$0x3]
        %s555 = scalar_lea.vmem %s12, 2
        %v556 = vld [vmem:[%s555] ss:$8 sm:$0x3]
        %s557 = scalar_lea.vmem %s12, 3
        %v558 = vld [vmem:[%s557] ss:$8 sm:$0x3]
        %s559 = scalar_lea.vmem %s12, 4
        %v560 = vld [vmem:[%s559] ss:$8 sm:$0x3]
        %s561 = scalar_lea.vmem %s12, 5
        %v562 = vld [vmem:[%s561] ss:$8 sm:$0x3]
        %s563 = scalar_lea.vmem %s12, 6
        %v564 = vld [vmem:[%s563] ss:$8 sm:$0x3]
        %s565 = scalar_lea.vmem %s12, 7
        %v566 = vld [vmem:[%s565] ss:$8 sm:$0x3]
        %v567 = vld [vmem:[%s12 + $0x10] ss:$0 sm:$0xff]
        %v568 = vld [vmem:[%s12 + $0x11] ss:$0 sm:$0xff]
        %v569 = vld [vmem:[#allocation13] ss:$2 sm:$0x3f]
        %s570 = scalar_lea.vmem [#allocation13], 1
        %v571 = vld [vmem:[%s570] ss:$2 sm:$0xf]
        %v572 = vld [vmem:[%s542] sm:$0xff]
        %v573 = vld [vmem:[%s542 + $0x8] sm:$0xff]
        %s574 = sld [smem:[#allocation3 + %s48]]
        %v575 = vlaneseq
        %v576 = vshrl.u32 %v575, 7
        %v577 = vadd.s32 %v576, 8
        %v578 = vstv %s574
        %vm579 = vcmp.lt.s32.totalorder %v576, %v578
        %vm580 = vcmp.lt.s32.totalorder %v577, %v578
        %v581 = vsel %vm579, 1, 0
        %v582 = vsel %vm580, 1, 0
        %v583 = vcvt.s32.f32 %v581
        %v584 = vcvt.s32.f32 %v582
        %v585 = vmul.f32 %v572, %v583
        %v586 = vmul.f32 %v573, %v584
        %vm587 = vcmask 64512
        %v588 = vsel %vm587, %v585, 0.0
        %v589 = vsel %vm587, %v586, 0.0
        %v590 = vadd.f32 %v588, %v589
        %v591 = vrot.slane %v590, 4
        %v592 = vadd.f32 %v590, %v591
        %v593 = vrot.slane %v592, 2
        %v594 = vadd.f32 %v592, %v593
        %v595 = vrot.slane %v594, 1
        %v596 = vadd.f32 %v594, %v595
        %p597 = scmp.gt.s32.totalorder %s574, 1
        %s598 = scalar_select %p597, %s574, 1
        %s599 = scvt.s32.f32 %s598
        %v600 = vstv %s599
        %v601 = vrcp.pop %v600
        %v602 = vmul.f32 %v600, %v601
        %v603 = vsub.f32 1.0, %v602
        %v604 = vmul.f32 %v601, %v603
        %v605 = vadd.f32 %v601, %v604
        %vm606 = vweird.f32 %v600
        %vm607 = vweird.f32 %v601
        %vm608 = vmor %vm606, %vm607
        %v609 = vsel %vm608, %v601, %v605
        %v610 = vand.u32 2147483647, %v600
        %vm611 = vcmp.eq.f32.partialorder %v610, 8.507059e+37
        %v612 = vand.u32 %v600, 2147483648
        %v613 = vor.u32 1.1754944e-38, %v612
        %v614 = vsel %vm611, %v613, %v609
        %s615 = vtos %v614
        %v616 = vstv %s615
        %v617 = vmul.f32 %v596, %v616
        %v618 = vld [vmem:[#allocation5] sm:$0xf]
        %v619 = vld [vmem:[#allocation5 + $0x8] sm:$0xf]
        %v620 = vld [vmem:[#allocation5 + $0xc] sm:$0xf]
        %v621 = vld [vmem:[#allocation5 + $0x10] sm:$0xf]
        %v622 = vld [vmem:[#allocation5 + $0x14] sm:$0xf]
        %v623 = vld [vmem:[#allocation5 + $0x18] sm:$0xf]
        %v624 = vld [vmem:[#allocation5 + $0x1c] sm:$0xf]
        %v625 = vld [vmem:[#allocation5 + $0x20] sm:$0xf]
        %v626 = vld [vmem:[#allocation5 + $0x24] sm:$0xf]
        %v627 = vld [vmem:[#allocation5 + $0x28] sm:$0xf]
        %v628 = vld [vmem:[#allocation5 + $0x2c] sm:$0xf]
        %v629 = vld [vmem:[#allocation5 + $0x30] sm:$0xf]
        %v630 = vld [vmem:[#allocation5 + $0x34] sm:$0xf]
        %v631 = vld [vmem:[#allocation5 + $0x38] sm:$0xf]
        %v632 = vld [vmem:[#allocation5 + $0x3c] sm:$0xf]
        %v633 = vld [vmem:[#allocation5 + $0x40] sm:$0xf]
        %v634 = vld [vmem:[#allocation5 + $0x44] sm:$0xf]
        %v635 = vpack.c.bf16 %v617, %v617
        %v637 = vsel %vm587, %v635, 0
        %vm639 = vcmask 1043456
        %v641 = vsel %vm639, %v618, 0
        %643 = vmatpush.bf16.msra.mxu0 0
        %644 = vmatpush.bf16.msra.mxu0 0
        %645 = vmatpush.bf16.msra.mxu0 0
        %646 = vmatpush.bf16.msra.mxu0 0
        %647 = vmatpush.bf16.msra.mxu0 0
        %648 = vmatpush.bf16.msra.mxu0 0
        %649 = vmatpush.bf16.msra.mxu0 0
        %650 = vmatpush.bf16.msra.mxu0 %v641
        %651 = vmatmul.bf16.gmra.mxu0 %v637
        %v652 = vpop.f32.mrf.mxu0
        %v653 = vadd.f32 %v567, %v652
        %v654 = vpop.f32.mrf.mxu0
        %655 = vdwg.mxu0
        %v656 = vmax.f32 %v653, 0.0
        %v657 = vpack.c.bf16 %v656, %v656
        %v674 = vunpack.c.l.b16 %v619
        %v675 = vunpack.c.l.b16 %v620
        %v676 = vunpack.c.l.b16 %v621
        %v677 = vunpack.c.l.b16 %v622
        %v678 = vunpack.c.l.b16 %v623
        %v679 = vunpack.c.l.b16 %v624
        %v680 = vunpack.c.l.b16 %v625
        %v681 = vunpack.c.l.b16 %v626
        %v682 = vunpack.c.l.b16 %v627
        %v683 = vunpack.c.l.b16 %v628
        %v684 = vunpack.c.l.b16 %v629
        %v685 = vunpack.c.l.b16 %v630
        %v686 = vunpack.c.l.b16 %v631
        %v687 = vunpack.c.l.b16 %v632
        %v688 = vunpack.c.l.b16 %v633
        %v689 = vunpack.c.l.b16 %v634
        %v690 = vpack.c.b16 %v675, %v674
        %v691 = vpack.c.b16 %v677, %v676
        %v692 = vpack.c.b16 %v679, %v678
        %v693 = vpack.c.b16 %v681, %v680
        %v694 = vpack.c.b16 %v683, %v682
        %v695 = vpack.c.b16 %v685, %v684
        %v696 = vpack.c.b16 %v687, %v686
        %v697 = vpack.c.b16 %v689, %v688
        %706 = vmatpush.bf16.msra.mxu0 %v697
        %707 = vmatpush.bf16.msra.mxu0 %v696
        %708 = vmatpush.bf16.msra.mxu0 %v695
        %709 = vmatpush.bf16.msra.mxu0 %v694
        %710 = vmatpush.bf16.msra.mxu0 %v693
        %711 = vmatpush.bf16.msra.mxu0 %v692
        %712 = vmatpush.bf16.msra.mxu0 %v691
        %713 = vmatpush.bf16.msra.mxu0 %v690
        %714 = vmatmul.bf16.gmra.mxu0 %v657
        %v715 = vpop.f32.mrf.mxu0
        %v716 = vadd.f32 %v568, %v715
        %v717 = vpop.f32.mrf.mxu0
        %718 = vdwg.mxu0
        %719 = vst [vmem:[%s531] sm:$0x1] %v716
        %v720 = vld [vmem:[%s547] sm:$0xff]
        %v721 = vld [vmem:[%s547 + $0x8] sm:$0xff]
        %v722 = vadd.f32 %v720, %v721
        %723 = vadd.xlane.f32.xlu0 %v722
        %v724 = vpop.xlane.xlu0 %723
        %v725 = vrcp.pop 256.0
        %v726 = vmul.f32 256.0, %v725
        %v727 = vsub.f32 1.0, %v726
        %v728 = vmul.f32 %v725, %v727
        %v729 = vadd.f32 %v725, %v728
        %vm730 = vweird.f32 %v725
        %v731 = vsel %vm730, %v725, %v729
        %v732 = vmul.f32 %v724, %v731
        %v733 = vsub.f32 %v720, %v732
        %v734 = vsub.f32 %v721, %v732
        %v735 = vmul.f32 %v733, %v733
        %v736 = vmul.f32 %v734, %v734
        %v737 = vadd.f32 %v735, %v736
        %738 = vadd.xlane.f32.xlu0 %v737
        %v739 = vpop.xlane.xlu0 %738
        %v740 = vmul.f32 %v739, %v731
        %v741 = vadd.f32 %v740, 1e-05
        %v742 = vrsqrt.pop %v741
        %v743 = vmul.f32 %v742, %v741
        %v744 = vmul.f32 %v743, %v742
        %v745 = vmul.f32 0.5, %v744
        %v746 = vsub.f32 1.5, %v745
        %v747 = vmul.f32 %v742, %v746
        %vm748 = vweird.f32 %v741
        %vm749 = vweird.f32 %v742
        %vm750 = vmor %vm748, %vm749
        %v751 = vsel %vm750, %v742, %v747
        %v752 = vmul.f32 %v733, %v751
        %v753 = vmul.f32 %v734, %v751
        %v755 = vperm.slane %v552, 0
        %v756 = vperm.slane %v552, 1
        %v759 = vmul.f32 %v752, %v755
        %v760 = vmul.f32 %v753, %v756
        %v762 = vperm.slane %v554, 0
        %v763 = vperm.slane %v554, 1
        %v766 = vadd.f32 %v759, %v762
        %v767 = vadd.f32 %v760, %v763
        %v768 = vpack.c.bf16 %v766, %v766
        %v769 = vpack.c.bf16 %v767, %v767
        %v770 = vld [vmem:[#allocation8] sm:$0xff]
        %v771 = vld [vmem:[#allocation8 + $0x8] sm:$0xff]
        %v772 = vld [vmem:[#allocation8 + $0x10] sm:$0xff]
        %v773 = vld [vmem:[#allocation8 + $0x18] sm:$0xff]
        %v774 = vld [vmem:[#allocation8 + $0x20] sm:$0xff]
        %v775 = vld [vmem:[#allocation8 + $0x28] sm:$0xff]
        %v776 = vld [vmem:[#allocation8 + $0x30] sm:$0xff]
        %v777 = vld [vmem:[#allocation8 + $0x38] sm:$0xff]
        %v778 = vld [vmem:[#allocation8 + $0x40] sm:$0xff]
        %v779 = vld [vmem:[#allocation8 + $0x48] sm:$0xff]
        %v780 = vld [vmem:[#allocation8 + $0x50] sm:$0xff]
        %v781 = vld [vmem:[#allocation8 + $0x58] sm:$0xff]
        %v782 = vld [vmem:[#allocation8 + $0x60] sm:$0xff]
        %v783 = vld [vmem:[#allocation8 + $0x68] sm:$0xff]
        %v784 = vld [vmem:[#allocation8 + $0x70] sm:$0xff]
        %v785 = vld [vmem:[#allocation8 + $0x78] sm:$0xff]
        %v786 = vld [vmem:[#allocation8 + $0x80] sm:$0xff]
        %v787 = vld [vmem:[#allocation8 + $0x88] sm:$0xff]
        %v788 = vld [vmem:[#allocation8 + $0x90] sm:$0xff]
        %v789 = vld [vmem:[#allocation8 + $0x98] sm:$0xff]
        %v790 = vld [vmem:[#allocation8 + $0xa0] sm:$0xff]
        %v791 = vld [vmem:[#allocation8 + $0xa8] sm:$0xff]
        %v792 = vld [vmem:[#allocation8 + $0xb0] sm:$0xff]
        %v793 = vld [vmem:[#allocation8 + $0xb8] sm:$0xff]
        %v794 = vld [vmem:[#allocation8 + $0xc0] sm:$0xff]
        %v795 = vld [vmem:[#allocation8 + $0xc8] sm:$0xff]
        %v796 = vld [vmem:[#allocation8 + $0xd0] sm:$0xff]
        %v797 = vld [vmem:[#allocation8 + $0xd8] sm:$0xff]
        %v798 = vld [vmem:[#allocation8 + $0xe0] sm:$0xff]
        %v799 = vld [vmem:[#allocation8 + $0xe8] sm:$0xff]
        %v800 = vld [vmem:[#allocation8 + $0xf0] sm:$0xff]
        %v801 = vld [vmem:[#allocation8 + $0xf8] sm:$0xff]
        %v802 = vld [vmem:[#allocation8 + $0x100] sm:$0xff]
        %v803 = vld [vmem:[#allocation8 + $0x108] sm:$0xff]
        %v804 = vld [vmem:[#allocation8 + $0x110] sm:$0xff]
        %v805 = vld [vmem:[#allocation8 + $0x118] sm:$0xff]
        %v806 = vld [vmem:[#allocation8 + $0x120] sm:$0xff]
        %v807 = vld [vmem:[#allocation8 + $0x128] sm:$0xff]
        %v808 = vld [vmem:[#allocation8 + $0x130] sm:$0xff]
        %v809 = vld [vmem:[#allocation8 + $0x138] sm:$0xff]
        %v810 = vld [vmem:[#allocation8 + $0x140] sm:$0xff]
        %v811 = vld [vmem:[#allocation8 + $0x148] sm:$0xff]
        %v812 = vld [vmem:[#allocation8 + $0x150] sm:$0xff]
        %v813 = vld [vmem:[#allocation8 + $0x158] sm:$0xff]
        %v814 = vld [vmem:[#allocation8 + $0x160] sm:$0xff]
        %v815 = vld [vmem:[#allocation8 + $0x168] sm:$0xff]
        %v816 = vld [vmem:[#allocation8 + $0x170] sm:$0xff]
        %v817 = vld [vmem:[#allocation8 + $0x178] sm:$0xff]
        %v818 = vld [vmem:[#allocation8 + $0x180] sm:$0xff]
        %v819 = vld [vmem:[#allocation8 + $0x188] sm:$0xff]
        %v820 = vld [vmem:[#allocation8 + $0x190] sm:$0xff]
        %v821 = vld [vmem:[#allocation8 + $0x198] sm:$0xff]
        %v822 = vld [vmem:[#allocation8 + $0x1a0] sm:$0xff]
        %v823 = vld [vmem:[#allocation8 + $0x1a8] sm:$0xff]
        %v824 = vld [vmem:[#allocation8 + $0x1b0] sm:$0xff]
        %v825 = vld [vmem:[#allocation8 + $0x1b8] sm:$0xff]
        %v826 = vld [vmem:[#allocation8 + $0x1c0] sm:$0xff]
        %v827 = vld [vmem:[#allocation8 + $0x1c8] sm:$0xff]
        %v828 = vld [vmem:[#allocation8 + $0x1d0] sm:$0xff]
        %v829 = vld [vmem:[#allocation8 + $0x1d8] sm:$0xff]
        %v830 = vld [vmem:[#allocation8 + $0x1e0] sm:$0xff]
        %v831 = vld [vmem:[#allocation8 + $0x1e8] sm:$0xff]
        %v832 = vld [vmem:[#allocation8 + $0x1f0] sm:$0xff]
        %v833 = vld [vmem:[#allocation8 + $0x1f8] sm:$0xff]
        %v834 = vld [vmem:[#allocation8 + $0x200] sm:$0xff]
        %v835 = vld [vmem:[#allocation8 + $0x208] sm:$0xff]
        %v836 = vld [vmem:[#allocation8 + $0x210] sm:$0xff]
        %v837 = vld [vmem:[#allocation8 + $0x218] sm:$0xff]
        %v838 = vld [vmem:[#allocation8 + $0x220] sm:$0xff]
        %v839 = vld [vmem:[#allocation8 + $0x228] sm:$0xff]
        %v840 = vld [vmem:[#allocation8 + $0x230] sm:$0xff]
        %v841 = vld [vmem:[#allocation8 + $0x238] sm:$0xff]
        %v842 = vld [vmem:[#allocation8 + $0x240] sm:$0xff]
        %v843 = vld [vmem:[#allocation8 + $0x248] sm:$0xff]
        %v844 = vld [vmem:[#allocation8 + $0x250] sm:$0xff]
        %v845 = vld [vmem:[#allocation8 + $0x258] sm:$0xff]
        %v846 = vld [vmem:[#allocation8 + $0x260] sm:$0xff]
        %v847 = vld [vmem:[#allocation8 + $0x268] sm:$0xff]
        %v848 = vld [vmem:[#allocation8 + $0x270] sm:$0xff]
        %v849 = vld [vmem:[#allocation8 + $0x278] sm:$0xff]
        %v850 = vld [vmem:[#allocation8 + $0x280] sm:$0xff]
        %v851 = vld [vmem:[#allocation8 + $0x288] sm:$0xff]
        %v852 = vld [vmem:[#allocation8 + $0x290] sm:$0xff]
        %v853 = vld [vmem:[#allocation8 + $0x298] sm:$0xff]
        %v854 = vld [vmem:[#allocation8 + $0x2a0] sm:$0xff]
        %v855 = vld [vmem:[#allocation8 + $0x2a8] sm:$0xff]
        %v856 = vld [vmem:[#allocation8 + $0x2b0] sm:$0xff]
        %v857 = vld [vmem:[#allocation8 + $0x2b8] sm:$0xff]
        %v858 = vld [vmem:[#allocation8 + $0x2c0] sm:$0xff]
        %v859 = vld [vmem:[#allocation8 + $0x2c8] sm:$0xff]
        %v860 = vld [vmem:[#allocation8 + $0x2d0] sm:$0xff]
        %v861 = vld [vmem:[#allocation8 + $0x2d8] sm:$0xff]
        %v862 = vld [vmem:[#allocation8 + $0x2e0] sm:$0xff]
        %v863 = vld [vmem:[#allocation8 + $0x2e8] sm:$0xff]
        %v864 = vld [vmem:[#allocation8 + $0x2f0] sm:$0xff]
        %v865 = vld [vmem:[#allocation8 + $0x2f8] sm:$0xff]
        %v867 = vperm.slane %v569, 0
        %v868 = vperm.slane %v569, 1
        %v869 = vperm.slane %v569, 2
        %v870 = vperm.slane %v569, 3
        %v871 = vperm.slane %v569, 4
        %v872 = vperm.slane %v569, 5
        %v975 = vunpack.c.l.b16 %v770
        %v976 = vunpack.c.h.b16 %v770
        %v977 = vunpack.c.l.b16 %v771
        %v978 = vunpack.c.h.b16 %v771
        %v979 = vunpack.c.l.b16 %v772
        %v980 = vunpack.c.h.b16 %v772
        %v981 = vunpack.c.l.b16 %v773
        %v982 = vunpack.c.h.b16 %v773
        %v983 = vunpack.c.l.b16 %v774
        %v984 = vunpack.c.h.b16 %v774
        %v985 = vunpack.c.l.b16 %v775
        %v986 = vunpack.c.h.b16 %v775
        %v987 = vunpack.c.l.b16 %v776
        %v988 = vunpack.c.h.b16 %v776
        %v989 = vunpack.c.l.b16 %v777
        %v990 = vunpack.c.h.b16 %v777
        %v991 = vunpack.c.l.b16 %v778
        %v992 = vunpack.c.h.b16 %v778
        %v993 = vunpack.c.l.b16 %v779
        %v994 = vunpack.c.h.b16 %v779
        %v995 = vunpack.c.l.b16 %v780
        %v996 = vunpack.c.h.b16 %v780
        %v997 = vunpack.c.l.b16 %v781
        %v998 = vunpack.c.h.b16 %v781
        %v999 = vunpack.c.l.b16 %v782
        %v1000 = vunpack.c.h.b16 %v782
        %v1001 = vunpack.c.l.b16 %v783
        %v1002 = vunpack.c.h.b16 %v783
        %v1003 = vunpack.c.l.b16 %v784
        %v1004 = vunpack.c.h.b16 %v784
        %v1005 = vunpack.c.l.b16 %v785
        %v1006 = vunpack.c.h.b16 %v785
        %v1007 = vunpack.c.l.b16 %v786
        %v1008 = vunpack.c.h.b16 %v786
        %v1009 = vunpack.c.l.b16 %v787
        %v1010 = vunpack.c.h.b16 %v787
        %v1011 = vunpack.c.l.b16 %v788
        %v1012 = vunpack.c.h.b16 %v788
        %v1013 = vunpack.c.l.b16 %v789
        %v1014 = vunpack.c.h.b16 %v789
        %v1015 = vunpack.c.l.b16 %v790
        %v1016 = vunpack.c.h.b16 %v790
        %v1017 = vunpack.c.l.b16 %v791
        %v1018 = vunpack.c.h.b16 %v791
        %v1019 = vunpack.c.l.b16 %v792
        %v1020 = vunpack.c.h.b16 %v792
        %v1021 = vunpack.c.l.b16 %v793
        %v1022 = vunpack.c.h.b16 %v793
        %v1023 = vunpack.c.l.b16 %v794
        %v1024 = vunpack.c.h.b16 %v794
        %v1025 = vunpack.c.l.b16 %v795
        %v1026 = vunpack.c.h.b16 %v795
        %v1027 = vunpack.c.l.b16 %v796
        %v1028 = vunpack.c.h.b16 %v796
        %v1029 = vunpack.c.l.b16 %v797
        %v1030 = vunpack.c.h.b16 %v797
        %v1031 = vunpack.c.l.b16 %v798
        %v1032 = vunpack.c.h.b16 %v798
        %v1033 = vunpack.c.l.b16 %v799
        %v1034 = vunpack.c.h.b16 %v799
        %v1035 = vunpack.c.l.b16 %v800
        %v1036 = vunpack.c.h.b16 %v800
        %v1037 = vunpack.c.l.b16 %v801
        %v1038 = vunpack.c.h.b16 %v801
        %v1039 = vunpack.c.l.b16 %v802
        %v1040 = vunpack.c.h.b16 %v802
        %v1041 = vunpack.c.l.b16 %v803
        %v1042 = vunpack.c.h.b16 %v803
        %v1043 = vunpack.c.l.b16 %v804
        %v1044 = vunpack.c.h.b16 %v804
        %v1045 = vunpack.c.l.b16 %v805
        %v1046 = vunpack.c.h.b16 %v805
        %v1047 = vunpack.c.l.b16 %v806
        %v1048 = vunpack.c.h.b16 %v806
        %v1049 = vunpack.c.l.b16 %v807
        %v1050 = vunpack.c.h.b16 %v807
        %v1051 = vunpack.c.l.b16 %v808
        %v1052 = vunpack.c.h.b16 %v808
        %v1053 = vunpack.c.l.b16 %v809
        %v1054 = vunpack.c.h.b16 %v809
        %v1055 = vunpack.c.l.b16 %v810
        %v1056 = vunpack.c.h.b16 %v810
        %v1057 = vunpack.c.l.b16 %v811
        %v1058 = vunpack.c.h.b16 %v811
        %v1059 = vunpack.c.l.b16 %v812
        %v1060 = vunpack.c.h.b16 %v812
        %v1061 = vunpack.c.l.b16 %v813
        %v1062 = vunpack.c.h.b16 %v813
        %v1063 = vunpack.c.l.b16 %v814
        %v1064 = vunpack.c.h.b16 %v814
        %v1065 = vunpack.c.l.b16 %v815
        %v1066 = vunpack.c.h.b16 %v815
        %v1067 = vunpack.c.l.b16 %v816
        %v1068 = vunpack.c.h.b16 %v816
        %v1069 = vunpack.c.l.b16 %v817
        %v1070 = vunpack.c.h.b16 %v817
        %v1071 = vunpack.c.l.b16 %v818
        %v1072 = vunpack.c.h.b16 %v818
        %v1073 = vunpack.c.l.b16 %v819
        %v1074 = vunpack.c.h.b16 %v819
        %v1075 = vunpack.c.l.b16 %v820
        %v1076 = vunpack.c.h.b16 %v820
        %v1077 = vunpack.c.l.b16 %v821
        %v1078 = vunpack.c.h.b16 %v821
        %v1079 = vunpack.c.l.b16 %v822
        %v1080 = vunpack.c.h.b16 %v822
        %v1081 = vunpack.c.l.b16 %v823
        %v1082 = vunpack.c.h.b16 %v823
        %v1083 = vunpack.c.l.b16 %v824
        %v1084 = vunpack.c.h.b16 %v824
        %v1085 = vunpack.c.l.b16 %v825
        %v1086 = vunpack.c.h.b16 %v825
        %v1087 = vunpack.c.l.b16 %v826
        %v1088 = vunpack.c.h.b16 %v826
        %v1089 = vunpack.c.l.b16 %v827
        %v1090 = vunpack.c.h.b16 %v827
        %v1091 = vunpack.c.l.b16 %v828
        %v1092 = vunpack.c.h.b16 %v828
        %v1093 = vunpack.c.l.b16 %v829
        %v1094 = vunpack.c.h.b16 %v829
        %v1095 = vunpack.c.l.b16 %v830
        %v1096 = vunpack.c.h.b16 %v830
        %v1097 = vunpack.c.l.b16 %v831
        %v1098 = vunpack.c.h.b16 %v831
        %v1099 = vunpack.c.l.b16 %v832
        %v1100 = vunpack.c.h.b16 %v832
        %v1101 = vunpack.c.l.b16 %v833
        %v1102 = vunpack.c.h.b16 %v833
        %v1103 = vunpack.c.l.b16 %v834
        %v1104 = vunpack.c.h.b16 %v834
        %v1105 = vunpack.c.l.b16 %v835
        %v1106 = vunpack.c.h.b16 %v835
        %v1107 = vunpack.c.l.b16 %v836
        %v1108 = vunpack.c.h.b16 %v836
        %v1109 = vunpack.c.l.b16 %v837
        %v1110 = vunpack.c.h.b16 %v837
        %v1111 = vunpack.c.l.b16 %v838
        %v1112 = vunpack.c.h.b16 %v838
        %v1113 = vunpack.c.l.b16 %v839
        %v1114 = vunpack.c.h.b16 %v839
        %v1115 = vunpack.c.l.b16 %v840
        %v1116 = vunpack.c.h.b16 %v840
        %v1117 = vunpack.c.l.b16 %v841
        %v1118 = vunpack.c.h.b16 %v841
        %v1119 = vunpack.c.l.b16 %v842
        %v1120 = vunpack.c.h.b16 %v842
        %v1121 = vunpack.c.l.b16 %v843
        %v1122 = vunpack.c.h.b16 %v843
        %v1123 = vunpack.c.l.b16 %v844
        %v1124 = vunpack.c.h.b16 %v844
        %v1125 = vunpack.c.l.b16 %v845
        %v1126 = vunpack.c.h.b16 %v845
        %v1127 = vunpack.c.l.b16 %v846
        %v1128 = vunpack.c.h.b16 %v846
        %v1129 = vunpack.c.l.b16 %v847
        %v1130 = vunpack.c.h.b16 %v847
        %v1131 = vunpack.c.l.b16 %v848
        %v1132 = vunpack.c.h.b16 %v848
        %v1133 = vunpack.c.l.b16 %v849
        %v1134 = vunpack.c.h.b16 %v849
        %v1135 = vunpack.c.l.b16 %v850
        %v1136 = vunpack.c.h.b16 %v850
        %v1137 = vunpack.c.l.b16 %v851
        %v1138 = vunpack.c.h.b16 %v851
        %v1139 = vunpack.c.l.b16 %v852
        %v1140 = vunpack.c.h.b16 %v852
        %v1141 = vunpack.c.l.b16 %v853
        %v1142 = vunpack.c.h.b16 %v853
        %v1143 = vunpack.c.l.b16 %v854
        %v1144 = vunpack.c.h.b16 %v854
        %v1145 = vunpack.c.l.b16 %v855
        %v1146 = vunpack.c.h.b16 %v855
        %v1147 = vunpack.c.l.b16 %v856
        %v1148 = vunpack.c.h.b16 %v856
        %v1149 = vunpack.c.l.b16 %v857
        %v1150 = vunpack.c.h.b16 %v857
        %v1151 = vunpack.c.l.b16 %v858
        %v1152 = vunpack.c.h.b16 %v858
        %v1153 = vunpack.c.l.b16 %v859
        %v1154 = vunpack.c.h.b16 %v859
        %v1155 = vunpack.c.l.b16 %v860
        %v1156 = vunpack.c.h.b16 %v860
        %v1157 = vunpack.c.l.b16 %v861
        %v1158 = vunpack.c.h.b16 %v861
        %v1159 = vunpack.c.l.b16 %v862
        %v1160 = vunpack.c.h.b16 %v862
        %v1161 = vunpack.c.l.b16 %v863
        %v1162 = vunpack.c.h.b16 %v863
        %v1163 = vunpack.c.l.b16 %v864
        %v1164 = vunpack.c.h.b16 %v864
        %v1165 = vunpack.c.l.b16 %v865
        %v1166 = vunpack.c.h.b16 %v865
        %v1167 = vpack.c.b16 %v981, %v975
        %v1168 = vpack.c.b16 %v982, %v976
        %v1169 = vpack.c.b16 %v983, %v977
        %v1170 = vpack.c.b16 %v984, %v978
        %v1171 = vpack.c.b16 %v985, %v979
        %v1172 = vpack.c.b16 %v986, %v980
        %v1173 = vpack.c.b16 %v993, %v987
        %v1174 = vpack.c.b16 %v994, %v988
        %v1175 = vpack.c.b16 %v995, %v989
        %v1176 = vpack.c.b16 %v996, %v990
        %v1177 = vpack.c.b16 %v997, %v991
        %v1178 = vpack.c.b16 %v998, %v992
        %v1179 = vpack.c.b16 %v1005, %v999
        %v1180 = vpack.c.b16 %v1006, %v1000
        %v1181 = vpack.c.b16 %v1007, %v1001
        %v1182 = vpack.c.b16 %v1008, %v1002
        %v1183 = vpack.c.b16 %v1009, %v1003
        %v1184 = vpack.c.b16 %v1010, %v1004
        %v1185 = vpack.c.b16 %v1017, %v1011
        %v1186 = vpack.c.b16 %v1018, %v1012
        %v1187 = vpack.c.b16 %v1019, %v1013
        %v1188 = vpack.c.b16 %v1020, %v1014
        %v1189 = vpack.c.b16 %v1021, %v1015
        %v1190 = vpack.c.b16 %v1022, %v1016
        %v1191 = vpack.c.b16 %v1029, %v1023
        %v1192 = vpack.c.b16 %v1030, %v1024
        %v1193 = vpack.c.b16 %v1031, %v1025
        %v1194 = vpack.c.b16 %v1032, %v1026
        %v1195 = vpack.c.b16 %v1033, %v1027
        %v1196 = vpack.c.b16 %v1034, %v1028
        %v1197 = vpack.c.b16 %v1041, %v1035
        %v1198 = vpack.c.b16 %v1042, %v1036
        %v1199 = vpack.c.b16 %v1043, %v1037
        %v1200 = vpack.c.b16 %v1044, %v1038
        %v1201 = vpack.c.b16 %v1045, %v1039
        %v1202 = vpack.c.b16 %v1046, %v1040
        %v1203 = vpack.c.b16 %v1053, %v1047
        %v1204 = vpack.c.b16 %v1054, %v1048
        %v1205 = vpack.c.b16 %v1055, %v1049
        %v1206 = vpack.c.b16 %v1056, %v1050
        %v1207 = vpack.c.b16 %v1057, %v1051
        %v1208 = vpack.c.b16 %v1058, %v1052
        %v1209 = vpack.c.b16 %v1065, %v1059
        %v1210 = vpack.c.b16 %v1066, %v1060
        %v1211 = vpack.c.b16 %v1067, %v1061
        %v1212 = vpack.c.b16 %v1068, %v1062
        %v1213 = vpack.c.b16 %v1069, %v1063
        %v1214 = vpack.c.b16 %v1070, %v1064
        %v1215 = vpack.c.b16 %v1077, %v1071
        %v1216 = vpack.c.b16 %v1078, %v1072
        %v1217 = vpack.c.b16 %v1079, %v1073
        %v1218 = vpack.c.b16 %v1080, %v1074
        %v1219 = vpack.c.b16 %v1081, %v1075
        %v1220 = vpack.c.b16 %v1082, %v1076
        %v1221 = vpack.c.b16 %v1089, %v1083
        %v1222 = vpack.c.b16 %v1090, %v1084
        %v1223 = vpack.c.b16 %v1091, %v1085
        %v1224 = vpack.c.b16 %v1092, %v1086
        %v1225 = vpack.c.b16 %v1093, %v1087
        %v1226 = vpack.c.b16 %v1094, %v1088
        %v1227 = vpack.c.b16 %v1101, %v1095
        %v1228 = vpack.c.b16 %v1102, %v1096
        %v1229 = vpack.c.b16 %v1103, %v1097
        %v1230 = vpack.c.b16 %v1104, %v1098
        %v1231 = vpack.c.b16 %v1105, %v1099
        %v1232 = vpack.c.b16 %v1106, %v1100
        %v1233 = vpack.c.b16 %v1113, %v1107
        %v1234 = vpack.c.b16 %v1114, %v1108
        %v1235 = vpack.c.b16 %v1115, %v1109
        %v1236 = vpack.c.b16 %v1116, %v1110
        %v1237 = vpack.c.b16 %v1117, %v1111
        %v1238 = vpack.c.b16 %v1118, %v1112
        %v1239 = vpack.c.b16 %v1125, %v1119
        %v1240 = vpack.c.b16 %v1126, %v1120
        %v1241 = vpack.c.b16 %v1127, %v1121
        %v1242 = vpack.c.b16 %v1128, %v1122
        %v1243 = vpack.c.b16 %v1129, %v1123
        %v1244 = vpack.c.b16 %v1130, %v1124
        %v1245 = vpack.c.b16 %v1137, %v1131
        %v1246 = vpack.c.b16 %v1138, %v1132
        %v1247 = vpack.c.b16 %v1139, %v1133
        %v1248 = vpack.c.b16 %v1140, %v1134
        %v1249 = vpack.c.b16 %v1141, %v1135
        %v1250 = vpack.c.b16 %v1142, %v1136
        %v1251 = vpack.c.b16 %v1149, %v1143
        %v1252 = vpack.c.b16 %v1150, %v1144
        %v1253 = vpack.c.b16 %v1151, %v1145
        %v1254 = vpack.c.b16 %v1152, %v1146
        %v1255 = vpack.c.b16 %v1153, %v1147
        %v1256 = vpack.c.b16 %v1154, %v1148
        %v1257 = vpack.c.b16 %v1161, %v1155
        %v1258 = vpack.c.b16 %v1162, %v1156
        %v1259 = vpack.c.b16 %v1163, %v1157
        %v1260 = vpack.c.b16 %v1164, %v1158
        %v1261 = vpack.c.b16 %v1165, %v1159
        %v1262 = vpack.c.b16 %v1166, %v1160
        %1359 = vmatpush.bf16.msra.mxu0 %v1209
        %1360 = vmatpush.bf16.msra.mxu0 %v1203
        %1361 = vmatpush.bf16.msra.mxu0 %v1197
        %1362 = vmatpush.bf16.msra.mxu0 %v1191
        %1363 = vmatpush.bf16.msra.mxu0 %v1185
        %1364 = vmatpush.bf16.msra.mxu0 %v1179
        %1365 = vmatpush.bf16.msra.mxu0 %v1173
        %1366 = vmatpush.bf16.msra.mxu0 %v1167
        %1367 = vmatmul.bf16.gmra.mxu0 %v768
        %v1368 = vpop.f32.mrf.mxu0
        %v1369 = vadd.f32 %v867, %v1368
        %v1370 = vpop.f32.mrf.mxu0
        %1371 = vdwg.mxu0
        %1372 = vmatpush.bf16.msra.mxu0 %v1257
        %1373 = vmatpush.bf16.msra.mxu0 %v1251
        %1374 = vmatpush.bf16.msra.mxu0 %v1245
        %1375 = vmatpush.bf16.msra.mxu0 %v1239
        %1376 = vmatpush.bf16.msra.mxu0 %v1233
        %1377 = vmatpush.bf16.msra.mxu0 %v1227
        %1378 = vmatpush.bf16.msra.mxu0 %v1221
        %1379 = vmatpush.bf16.msra.mxu0 %v1215
        %1380 = vmatmul.bf16.gmra.mxu0 %v769
        %v1381 = vpop.f32.mrf.mxu0
        %v1382 = vadd.f32 %v1369, %v1381
        %v1383 = vpop.f32.mrf.mxu0
        %1384 = vdwg.mxu0
        %1385 = vmatpush.bf16.msra.mxu0 %v1210
        %1386 = vmatpush.bf16.msra.mxu0 %v1204
        %1387 = vmatpush.bf16.msra.mxu0 %v1198
        %1388 = vmatpush.bf16.msra.mxu0 %v1192
        %1389 = vmatpush.bf16.msra.mxu0 %v1186
        %1390 = vmatpush.bf16.msra.mxu0 %v1180
        %1391 = vmatpush.bf16.msra.mxu0 %v1174
        %1392 = vmatpush.bf16.msra.mxu0 %v1168
        %1393 = vmatmul.bf16.gmra.mxu0 %v768
        %v1394 = vpop.f32.mrf.mxu0
        %v1395 = vadd.f32 %v868, %v1394
        %v1396 = vpop.f32.mrf.mxu0
        %1397 = vdwg.mxu0
        %1398 = vmatpush.bf16.msra.mxu0 %v1258
        %1399 = vmatpush.bf16.msra.mxu0 %v1252
        %1400 = vmatpush.bf16.msra.mxu0 %v1246
        %1401 = vmatpush.bf16.msra.mxu0 %v1240
        %1402 = vmatpush.bf16.msra.mxu0 %v1234
        %1403 = vmatpush.bf16.msra.mxu0 %v1228
        %1404 = vmatpush.bf16.msra.mxu0 %v1222
        %1405 = vmatpush.bf16.msra.mxu0 %v1216
        %1406 = vmatmul.bf16.gmra.mxu0 %v769
        %v1407 = vpop.f32.mrf.mxu0
        %v1408 = vadd.f32 %v1395, %v1407
        %v1409 = vpop.f32.mrf.mxu0
        %1410 = vdwg.mxu0
        %1411 = vmatpush.bf16.msra.mxu0 %v1211
        %1412 = vmatpush.bf16.msra.mxu0 %v1205
        %1413 = vmatpush.bf16.msra.mxu0 %v1199
        %1414 = vmatpush.bf16.msra.mxu0 %v1193
        %1415 = vmatpush.bf16.msra.mxu0 %v1187
        %1416 = vmatpush.bf16.msra.mxu0 %v1181
        %1417 = vmatpush.bf16.msra.mxu0 %v1175
        %1418 = vmatpush.bf16.msra.mxu0 %v1169
        %1419 = vmatmul.bf16.gmra.mxu0 %v768
        %v1420 = vpop.f32.mrf.mxu0
        %v1421 = vadd.f32 %v869, %v1420
        %v1422 = vpop.f32.mrf.mxu0
        %1423 = vdwg.mxu0
        %1424 = vmatpush.bf16.msra.mxu0 %v1259
        %1425 = vmatpush.bf16.msra.mxu0 %v1253
        %1426 = vmatpush.bf16.msra.mxu0 %v1247
        %1427 = vmatpush.bf16.msra.mxu0 %v1241
        %1428 = vmatpush.bf16.msra.mxu0 %v1235
        %1429 = vmatpush.bf16.msra.mxu0 %v1229
        %1430 = vmatpush.bf16.msra.mxu0 %v1223
        %1431 = vmatpush.bf16.msra.mxu0 %v1217
        %1432 = vmatmul.bf16.gmra.mxu0 %v769
        %v1433 = vpop.f32.mrf.mxu0
        %v1434 = vadd.f32 %v1421, %v1433
        %v1435 = vpop.f32.mrf.mxu0
        %1436 = vdwg.mxu0
        %1437 = vmatpush.bf16.msra.mxu0 %v1212
        %1438 = vmatpush.bf16.msra.mxu0 %v1206
        %1439 = vmatpush.bf16.msra.mxu0 %v1200
        %1440 = vmatpush.bf16.msra.mxu0 %v1194
        %1441 = vmatpush.bf16.msra.mxu0 %v1188
        %1442 = vmatpush.bf16.msra.mxu0 %v1182
        %1443 = vmatpush.bf16.msra.mxu0 %v1176
        %1444 = vmatpush.bf16.msra.mxu0 %v1170
        %1445 = vmatmul.bf16.gmra.mxu0 %v768
        %v1446 = vpop.f32.mrf.mxu0
        %v1447 = vadd.f32 %v870, %v1446
        %v1448 = vpop.f32.mrf.mxu0
        %1449 = vdwg.mxu0
        %1450 = vmatpush.bf16.msra.mxu0 %v1260
        %1451 = vmatpush.bf16.msra.mxu0 %v1254
        %1452 = vmatpush.bf16.msra.mxu0 %v1248
        %1453 = vmatpush.bf16.msra.mxu0 %v1242
        %1454 = vmatpush.bf16.msra.mxu0 %v1236
        %1455 = vmatpush.bf16.msra.mxu0 %v1230
        %1456 = vmatpush.bf16.msra.mxu0 %v1224
        %1457 = vmatpush.bf16.msra.mxu0 %v1218
        %1458 = vmatmul.bf16.gmra.mxu0 %v769
        %v1459 = vpop.f32.mrf.mxu0
        %v1460 = vadd.f32 %v1447, %v1459
        %v1461 = vpop.f32.mrf.mxu0
        %1462 = vdwg.mxu0
        %1463 = vmatpush.bf16.msra.mxu0 %v1213
        %1464 = vmatpush.bf16.msra.mxu0 %v1207
        %1465 = vmatpush.bf16.msra.mxu0 %v1201
        %1466 = vmatpush.bf16.msra.mxu0 %v1195
        %1467 = vmatpush.bf16.msra.mxu0 %v1189
        %1468 = vmatpush.bf16.msra.mxu0 %v1183
        %1469 = vmatpush.bf16.msra.mxu0 %v1177
        %1470 = vmatpush.bf16.msra.mxu0 %v1171
        %1471 = vmatmul.bf16.gmra.mxu0 %v768
        %v1472 = vpop.f32.mrf.mxu0
        %v1473 = vadd.f32 %v871, %v1472
        %v1474 = vpop.f32.mrf.mxu0
        %1475 = vdwg.mxu0
        %1476 = vmatpush.bf16.msra.mxu0 %v1261
        %1477 = vmatpush.bf16.msra.mxu0 %v1255
        %1478 = vmatpush.bf16.msra.mxu0 %v1249
        %1479 = vmatpush.bf16.msra.mxu0 %v1243
        %1480 = vmatpush.bf16.msra.mxu0 %v1237
        %1481 = vmatpush.bf16.msra.mxu0 %v1231
        %1482 = vmatpush.bf16.msra.mxu0 %v1225
        %1483 = vmatpush.bf16.msra.mxu0 %v1219
        %1484 = vmatmul.bf16.gmra.mxu0 %v769
        %v1485 = vpop.f32.mrf.mxu0
        %v1486 = vadd.f32 %v1473, %v1485
        %v1487 = vpop.f32.mrf.mxu0
        %1488 = vdwg.mxu0
        %1489 = vmatpush.bf16.msra.mxu0 %v1214
        %1490 = vmatpush.bf16.msra.mxu0 %v1208
        %1491 = vmatpush.bf16.msra.mxu0 %v1202
        %1492 = vmatpush.bf16.msra.mxu0 %v1196
        %1493 = vmatpush.bf16.msra.mxu0 %v1190
        %1494 = vmatpush.bf16.msra.mxu0 %v1184
        %1495 = vmatpush.bf16.msra.mxu0 %v1178
        %1496 = vmatpush.bf16.msra.mxu0 %v1172
        %1497 = vmatmul.bf16.gmra.mxu0 %v768
        %v1498 = vpop.f32.mrf.mxu0
        %v1499 = vadd.f32 %v872, %v1498
        %v1500 = vpop.f32.mrf.mxu0
        %1501 = vdwg.mxu0
        %1502 = vmatpush.bf16.msra.mxu0 %v1262
        %1503 = vmatpush.bf16.msra.mxu0 %v1256
        %1504 = vmatpush.bf16.msra.mxu0 %v1250
        %1505 = vmatpush.bf16.msra.mxu0 %v1244
        %1506 = vmatpush.bf16.msra.mxu0 %v1238
        %1507 = vmatpush.bf16.msra.mxu0 %v1232
        %1508 = vmatpush.bf16.msra.mxu0 %v1226
        %1509 = vmatpush.bf16.msra.mxu0 %v1220
        %1510 = vmatmul.bf16.gmra.mxu0 %v769
        %v1511 = vpop.f32.mrf.mxu0
        %v1512 = vadd.f32 %v1499, %v1511
        %v1513 = vpop.f32.mrf.mxu0
        %1514 = vdwg.mxu0
        %v1515 = vlaneseq
        %v1516 = vand.u32 %v1515, 127
        %vm1517 = vcmp.gt.s32.totalorder %v1516, %v576
        %v1518 = vsel %vm1517, 1, 0
        %v1519 = vcvt.s32.f32 %v1518
        %v1520 = vmul.f32 %v1519, -1e+09
        %v1521 = vld [vmem:[%s550] sm:$0x1]
        %v1523 = vperm.slane %v1521, 0
        %v1525 = vadd.f32 %v1520, %v1523
        %v1526 = vpack.c.bf16 %v1382, %v1382
        %v1527 = vpack.c.bf16 %v1434, %v1434
        %v1528 = vpack.c.bf16 %v1486, %v1486
        %1529 = vmatpush.bf16.xpose.msra.mxu0 0
        %1530 = vmatpush.bf16.xpose.msra.mxu0 0
        %1531 = vmatpush.bf16.xpose.msra.mxu0 0
        %1532 = vmatpush.bf16.xpose.msra.mxu0 0
        %1533 = vmatpush.bf16.xpose.msra.mxu0 0
        %1534 = vmatpush.bf16.xpose.msra.mxu0 0
        %1535 = vmatpush.bf16.xpose.msra.mxu0 0
        %1536 = vmatpush.bf16.xpose.msra.mxu0 %v1527
        %1537 = vmatmul.bf16.gmra.mxu0 %v1526
        %v1538 = vpop.f32.mrf.mxu0
        %v1539 = vadd.f32 0.0, %v1538
        %v1540 = vpop.f32.mrf.mxu0
        %1541 = vdwg.mxu0
        %v1542 = vmul.f32 %v1539, 0.088388346
        %v1543 = vadd.f32 %v1542, %v1525
        %v1544 = vsel %vm587, %v1543, -inf
        %1545 = vmax.xlane.f32.xlu0 %v1544
        %v1546 = vpop.xlane.xlu0 %1545
        %v1547 = vsub.f32 %v1543, %v1546
        %v1548 = vmul.f32 %v1547, 1.442695
        %v1549 = vpow.pop %v1548
        %v1550 = vsel %vm587, %v1549, 0.0
        %1551 = vadd.xlane.f32.xlu0 %v1550
        %v1552 = vpop.xlane.xlu0 %1551
        %v1553 = vrcp.pop %v1552
        %v1554 = vmul.f32 %v1552, %v1553
        %v1555 = vsub.f32 1.0, %v1554
        %v1556 = vmul.f32 %v1553, %v1555
        %v1557 = vadd.f32 %v1553, %v1556
        %vm1558 = vweird.f32 %v1552
        %vm1559 = vweird.f32 %v1553
        %vm1560 = vmor %vm1558, %vm1559
        %v1561 = vsel %vm1560, %v1553, %v1557
        %v1562 = vand.u32 2147483647, %v1552
        %vm1563 = vcmp.eq.f32.partialorder %v1562, 8.507059e+37
        %v1564 = vand.u32 %v1552, 2147483648
        %v1565 = vor.u32 1.1754944e-38, %v1564
        %v1566 = vsel %vm1563, %v1565, %v1561
        %v1567 = vmul.f32 %v1549, %v1566
        %v1568 = vpack.c.bf16 %v1567, %v1567
        %v1570 = vsel %vm587, %v1568, 0
        %v1573 = vsel %vm639, %v1528, 0
        %1575 = vmatpush.bf16.msra.mxu0 0
        %1576 = vmatpush.bf16.msra.mxu0 0
        %1577 = vmatpush.bf16.msra.mxu0 0
        %1578 = vmatpush.bf16.msra.mxu0 0
        %1579 = vmatpush.bf16.msra.mxu0 0
        %1580 = vmatpush.bf16.msra.mxu0 0
        %1581 = vmatpush.bf16.msra.mxu0 0
        %1582 = vmatpush.bf16.msra.mxu0 %v1573
        %1583 = vmatmul.bf16.gmra.mxu0 %v1570
        %v1584 = vpop.f32.mrf.mxu0
        %v1585 = vadd.f32 0.0, %v1584
        %v1586 = vpop.f32.mrf.mxu0
        %1587 = vdwg.mxu0
        %v1588 = vpack.c.bf16 %v1408, %v1408
        %v1589 = vpack.c.bf16 %v1460, %v1460
        %v1590 = vpack.c.bf16 %v1512, %v1512
        %1591 = vmatpush.bf16.xpose.msra.mxu0 0
        %1592 = vmatpush.bf16.xpose.msra.mxu0 0
        %1593 = vmatpush.bf16.xpose.msra.mxu0 0
        %1594 = vmatpush.bf16.xpose.msra.mxu0 0
        %1595 = vmatpush.bf16.xpose.msra.mxu0 0
        %1596 = vmatpush.bf16.xpose.msra.mxu0 0
        %1597 = vmatpush.bf16.xpose.msra.mxu0 0
        %1598 = vmatpush.bf16.xpose.msra.mxu0 %v1589
        %1599 = vmatmul.bf16.gmra.mxu0 %v1588
        %v1600 = vpop.f32.mrf.mxu0
        %v1601 = vadd.f32 0.0, %v1600
        %v1602 = vpop.f32.mrf.mxu0
        %1603 = vdwg.mxu0
        %v1604 = vmul.f32 %v1601, 0.088388346
        %v1605 = vadd.f32 %v1604, %v1525
        %v1606 = vsel %vm587, %v1605, -inf
        %1607 = vmax.xlane.f32.xlu0 %v1606
        %v1608 = vpop.xlane.xlu0 %1607
        %v1609 = vsub.f32 %v1605, %v1608
        %v1610 = vmul.f32 %v1609, 1.442695
        %v1611 = vpow.pop %v1610
        %v1612 = vsel %vm587, %v1611, 0.0
        %1613 = vadd.xlane.f32.xlu0 %v1612
        %v1614 = vpop.xlane.xlu0 %1613
        %v1615 = vrcp.pop %v1614
        %v1616 = vmul.f32 %v1614, %v1615
        %v1617 = vsub.f32 1.0, %v1616
        %v1618 = vmul.f32 %v1615, %v1617
        %v1619 = vadd.f32 %v1615, %v1618
        %vm1620 = vweird.f32 %v1614
        %vm1621 = vweird.f32 %v1615
        %vm1622 = vmor %vm1620, %vm1621
        %v1623 = vsel %vm1622, %v1615, %v1619
        %v1624 = vand.u32 2147483647, %v1614
        %vm1625 = vcmp.eq.f32.partialorder %v1624, 8.507059e+37
        %v1626 = vand.u32 %v1614, 2147483648
        %v1627 = vor.u32 1.1754944e-38, %v1626
        %v1628 = vsel %vm1625, %v1627, %v1623
        %v1629 = vmul.f32 %v1611, %v1628
        %v1630 = vpack.c.bf16 %v1629, %v1629
        %v1632 = vsel %vm587, %v1630, 0
        %v1635 = vsel %vm639, %v1590, 0
        %1637 = vmatpush.bf16.msra.mxu0 0
        %1638 = vmatpush.bf16.msra.mxu0 0
        %1639 = vmatpush.bf16.msra.mxu0 0
        %1640 = vmatpush.bf16.msra.mxu0 0
        %1641 = vmatpush.bf16.msra.mxu0 0
        %1642 = vmatpush.bf16.msra.mxu0 0
        %1643 = vmatpush.bf16.msra.mxu0 0
        %1644 = vmatpush.bf16.msra.mxu0 %v1635
        %1645 = vmatmul.bf16.gmra.mxu0 %v1632
        %v1646 = vpop.f32.mrf.mxu0
        %v1647 = vadd.f32 0.0, %v1646
        %v1648 = vpop.f32.mrf.mxu0
        %1649 = vdwg.mxu0
        %v1650 = vpack.c.bf16 %v1585, %v1585
        %v1651 = vpack.c.bf16 %v1647, %v1647
        %v1652 = vld [vmem:[%s7] sm:$0xff]
        %v1653 = vld [vmem:[%s7 + $0x8] sm:$0xff]
        %v1654 = vld [vmem:[%s7 + $0x10] sm:$0xff]
        %v1655 = vld [vmem:[%s7 + $0x18] sm:$0xff]
        %v1656 = vld [vmem:[%s7 + $0x20] sm:$0xff]
        %v1657 = vld [vmem:[%s7 + $0x28] sm:$0xff]
        %v1658 = vld [vmem:[%s7 + $0x30] sm:$0xff]
        %v1659 = vld [vmem:[%s7 + $0x38] sm:$0xff]
        %v1660 = vld [vmem:[%s7 + $0x40] sm:$0xff]
        %v1661 = vld [vmem:[%s7 + $0x48] sm:$0xff]
        %v1662 = vld [vmem:[%s7 + $0x50] sm:$0xff]
        %v1663 = vld [vmem:[%s7 + $0x58] sm:$0xff]
        %v1664 = vld [vmem:[%s7 + $0x60] sm:$0xff]
        %v1665 = vld [vmem:[%s7 + $0x68] sm:$0xff]
        %v1666 = vld [vmem:[%s7 + $0x70] sm:$0xff]
        %v1667 = vld [vmem:[%s7 + $0x78] sm:$0xff]
        %v1668 = vld [vmem:[%s7 + $0x80] sm:$0xff]
        %v1669 = vld [vmem:[%s7 + $0x88] sm:$0xff]
        %v1670 = vld [vmem:[%s7 + $0x90] sm:$0xff]
        %v1671 = vld [vmem:[%s7 + $0x98] sm:$0xff]
        %v1672 = vld [vmem:[%s7 + $0xa0] sm:$0xff]
        %v1673 = vld [vmem:[%s7 + $0xa8] sm:$0xff]
        %v1674 = vld [vmem:[%s7 + $0xb0] sm:$0xff]
        %v1675 = vld [vmem:[%s7 + $0xb8] sm:$0xff]
        %v1676 = vld [vmem:[%s7 + $0xc0] sm:$0xff]
        %v1677 = vld [vmem:[%s7 + $0xc8] sm:$0xff]
        %v1678 = vld [vmem:[%s7 + $0xd0] sm:$0xff]
        %v1679 = vld [vmem:[%s7 + $0xd8] sm:$0xff]
        %v1680 = vld [vmem:[%s7 + $0xe0] sm:$0xff]
        %v1681 = vld [vmem:[%s7 + $0xe8] sm:$0xff]
        %v1682 = vld [vmem:[%s7 + $0xf0] sm:$0xff]
        %v1683 = vld [vmem:[%s7 + $0xf8] sm:$0xff]
        %v1685 = vperm.slane %v564, 0
        %v1686 = vperm.slane %v564, 1
        %v1721 = vunpack.c.l.b16 %v1652
        %v1722 = vunpack.c.h.b16 %v1652
        %v1723 = vunpack.c.l.b16 %v1653
        %v1724 = vunpack.c.h.b16 %v1653
        %v1725 = vunpack.c.l.b16 %v1654
        %v1726 = vunpack.c.h.b16 %v1654
        %v1727 = vunpack.c.l.b16 %v1655
        %v1728 = vunpack.c.h.b16 %v1655
        %v1729 = vunpack.c.l.b16 %v1656
        %v1730 = vunpack.c.h.b16 %v1656
        %v1731 = vunpack.c.l.b16 %v1657
        %v1732 = vunpack.c.h.b16 %v1657
        %v1733 = vunpack.c.l.b16 %v1658
        %v1734 = vunpack.c.h.b16 %v1658
        %v1735 = vunpack.c.l.b16 %v1659
        %v1736 = vunpack.c.h.b16 %v1659
        %v1737 = vunpack.c.l.b16 %v1660
        %v1738 = vunpack.c.h.b16 %v1660
        %v1739 = vunpack.c.l.b16 %v1661
        %v1740 = vunpack.c.h.b16 %v1661
        %v1741 = vunpack.c.l.b16 %v1662
        %v1742 = vunpack.c.h.b16 %v1662
        %v1743 = vunpack.c.l.b16 %v1663
        %v1744 = vunpack.c.h.b16 %v1663
        %v1745 = vunpack.c.l.b16 %v1664
        %v1746 = vunpack.c.h.b16 %v1664
        %v1747 = vunpack.c.l.b16 %v1665
        %v1748 = vunpack.c.h.b16 %v1665
        %v1749 = vunpack.c.l.b16 %v1666
        %v1750 = vunpack.c.h.b16 %v1666
        %v1751 = vunpack.c.l.b16 %v1667
        %v1752 = vunpack.c.h.b16 %v1667
        %v1753 = vunpack.c.l.b16 %v1668
        %v1754 = vunpack.c.h.b16 %v1668
        %v1755 = vunpack.c.l.b16 %v1669
        %v1756 = vunpack.c.h.b16 %v1669
        %v1757 = vunpack.c.l.b16 %v1670
        %v1758 = vunpack.c.h.b16 %v1670
        %v1759 = vunpack.c.l.b16 %v1671
        %v1760 = vunpack.c.h.b16 %v1671
        %v1761 = vunpack.c.l.b16 %v1672
        %v1762 = vunpack.c.h.b16 %v1672
        %v1763 = vunpack.c.l.b16 %v1673
        %v1764 = vunpack.c.h.b16 %v1673
        %v1765 = vunpack.c.l.b16 %v1674
        %v1766 = vunpack.c.h.b16 %v1674
        %v1767 = vunpack.c.l.b16 %v1675
        %v1768 = vunpack.c.h.b16 %v1675
        %v1769 = vunpack.c.l.b16 %v1676
        %v1770 = vunpack.c.h.b16 %v1676
        %v1771 = vunpack.c.l.b16 %v1677
        %v1772 = vunpack.c.h.b16 %v1677
        %v1773 = vunpack.c.l.b16 %v1678
        %v1774 = vunpack.c.h.b16 %v1678
        %v1775 = vunpack.c.l.b16 %v1679
        %v1776 = vunpack.c.h.b16 %v1679
        %v1777 = vunpack.c.l.b16 %v1680
        %v1778 = vunpack.c.h.b16 %v1680
        %v1779 = vunpack.c.l.b16 %v1681
        %v1780 = vunpack.c.h.b16 %v1681
        %v1781 = vunpack.c.l.b16 %v1682
        %v1782 = vunpack.c.h.b16 %v1682
        %v1783 = vunpack.c.l.b16 %v1683
        %v1784 = vunpack.c.h.b16 %v1683
        %v1785 = vpack.c.b16 %v1723, %v1721
        %v1786 = vpack.c.b16 %v1724, %v1722
        %v1787 = vpack.c.b16 %v1727, %v1725
        %v1788 = vpack.c.b16 %v1728, %v1726
        %v1789 = vpack.c.b16 %v1731, %v1729
        %v1790 = vpack.c.b16 %v1732, %v1730
        %v1791 = vpack.c.b16 %v1735, %v1733
        %v1792 = vpack.c.b16 %v1736, %v1734
        %v1793 = vpack.c.b16 %v1739, %v1737
        %v1794 = vpack.c.b16 %v1740, %v1738
        %v1795 = vpack.c.b16 %v1743, %v1741
        %v1796 = vpack.c.b16 %v1744, %v1742
        %v1797 = vpack.c.b16 %v1747, %v1745
        %v1798 = vpack.c.b16 %v1748, %v1746
        %v1799 = vpack.c.b16 %v1751, %v1749
        %v1800 = vpack.c.b16 %v1752, %v1750
        %v1801 = vpack.c.b16 %v1755, %v1753
        %v1802 = vpack.c.b16 %v1756, %v1754
        %v1803 = vpack.c.b16 %v1759, %v1757
        %v1804 = vpack.c.b16 %v1760, %v1758
        %v1805 = vpack.c.b16 %v1763, %v1761
        %v1806 = vpack.c.b16 %v1764, %v1762
        %v1807 = vpack.c.b16 %v1767, %v1765
        %v1808 = vpack.c.b16 %v1768, %v1766
        %v1809 = vpack.c.b16 %v1771, %v1769
        %v1810 = vpack.c.b16 %v1772, %v1770
        %v1811 = vpack.c.b16 %v1775, %v1773
        %v1812 = vpack.c.b16 %v1776, %v1774
        %v1813 = vpack.c.b16 %v1779, %v1777
        %v1814 = vpack.c.b16 %v1780, %v1778
        %v1815 = vpack.c.b16 %v1783, %v1781
        %v1816 = vpack.c.b16 %v1784, %v1782
        %1849 = vmatpush.bf16.msra.mxu0 %v1799
        %1850 = vmatpush.bf16.msra.mxu0 %v1797
        %1851 = vmatpush.bf16.msra.mxu0 %v1795
        %1852 = vmatpush.bf16.msra.mxu0 %v1793
        %1853 = vmatpush.bf16.msra.mxu0 %v1791
        %1854 = vmatpush.bf16.msra.mxu0 %v1789
        %1855 = vmatpush.bf16.msra.mxu0 %v1787
        %1856 = vmatpush.bf16.msra.mxu0 %v1785
        %1857 = vmatmul.bf16.gmra.mxu0 %v1650
        %v1858 = vpop.f32.mrf.mxu0
        %v1859 = vadd.f32 %v1685, %v1858
        %v1860 = vpop.f32.mrf.mxu0
        %1861 = vdwg.mxu0
        %1862 = vmatpush.bf16.msra.mxu0 %v1815
        %1863 = vmatpush.bf16.msra.mxu0 %v1813
        %1864 = vmatpush.bf16.msra.mxu0 %v1811
        %1865 = vmatpush.bf16.msra.mxu0 %v1809
        %1866 = vmatpush.bf16.msra.mxu0 %v1807
        %1867 = vmatpush.bf16.msra.mxu0 %v1805
        %1868 = vmatpush.bf16.msra.mxu0 %v1803
        %1869 = vmatpush.bf16.msra.mxu0 %v1801
        %1870 = vmatmul.bf16.gmra.mxu0 %v1651
        %v1871 = vpop.f32.mrf.mxu0
        %v1872 = vadd.f32 %v1859, %v1871
        %v1873 = vpop.f32.mrf.mxu0
        %1874 = vdwg.mxu0
        %1875 = vmatpush.bf16.msra.mxu0 %v1800
        %1876 = vmatpush.bf16.msra.mxu0 %v1798
        %1877 = vmatpush.bf16.msra.mxu0 %v1796
        %1878 = vmatpush.bf16.msra.mxu0 %v1794
        %1879 = vmatpush.bf16.msra.mxu0 %v1792
        %1880 = vmatpush.bf16.msra.mxu0 %v1790
        %1881 = vmatpush.bf16.msra.mxu0 %v1788
        %1882 = vmatpush.bf16.msra.mxu0 %v1786
        %1883 = vmatmul.bf16.gmra.mxu0 %v1650
        %v1884 = vpop.f32.mrf.mxu0
        %v1885 = vadd.f32 %v1686, %v1884
        %v1886 = vpop.f32.mrf.mxu0
        %1887 = vdwg.mxu0
        %1888 = vmatpush.bf16.msra.mxu0 %v1816
        %1889 = vmatpush.bf16.msra.mxu0 %v1814
        %1890 = vmatpush.bf16.msra.mxu0 %v1812
        %1891 = vmatpush.bf16.msra.mxu0 %v1810
        %1892 = vmatpush.bf16.msra.mxu0 %v1808
        %1893 = vmatpush.bf16.msra.mxu0 %v1806
        %1894 = vmatpush.bf16.msra.mxu0 %v1804
        %1895 = vmatpush.bf16.msra.mxu0 %v1802
        %1896 = vmatmul.bf16.gmra.mxu0 %v1651
        %v1897 = vpop.f32.mrf.mxu0
        %v1898 = vadd.f32 %v1885, %v1897
        %v1899 = vpop.f32.mrf.mxu0
        %1900 = vdwg.mxu0
        %v1901 = vadd.f32 %v720, %v1872
        %v1902 = vadd.f32 %v721, %v1898
        %v1903 = vadd.f32 %v1901, %v1902
        %1904 = vadd.xlane.f32.xlu0 %v1903
        %v1905 = vpop.xlane.xlu0 %1904
        %v1906 = vmul.f32 %v1905, %v731
        %v1907 = vsub.f32 %v1901, %v1906
        %v1908 = vsub.f32 %v1902, %v1906
        %v1909 = vmul.f32 %v1907, %v1907
        %v1910 = vmul.f32 %v1908, %v1908
        %v1911 = vadd.f32 %v1909, %v1910
        %1912 = vadd.xlane.f32.xlu0 %v1911
        %v1913 = vpop.xlane.xlu0 %1912
        %v1914 = vmul.f32 %v1913, %v731
        %v1915 = vadd.f32 %v1914, 1e-05
        %v1916 = vrsqrt.pop %v1915
        %v1917 = vmul.f32 %v1916, %v1915
        %v1918 = vmul.f32 %v1917, %v1916
        %v1919 = vmul.f32 0.5, %v1918
        %v1920 = vsub.f32 1.5, %v1919
        %v1921 = vmul.f32 %v1916, %v1920
        %vm1922 = vweird.f32 %v1915
        %vm1923 = vweird.f32 %v1916
        %vm1924 = vmor %vm1922, %vm1923
        %v1925 = vsel %vm1924, %v1916, %v1921
        %v1926 = vmul.f32 %v1907, %v1925
        %v1927 = vmul.f32 %v1908, %v1925
        %v1929 = vperm.slane %v556, 0
        %v1930 = vperm.slane %v556, 1
        %v1933 = vmul.f32 %v1926, %v1929
        %v1934 = vmul.f32 %v1927, %v1930
        %v1936 = vperm.slane %v558, 0
        %v1937 = vperm.slane %v558, 1
        %v1940 = vadd.f32 %v1933, %v1936
        %v1941 = vadd.f32 %v1934, %v1937
        %v1942 = vpack.c.bf16 %v1940, %v1940
        %v1943 = vpack.c.bf16 %v1941, %v1941
        %v1944 = vld [vmem:[#allocation10] sm:$0xff]
        %v1945 = vld [vmem:[#allocation10 + $0x8] sm:$0xff]
        %v1946 = vld [vmem:[#allocation10 + $0x10] sm:$0xff]
        %v1947 = vld [vmem:[#allocation10 + $0x18] sm:$0xff]
        %v1948 = vld [vmem:[#allocation10 + $0x20] sm:$0xff]
        %v1949 = vld [vmem:[#allocation10 + $0x28] sm:$0xff]
        %v1950 = vld [vmem:[#allocation10 + $0x30] sm:$0xff]
        %v1951 = vld [vmem:[#allocation10 + $0x38] sm:$0xff]
        %v1952 = vld [vmem:[#allocation10 + $0x40] sm:$0xff]
        %v1953 = vld [vmem:[#allocation10 + $0x48] sm:$0xff]
        %v1954 = vld [vmem:[#allocation10 + $0x50] sm:$0xff]
        %v1955 = vld [vmem:[#allocation10 + $0x58] sm:$0xff]
        %v1956 = vld [vmem:[#allocation10 + $0x60] sm:$0xff]
        %v1957 = vld [vmem:[#allocation10 + $0x68] sm:$0xff]
        %v1958 = vld [vmem:[#allocation10 + $0x70] sm:$0xff]
        %v1959 = vld [vmem:[#allocation10 + $0x78] sm:$0xff]
        %v1960 = vld [vmem:[#allocation10 + $0x80] sm:$0xff]
        %v1961 = vld [vmem:[#allocation10 + $0x88] sm:$0xff]
        %v1962 = vld [vmem:[#allocation10 + $0x90] sm:$0xff]
        %v1963 = vld [vmem:[#allocation10 + $0x98] sm:$0xff]
        %v1964 = vld [vmem:[#allocation10 + $0xa0] sm:$0xff]
        %v1965 = vld [vmem:[#allocation10 + $0xa8] sm:$0xff]
        %v1966 = vld [vmem:[#allocation10 + $0xb0] sm:$0xff]
        %v1967 = vld [vmem:[#allocation10 + $0xb8] sm:$0xff]
        %v1968 = vld [vmem:[#allocation10 + $0xc0] sm:$0xff]
        %v1969 = vld [vmem:[#allocation10 + $0xc8] sm:$0xff]
        %v1970 = vld [vmem:[#allocation10 + $0xd0] sm:$0xff]
        %v1971 = vld [vmem:[#allocation10 + $0xd8] sm:$0xff]
        %v1972 = vld [vmem:[#allocation10 + $0xe0] sm:$0xff]
        %v1973 = vld [vmem:[#allocation10 + $0xe8] sm:$0xff]
        %v1974 = vld [vmem:[#allocation10 + $0xf0] sm:$0xff]
        %v1975 = vld [vmem:[#allocation10 + $0xf8] sm:$0xff]
        %v1976 = vld [vmem:[#allocation10 + $0x100] sm:$0xff]
        %v1977 = vld [vmem:[#allocation10 + $0x108] sm:$0xff]
        %v1978 = vld [vmem:[#allocation10 + $0x110] sm:$0xff]
        %v1979 = vld [vmem:[#allocation10 + $0x118] sm:$0xff]
        %v1980 = vld [vmem:[#allocation10 + $0x120] sm:$0xff]
        %v1981 = vld [vmem:[#allocation10 + $0x128] sm:$0xff]
        %v1982 = vld [vmem:[#allocation10 + $0x130] sm:$0xff]
        %v1983 = vld [vmem:[#allocation10 + $0x138] sm:$0xff]
        %v1984 = vld [vmem:[#allocation10 + $0x140] sm:$0xff]
        %v1985 = vld [vmem:[#allocation10 + $0x148] sm:$0xff]
        %v1986 = vld [vmem:[#allocation10 + $0x150] sm:$0xff]
        %v1987 = vld [vmem:[#allocation10 + $0x158] sm:$0xff]
        %v1988 = vld [vmem:[#allocation10 + $0x160] sm:$0xff]
        %v1989 = vld [vmem:[#allocation10 + $0x168] sm:$0xff]
        %v1990 = vld [vmem:[#allocation10 + $0x170] sm:$0xff]
        %v1991 = vld [vmem:[#allocation10 + $0x178] sm:$0xff]
        %v1992 = vld [vmem:[#allocation10 + $0x180] sm:$0xff]
        %v1993 = vld [vmem:[#allocation10 + $0x188] sm:$0xff]
        %v1994 = vld [vmem:[#allocation10 + $0x190] sm:$0xff]
        %v1995 = vld [vmem:[#allocation10 + $0x198] sm:$0xff]
        %v1996 = vld [vmem:[#allocation10 + $0x1a0] sm:$0xff]
        %v1997 = vld [vmem:[#allocation10 + $0x1a8] sm:$0xff]
        %v1998 = vld [vmem:[#allocation10 + $0x1b0] sm:$0xff]
        %v1999 = vld [vmem:[#allocation10 + $0x1b8] sm:$0xff]
        %v2000 = vld [vmem:[#allocation10 + $0x1c0] sm:$0xff]
        %v2001 = vld [vmem:[#allocation10 + $0x1c8] sm:$0xff]
        %v2002 = vld [vmem:[#allocation10 + $0x1d0] sm:$0xff]
        %v2003 = vld [vmem:[#allocation10 + $0x1d8] sm:$0xff]
        %v2004 = vld [vmem:[#allocation10 + $0x1e0] sm:$0xff]
        %v2005 = vld [vmem:[#allocation10 + $0x1e8] sm:$0xff]
        %v2006 = vld [vmem:[#allocation10 + $0x1f0] sm:$0xff]
        %v2007 = vld [vmem:[#allocation10 + $0x1f8] sm:$0xff]
        %v2009 = vperm.slane %v571, 0
        %v2010 = vperm.slane %v571, 1
        %v2011 = vperm.slane %v571, 2
        %v2012 = vperm.slane %v571, 3
        %v2081 = vunpack.c.l.b16 %v1944
        %v2082 = vunpack.c.h.b16 %v1944
        %v2083 = vunpack.c.l.b16 %v1945
        %v2084 = vunpack.c.h.b16 %v1945
        %v2085 = vunpack.c.l.b16 %v1946
        %v2086 = vunpack.c.h.b16 %v1946
        %v2087 = vunpack.c.l.b16 %v1947
        %v2088 = vunpack.c.h.b16 %v1947
        %v2089 = vunpack.c.l.b16 %v1948
        %v2090 = vunpack.c.h.b16 %v1948
        %v2091 = vunpack.c.l.b16 %v1949
        %v2092 = vunpack.c.h.b16 %v1949
        %v2093 = vunpack.c.l.b16 %v1950
        %v2094 = vunpack.c.h.b16 %v1950
        %v2095 = vunpack.c.l.b16 %v1951
        %v2096 = vunpack.c.h.b16 %v1951
        %v2097 = vunpack.c.l.b16 %v1952
        %v2098 = vunpack.c.h.b16 %v1952
        %v2099 = vunpack.c.l.b16 %v1953
        %v2100 = vunpack.c.h.b16 %v1953
        %v2101 = vunpack.c.l.b16 %v1954
        %v2102 = vunpack.c.h.b16 %v1954
        %v2103 = vunpack.c.l.b16 %v1955
        %v2104 = vunpack.c.h.b16 %v1955
        %v2105 = vunpack.c.l.b16 %v1956
        %v2106 = vunpack.c.h.b16 %v1956
        %v2107 = vunpack.c.l.b16 %v1957
        %v2108 = vunpack.c.h.b16 %v1957
        %v2109 = vunpack.c.l.b16 %v1958
        %v2110 = vunpack.c.h.b16 %v1958
        %v2111 = vunpack.c.l.b16 %v1959
        %v2112 = vunpack.c.h.b16 %v1959
        %v2113 = vunpack.c.l.b16 %v1960
        %v2114 = vunpack.c.h.b16 %v1960
        %v2115 = vunpack.c.l.b16 %v1961
        %v2116 = vunpack.c.h.b16 %v1961
        %v2117 = vunpack.c.l.b16 %v1962
        %v2118 = vunpack.c.h.b16 %v1962
        %v2119 = vunpack.c.l.b16 %v1963
        %v2120 = vunpack.c.h.b16 %v1963
        %v2121 = vunpack.c.l.b16 %v1964
        %v2122 = vunpack.c.h.b16 %v1964
        %v2123 = vunpack.c.l.b16 %v1965
        %v2124 = vunpack.c.h.b16 %v1965
        %v2125 = vunpack.c.l.b16 %v1966
        %v2126 = vunpack.c.h.b16 %v1966
        %v2127 = vunpack.c.l.b16 %v1967
        %v2128 = vunpack.c.h.b16 %v1967
        %v2129 = vunpack.c.l.b16 %v1968
        %v2130 = vunpack.c.h.b16 %v1968
        %v2131 = vunpack.c.l.b16 %v1969
        %v2132 = vunpack.c.h.b16 %v1969
        %v2133 = vunpack.c.l.b16 %v1970
        %v2134 = vunpack.c.h.b16 %v1970
        %v2135 = vunpack.c.l.b16 %v1971
        %v2136 = vunpack.c.h.b16 %v1971
        %v2137 = vunpack.c.l.b16 %v1972
        %v2138 = vunpack.c.h.b16 %v1972
        %v2139 = vunpack.c.l.b16 %v1973
        %v2140 = vunpack.c.h.b16 %v1973
        %v2141 = vunpack.c.l.b16 %v1974
        %v2142 = vunpack.c.h.b16 %v1974
        %v2143 = vunpack.c.l.b16 %v1975
        %v2144 = vunpack.c.h.b16 %v1975
        %v2145 = vunpack.c.l.b16 %v1976
        %v2146 = vunpack.c.h.b16 %v1976
        %v2147 = vunpack.c.l.b16 %v1977
        %v2148 = vunpack.c.h.b16 %v1977
        %v2149 = vunpack.c.l.b16 %v1978
        %v2150 = vunpack.c.h.b16 %v1978
        %v2151 = vunpack.c.l.b16 %v1979
        %v2152 = vunpack.c.h.b16 %v1979
        %v2153 = vunpack.c.l.b16 %v1980
        %v2154 = vunpack.c.h.b16 %v1980
        %v2155 = vunpack.c.l.b16 %v1981
        %v2156 = vunpack.c.h.b16 %v1981
        %v2157 = vunpack.c.l.b16 %v1982
        %v2158 = vunpack.c.h.b16 %v1982
        %v2159 = vunpack.c.l.b16 %v1983
        %v2160 = vunpack.c.h.b16 %v1983
        %v2161 = vunpack.c.l.b16 %v1984
        %v2162 = vunpack.c.h.b16 %v1984
        %v2163 = vunpack.c.l.b16 %v1985
        %v2164 = vunpack.c.h.b16 %v1985
        %v2165 = vunpack.c.l.b16 %v1986
        %v2166 = vunpack.c.h.b16 %v1986
        %v2167 = vunpack.c.l.b16 %v1987
        %v2168 = vunpack.c.h.b16 %v1987
        %v2169 = vunpack.c.l.b16 %v1988
        %v2170 = vunpack.c.h.b16 %v1988
        %v2171 = vunpack.c.l.b16 %v1989
        %v2172 = vunpack.c.h.b16 %v1989
        %v2173 = vunpack.c.l.b16 %v1990
        %v2174 = vunpack.c.h.b16 %v1990
        %v2175 = vunpack.c.l.b16 %v1991
        %v2176 = vunpack.c.h.b16 %v1991
        %v2177 = vunpack.c.l.b16 %v1992
        %v2178 = vunpack.c.h.b16 %v1992
        %v2179 = vunpack.c.l.b16 %v1993
        %v2180 = vunpack.c.h.b16 %v1993
        %v2181 = vunpack.c.l.b16 %v1994
        %v2182 = vunpack.c.h.b16 %v1994
        %v2183 = vunpack.c.l.b16 %v1995
        %v2184 = vunpack.c.h.b16 %v1995
        %v2185 = vunpack.c.l.b16 %v1996
        %v2186 = vunpack.c.h.b16 %v1996
        %v2187 = vunpack.c.l.b16 %v1997
        %v2188 = vunpack.c.h.b16 %v1997
        %v2189 = vunpack.c.l.b16 %v1998
        %v2190 = vunpack.c.h.b16 %v1998
        %v2191 = vunpack.c.l.b16 %v1999
        %v2192 = vunpack.c.h.b16 %v1999
        %v2193 = vunpack.c.l.b16 %v2000
        %v2194 = vunpack.c.h.b16 %v2000
        %v2195 = vunpack.c.l.b16 %v2001
        %v2196 = vunpack.c.h.b16 %v2001
        %v2197 = vunpack.c.l.b16 %v2002
        %v2198 = vunpack.c.h.b16 %v2002
        %v2199 = vunpack.c.l.b16 %v2003
        %v2200 = vunpack.c.h.b16 %v2003
        %v2201 = vunpack.c.l.b16 %v2004
        %v2202 = vunpack.c.h.b16 %v2004
        %v2203 = vunpack.c.l.b16 %v2005
        %v2204 = vunpack.c.h.b16 %v2005
        %v2205 = vunpack.c.l.b16 %v2006
        %v2206 = vunpack.c.h.b16 %v2006
        %v2207 = vunpack.c.l.b16 %v2007
        %v2208 = vunpack.c.h.b16 %v2007
        %v2209 = vpack.c.b16 %v2085, %v2081
        %v2210 = vpack.c.b16 %v2086, %v2082
        %v2211 = vpack.c.b16 %v2087, %v2083
        %v2212 = vpack.c.b16 %v2088, %v2084
        %v2213 = vpack.c.b16 %v2093, %v2089
        %v2214 = vpack.c.b16 %v2094, %v2090
        %v2215 = vpack.c.b16 %v2095, %v2091
        %v2216 = vpack.c.b16 %v2096, %v2092
        %v2217 = vpack.c.b16 %v2101, %v2097
        %v2218 = vpack.c.b16 %v2102, %v2098
        %v2219 = vpack.c.b16 %v2103, %v2099
        %v2220 = vpack.c.b16 %v2104, %v2100
        %v2221 = vpack.c.b16 %v2109, %v2105
        %v2222 = vpack.c.b16 %v2110, %v2106
        %v2223 = vpack.c.b16 %v2111, %v2107
        %v2224 = vpack.c.b16 %v2112, %v2108
        %v2225 = vpack.c.b16 %v2117, %v2113
        %v2226 = vpack.c.b16 %v2118, %v2114
        %v2227 = vpack.c.b16 %v2119, %v2115
        %v2228 = vpack.c.b16 %v2120, %v2116
        %v2229 = vpack.c.b16 %v2125, %v2121
        %v2230 = vpack.c.b16 %v2126, %v2122
        %v2231 = vpack.c.b16 %v2127, %v2123
        %v2232 = vpack.c.b16 %v2128, %v2124
        %v2233 = vpack.c.b16 %v2133, %v2129
        %v2234 = vpack.c.b16 %v2134, %v2130
        %v2235 = vpack.c.b16 %v2135, %v2131
        %v2236 = vpack.c.b16 %v2136, %v2132
        %v2237 = vpack.c.b16 %v2141, %v2137
        %v2238 = vpack.c.b16 %v2142, %v2138
        %v2239 = vpack.c.b16 %v2143, %v2139
        %v2240 = vpack.c.b16 %v2144, %v2140
        %v2241 = vpack.c.b16 %v2149, %v2145
        %v2242 = vpack.c.b16 %v2150, %v2146
        %v2243 = vpack.c.b16 %v2151, %v2147
        %v2244 = vpack.c.b16 %v2152, %v2148
        %v2245 = vpack.c.b16 %v2157, %v2153
        %v2246 = vpack.c.b16 %v2158, %v2154
        %v2247 = vpack.c.b16 %v2159, %v2155
        %v2248 = vpack.c.b16 %v2160, %v2156
        %v2249 = vpack.c.b16 %v2165, %v2161
        %v2250 = vpack.c.b16 %v2166, %v2162
        %v2251 = vpack.c.b16 %v2167, %v2163
        %v2252 = vpack.c.b16 %v2168, %v2164
        %v2253 = vpack.c.b16 %v2173, %v2169
        %v2254 = vpack.c.b16 %v2174, %v2170
        %v2255 = vpack.c.b16 %v2175, %v2171
        %v2256 = vpack.c.b16 %v2176, %v2172
        %v2257 = vpack.c.b16 %v2181, %v2177
        %v2258 = vpack.c.b16 %v2182, %v2178
        %v2259 = vpack.c.b16 %v2183, %v2179
        %v2260 = vpack.c.b16 %v2184, %v2180
        %v2261 = vpack.c.b16 %v2189, %v2185
        %v2262 = vpack.c.b16 %v2190, %v2186
        %v2263 = vpack.c.b16 %v2191, %v2187
        %v2264 = vpack.c.b16 %v2192, %v2188
        %v2265 = vpack.c.b16 %v2197, %v2193
        %v2266 = vpack.c.b16 %v2198, %v2194
        %v2267 = vpack.c.b16 %v2199, %v2195
        %v2268 = vpack.c.b16 %v2200, %v2196
        %v2269 = vpack.c.b16 %v2205, %v2201
        %v2270 = vpack.c.b16 %v2206, %v2202
        %v2271 = vpack.c.b16 %v2207, %v2203
        %v2272 = vpack.c.b16 %v2208, %v2204
        %2337 = vmatpush.bf16.msra.mxu0 %v2237
        %2338 = vmatpush.bf16.msra.mxu0 %v2233
        %2339 = vmatpush.bf16.msra.mxu0 %v2229
        %2340 = vmatpush.bf16.msra.mxu0 %v2225
        %2341 = vmatpush.bf16.msra.mxu0 %v2221
        %2342 = vmatpush.bf16.msra.mxu0 %v2217
        %2343 = vmatpush.bf16.msra.mxu0 %v2213
        %2344 = vmatpush.bf16.msra.mxu0 %v2209
        %2345 = vmatmul.bf16.gmra.mxu0 %v1942
        %v2346 = vpop.f32.mrf.mxu0
        %v2347 = vadd.f32 %v2009, %v2346
        %v2348 = vpop.f32.mrf.mxu0
        %2349 = vdwg.mxu0
        %2350 = vmatpush.bf16.msra.mxu0 %v2269
        %2351 = vmatpush.bf16.msra.mxu0 %v2265
        %2352 = vmatpush.bf16.msra.mxu0 %v2261
        %2353 = vmatpush.bf16.msra.mxu0 %v2257
        %2354 = vmatpush.bf16.msra.mxu0 %v2253
        %2355 = vmatpush.bf16.msra.mxu0 %v2249
        %2356 = vmatpush.bf16.msra.mxu0 %v2245
        %2357 = vmatpush.bf16.msra.mxu0 %v2241
        %2358 = vmatmul.bf16.gmra.mxu0 %v1943
        %v2359 = vpop.f32.mrf.mxu0
        %v2360 = vadd.f32 %v2347, %v2359
        %v2361 = vpop.f32.mrf.mxu0
        %2362 = vdwg.mxu0
        %2363 = vmatpush.bf16.msra.mxu0 %v2238
        %2364 = vmatpush.bf16.msra.mxu0 %v2234
        %2365 = vmatpush.bf16.msra.mxu0 %v2230
        %2366 = vmatpush.bf16.msra.mxu0 %v2226
        %2367 = vmatpush.bf16.msra.mxu0 %v2222
        %2368 = vmatpush.bf16.msra.mxu0 %v2218
        %2369 = vmatpush.bf16.msra.mxu0 %v2214
        %2370 = vmatpush.bf16.msra.mxu0 %v2210
        %2371 = vmatmul.bf16.gmra.mxu0 %v1942
        %v2372 = vpop.f32.mrf.mxu0
        %v2373 = vadd.f32 %v2010, %v2372
        %v2374 = vpop.f32.mrf.mxu0
        %2375 = vdwg.mxu0
        %2376 = vmatpush.bf16.msra.mxu0 %v2270
        %2377 = vmatpush.bf16.msra.mxu0 %v2266
        %2378 = vmatpush.bf16.msra.mxu0 %v2262
        %2379 = vmatpush.bf16.msra.mxu0 %v2258
        %2380 = vmatpush.bf16.msra.mxu0 %v2254
        %2381 = vmatpush.bf16.msra.mxu0 %v2250
        %2382 = vmatpush.bf16.msra.mxu0 %v2246
        %2383 = vmatpush.bf16.msra.mxu0 %v2242
        %2384 = vmatmul.bf16.gmra.mxu0 %v1943
        %v2385 = vpop.f32.mrf.mxu0
        %v2386 = vadd.f32 %v2373, %v2385
        %v2387 = vpop.f32.mrf.mxu0
        %2388 = vdwg.mxu0
        %2389 = vmatpush.bf16.msra.mxu0 %v2239
        %2390 = vmatpush.bf16.msra.mxu0 %v2235
        %2391 = vmatpush.bf16.msra.mxu0 %v2231
        %2392 = vmatpush.bf16.msra.mxu0 %v2227
        %2393 = vmatpush.bf16.msra.mxu0 %v2223
        %2394 = vmatpush.bf16.msra.mxu0 %v2219
        %2395 = vmatpush.bf16.msra.mxu0 %v2215
        %2396 = vmatpush.bf16.msra.mxu0 %v2211
        %2397 = vmatmul.bf16.gmra.mxu0 %v1942
        %v2398 = vpop.f32.mrf.mxu0
        %v2399 = vadd.f32 %v2011, %v2398
        %v2400 = vpop.f32.mrf.mxu0
        %2401 = vdwg.mxu0
        %2402 = vmatpush.bf16.msra.mxu0 %v2271
        %2403 = vmatpush.bf16.msra.mxu0 %v2267
        %2404 = vmatpush.bf16.msra.mxu0 %v2263
        %2405 = vmatpush.bf16.msra.mxu0 %v2259
        %2406 = vmatpush.bf16.msra.mxu0 %v2255
        %2407 = vmatpush.bf16.msra.mxu0 %v2251
        %2408 = vmatpush.bf16.msra.mxu0 %v2247
        %2409 = vmatpush.bf16.msra.mxu0 %v2243
        %2410 = vmatmul.bf16.gmra.mxu0 %v1943
        %v2411 = vpop.f32.mrf.mxu0
        %v2412 = vadd.f32 %v2399, %v2411
        %v2413 = vpop.f32.mrf.mxu0
        %2414 = vdwg.mxu0
        %2415 = vmatpush.bf16.msra.mxu0 %v2240
        %2416 = vmatpush.bf16.msra.mxu0 %v2236
        %2417 = vmatpush.bf16.msra.mxu0 %v2232
        %2418 = vmatpush.bf16.msra.mxu0 %v2228
        %2419 = vmatpush.bf16.msra.mxu0 %v2224
        %2420 = vmatpush.bf16.msra.mxu0 %v2220
        %2421 = vmatpush.bf16.msra.mxu0 %v2216
        %2422 = vmatpush.bf16.msra.mxu0 %v2212
        %2423 = vmatmul.bf16.gmra.mxu0 %v1942
        %v2424 = vpop.f32.mrf.mxu0
        %v2425 = vadd.f32 %v2012, %v2424
        %v2426 = vpop.f32.mrf.mxu0
        %2427 = vdwg.mxu0
        %2428 = vmatpush.bf16.msra.mxu0 %v2272
        %2429 = vmatpush.bf16.msra.mxu0 %v2268
        %2430 = vmatpush.bf16.msra.mxu0 %v2264
        %2431 = vmatpush.bf16.msra.mxu0 %v2260
        %2432 = vmatpush.bf16.msra.mxu0 %v2256
        %2433 = vmatpush.bf16.msra.mxu0 %v2252
        %2434 = vmatpush.bf16.msra.mxu0 %v2248
        %2435 = vmatpush.bf16.msra.mxu0 %v2244
        %2436 = vmatmul.bf16.gmra.mxu0 %v1943
        %v2437 = vpop.f32.mrf.mxu0
        %v2438 = vadd.f32 %v2425, %v2437
        %v2439 = vpop.f32.mrf.mxu0
        %2440 = vdwg.mxu0
        %v2441 = vmul.f32 %v2360, 1.702
        %v2442 = vmul.f32 %v2386, 1.702
        %v2443 = vmul.f32 %v2412, 1.702
        %v2444 = vmul.f32 %v2438, 1.702
        %v2445 = vxor.u32 %v2441, 2147483648
        %v2446 = vxor.u32 %v2442, 2147483648
        %v2447 = vxor.u32 %v2443, 2147483648
        %v2448 = vxor.u32 %v2444, 2147483648
        %v2449 = vmul.f32 %v2445, 1.442695
        %v2450 = vpow.pop %v2449
        %v2451 = vmul.f32 %v2446, 1.442695
        %v2452 = vpow.pop %v2451
        %v2453 = vmul.f32 %v2447, 1.442695
        %v2454 = vpow.pop %v2453
        %v2455 = vmul.f32 %v2448, 1.442695
        %v2456 = vpow.pop %v2455
        %v2457 = vadd.f32 %v2450, 1.0
        %v2458 = vadd.f32 %v2452, 1.0
        %v2459 = vadd.f32 %v2454, 1.0
        %v2460 = vadd.f32 %v2456, 1.0
        %v2461 = vrcp.pop %v2457
        %v2462 = vmul.f32 %v2457, %v2461
        %v2463 = vsub.f32 1.0, %v2462
        %v2464 = vmul.f32 %v2461, %v2463
        %v2465 = vadd.f32 %v2461, %v2464
        %vm2466 = vweird.f32 %v2457
        %vm2467 = vweird.f32 %v2461
        %vm2468 = vmor %vm2466, %vm2467
        %v2469 = vsel %vm2468, %v2461, %v2465
        %v2470 = vand.u32 2147483647, %v2457
        %vm2471 = vcmp.eq.f32.partialorder %v2470, 8.507059e+37
        %v2472 = vand.u32 %v2457, 2147483648
        %v2473 = vor.u32 1.1754944e-38, %v2472
        %v2474 = vsel %vm2471, %v2473, %v2469
        %v2475 = vmul.f32 1.0, %v2474
        %v2476 = vrcp.pop %v2458
        %v2477 = vmul.f32 %v2458, %v2476
        %v2478 = vsub.f32 1.0, %v2477
        %v2479 = vmul.f32 %v2476, %v2478
        %v2480 = vadd.f32 %v2476, %v2479
        %vm2481 = vweird.f32 %v2458
        %vm2482 = vweird.f32 %v2476
        %vm2483 = vmor %vm2481, %vm2482
        %v2484 = vsel %vm2483, %v2476, %v2480
        %v2485 = vand.u32 2147483647, %v2458
        %vm2486 = vcmp.eq.f32.partialorder %v2485, 8.507059e+37
        %v2487 = vand.u32 %v2458, 2147483648
        %v2488 = vor.u32 1.1754944e-38, %v2487
        %v2489 = vsel %vm2486, %v2488, %v2484
        %v2490 = vmul.f32 1.0, %v2489
        %v2491 = vrcp.pop %v2459
        %v2492 = vmul.f32 %v2459, %v2491
        %v2493 = vsub.f32 1.0, %v2492
        %v2494 = vmul.f32 %v2491, %v2493
        %v2495 = vadd.f32 %v2491, %v2494
        %vm2496 = vweird.f32 %v2459
        %vm2497 = vweird.f32 %v2491
        %vm2498 = vmor %vm2496, %vm2497
        %v2499 = vsel %vm2498, %v2491, %v2495
        %v2500 = vand.u32 2147483647, %v2459
        %vm2501 = vcmp.eq.f32.partialorder %v2500, 8.507059e+37
        %v2502 = vand.u32 %v2459, 2147483648
        %v2503 = vor.u32 1.1754944e-38, %v2502
        %v2504 = vsel %vm2501, %v2503, %v2499
        %v2505 = vmul.f32 1.0, %v2504
        %v2506 = vrcp.pop %v2460
        %v2507 = vmul.f32 %v2460, %v2506
        %v2508 = vsub.f32 1.0, %v2507
        %v2509 = vmul.f32 %v2506, %v2508
        %v2510 = vadd.f32 %v2506, %v2509
        %vm2511 = vweird.f32 %v2460
        %vm2512 = vweird.f32 %v2506
        %vm2513 = vmor %vm2511, %vm2512
        %v2514 = vsel %vm2513, %v2506, %v2510
        %v2515 = vand.u32 2147483647, %v2460
        %vm2516 = vcmp.eq.f32.partialorder %v2515, 8.507059e+37
        %v2517 = vand.u32 %v2460, 2147483648
        %v2518 = vor.u32 1.1754944e-38, %v2517
        %v2519 = vsel %vm2516, %v2518, %v2514
        %v2520 = vmul.f32 1.0, %v2519
        %v2521 = vmul.f32 %v2360, %v2475
        %v2522 = vmul.f32 %v2386, %v2490
        %v2523 = vmul.f32 %v2412, %v2505
        %v2524 = vmul.f32 %v2438, %v2520
        %v2525 = vpack.c.bf16 %v2521, %v2521
        %v2526 = vpack.c.bf16 %v2522, %v2522
        %v2527 = vpack.c.bf16 %v2523, %v2523
        %v2528 = vpack.c.bf16 %v2524, %v2524
        %v2529 = vld [vmem:[#allocation11] sm:$0xff]
        %v2530 = vld [vmem:[#allocation11 + $0x8] sm:$0xff]
        %v2531 = vld [vmem:[#allocation11 + $0x10] sm:$0xff]
        %v2532 = vld [vmem:[#allocation11 + $0x18] sm:$0xff]
        %v2533 = vld [vmem:[#allocation11 + $0x20] sm:$0xff]
        %v2534 = vld [vmem:[#allocation11 + $0x28] sm:$0xff]
        %v2535 = vld [vmem:[#allocation11 + $0x30] sm:$0xff]
        %v2536 = vld [vmem:[#allocation11 + $0x38] sm:$0xff]
        %v2537 = vld [vmem:[#allocation11 + $0x40] sm:$0xff]
        %v2538 = vld [vmem:[#allocation11 + $0x48] sm:$0xff]
        %v2539 = vld [vmem:[#allocation11 + $0x50] sm:$0xff]
        %v2540 = vld [vmem:[#allocation11 + $0x58] sm:$0xff]
        %v2541 = vld [vmem:[#allocation11 + $0x60] sm:$0xff]
        %v2542 = vld [vmem:[#allocation11 + $0x68] sm:$0xff]
        %v2543 = vld [vmem:[#allocation11 + $0x70] sm:$0xff]
        %v2544 = vld [vmem:[#allocation11 + $0x78] sm:$0xff]
        %v2545 = vld [vmem:[#allocation11 + $0x80] sm:$0xff]
        %v2546 = vld [vmem:[#allocation11 + $0x88] sm:$0xff]
        %v2547 = vld [vmem:[#allocation11 + $0x90] sm:$0xff]
        %v2548 = vld [vmem:[#allocation11 + $0x98] sm:$0xff]
        %v2549 = vld [vmem:[#allocation11 + $0xa0] sm:$0xff]
        %v2550 = vld [vmem:[#allocation11 + $0xa8] sm:$0xff]
        %v2551 = vld [vmem:[#allocation11 + $0xb0] sm:$0xff]
        %v2552 = vld [vmem:[#allocation11 + $0xb8] sm:$0xff]
        %v2553 = vld [vmem:[#allocation11 + $0xc0] sm:$0xff]
        %v2554 = vld [vmem:[#allocation11 + $0xc8] sm:$0xff]
        %v2555 = vld [vmem:[#allocation11 + $0xd0] sm:$0xff]
        %v2556 = vld [vmem:[#allocation11 + $0xd8] sm:$0xff]
        %v2557 = vld [vmem:[#allocation11 + $0xe0] sm:$0xff]
        %v2558 = vld [vmem:[#allocation11 + $0xe8] sm:$0xff]
        %v2559 = vld [vmem:[#allocation11 + $0xf0] sm:$0xff]
        %v2560 = vld [vmem:[#allocation11 + $0xf8] sm:$0xff]
        %v2561 = vld [vmem:[#allocation11 + $0x100] sm:$0xff]
        %v2562 = vld [vmem:[#allocation11 + $0x108] sm:$0xff]
        %v2563 = vld [vmem:[#allocation11 + $0x110] sm:$0xff]
        %v2564 = vld [vmem:[#allocation11 + $0x118] sm:$0xff]
        %v2565 = vld [vmem:[#allocation11 + $0x120] sm:$0xff]
        %v2566 = vld [vmem:[#allocation11 + $0x128] sm:$0xff]
        %v2567 = vld [vmem:[#allocation11 + $0x130] sm:$0xff]
        %v2568 = vld [vmem:[#allocation11 + $0x138] sm:$0xff]
        %v2569 = vld [vmem:[#allocation11 + $0x140] sm:$0xff]
        %v2570 = vld [vmem:[#allocation11 + $0x148] sm:$0xff]
        %v2571 = vld [vmem:[#allocation11 + $0x150] sm:$0xff]
        %v2572 = vld [vmem:[#allocation11 + $0x158] sm:$0xff]
        %v2573 = vld [vmem:[#allocation11 + $0x160] sm:$0xff]
        %v2574 = vld [vmem:[#allocation11 + $0x168] sm:$0xff]
        %v2575 = vld [vmem:[#allocation11 + $0x170] sm:$0xff]
        %v2576 = vld [vmem:[#allocation11 + $0x178] sm:$0xff]
        %v2577 = vld [vmem:[#allocation11 + $0x180] sm:$0xff]
        %v2578 = vld [vmem:[#allocation11 + $0x188] sm:$0xff]
        %v2579 = vld [vmem:[#allocation11 + $0x190] sm:$0xff]
        %v2580 = vld [vmem:[#allocation11 + $0x198] sm:$0xff]
        %v2581 = vld [vmem:[#allocation11 + $0x1a0] sm:$0xff]
        %v2582 = vld [vmem:[#allocation11 + $0x1a8] sm:$0xff]
        %v2583 = vld [vmem:[#allocation11 + $0x1b0] sm:$0xff]
        %v2584 = vld [vmem:[#allocation11 + $0x1b8] sm:$0xff]
        %v2585 = vld [vmem:[#allocation11 + $0x1c0] sm:$0xff]
        %v2586 = vld [vmem:[#allocation11 + $0x1c8] sm:$0xff]
        %v2587 = vld [vmem:[#allocation11 + $0x1d0] sm:$0xff]
        %v2588 = vld [vmem:[#allocation11 + $0x1d8] sm:$0xff]
        %v2589 = vld [vmem:[#allocation11 + $0x1e0] sm:$0xff]
        %v2590 = vld [vmem:[#allocation11 + $0x1e8] sm:$0xff]
        %v2591 = vld [vmem:[#allocation11 + $0x1f0] sm:$0xff]
        %v2592 = vld [vmem:[#allocation11 + $0x1f8] sm:$0xff]
        %v2594 = vperm.slane %v566, 0
        %v2595 = vperm.slane %v566, 1
        %v2662 = vunpack.c.l.b16 %v2529
        %v2663 = vunpack.c.h.b16 %v2529
        %v2664 = vunpack.c.l.b16 %v2530
        %v2665 = vunpack.c.h.b16 %v2530
        %v2666 = vunpack.c.l.b16 %v2531
        %v2667 = vunpack.c.h.b16 %v2531
        %v2668 = vunpack.c.l.b16 %v2532
        %v2669 = vunpack.c.h.b16 %v2532
        %v2670 = vunpack.c.l.b16 %v2533
        %v2671 = vunpack.c.h.b16 %v2533
        %v2672 = vunpack.c.l.b16 %v2534
        %v2673 = vunpack.c.h.b16 %v2534
        %v2674 = vunpack.c.l.b16 %v2535
        %v2675 = vunpack.c.h.b16 %v2535
        %v2676 = vunpack.c.l.b16 %v2536
        %v2677 = vunpack.c.h.b16 %v2536
        %v2678 = vunpack.c.l.b16 %v2537
        %v2679 = vunpack.c.h.b16 %v2537
        %v2680 = vunpack.c.l.b16 %v2538
        %v2681 = vunpack.c.h.b16 %v2538
        %v2682 = vunpack.c.l.b16 %v2539
        %v2683 = vunpack.c.h.b16 %v2539
        %v2684 = vunpack.c.l.b16 %v2540
        %v2685 = vunpack.c.h.b16 %v2540
        %v2686 = vunpack.c.l.b16 %v2541
        %v2687 = vunpack.c.h.b16 %v2541
        %v2688 = vunpack.c.l.b16 %v2542
        %v2689 = vunpack.c.h.b16 %v2542
        %v2690 = vunpack.c.l.b16 %v2543
        %v2691 = vunpack.c.h.b16 %v2543
        %v2692 = vunpack.c.l.b16 %v2544
        %v2693 = vunpack.c.h.b16 %v2544
        %v2694 = vunpack.c.l.b16 %v2545
        %v2695 = vunpack.c.h.b16 %v2545
        %v2696 = vunpack.c.l.b16 %v2546
        %v2697 = vunpack.c.h.b16 %v2546
        %v2698 = vunpack.c.l.b16 %v2547
        %v2699 = vunpack.c.h.b16 %v2547
        %v2700 = vunpack.c.l.b16 %v2548
        %v2701 = vunpack.c.h.b16 %v2548
        %v2702 = vunpack.c.l.b16 %v2549
        %v2703 = vunpack.c.h.b16 %v2549
        %v2704 = vunpack.c.l.b16 %v2550
        %v2705 = vunpack.c.h.b16 %v2550
        %v2706 = vunpack.c.l.b16 %v2551
        %v2707 = vunpack.c.h.b16 %v2551
        %v2708 = vunpack.c.l.b16 %v2552
        %v2709 = vunpack.c.h.b16 %v2552
        %v2710 = vunpack.c.l.b16 %v2553
        %v2711 = vunpack.c.h.b16 %v2553
        %v2712 = vunpack.c.l.b16 %v2554
        %v2713 = vunpack.c.h.b16 %v2554
        %v2714 = vunpack.c.l.b16 %v2555
        %v2715 = vunpack.c.h.b16 %v2555
        %v2716 = vunpack.c.l.b16 %v2556
        %v2717 = vunpack.c.h.b16 %v2556
        %v2718 = vunpack.c.l.b16 %v2557
        %v2719 = vunpack.c.h.b16 %v2557
        %v2720 = vunpack.c.l.b16 %v2558
        %v2721 = vunpack.c.h.b16 %v2558
        %v2722 = vunpack.c.l.b16 %v2559
        %v2723 = vunpack.c.h.b16 %v2559
        %v2724 = vunpack.c.l.b16 %v2560
        %v2725 = vunpack.c.h.b16 %v2560
        %v2726 = vunpack.c.l.b16 %v2561
        %v2727 = vunpack.c.h.b16 %v2561
        %v2728 = vunpack.c.l.b16 %v2562
        %v2729 = vunpack.c.h.b16 %v2562
        %v2730 = vunpack.c.l.b16 %v2563
        %v2731 = vunpack.c.h.b16 %v2563
        %v2732 = vunpack.c.l.b16 %v2564
        %v2733 = vunpack.c.h.b16 %v2564
        %v2734 = vunpack.c.l.b16 %v2565
        %v2735 = vunpack.c.h.b16 %v2565
        %v2736 = vunpack.c.l.b16 %v2566
        %v2737 = vunpack.c.h.b16 %v2566
        %v2738 = vunpack.c.l.b16 %v2567
        %v2739 = vunpack.c.h.b16 %v2567
        %v2740 = vunpack.c.l.b16 %v2568
        %v2741 = vunpack.c.h.b16 %v2568
        %v2742 = vunpack.c.l.b16 %v2569
        %v2743 = vunpack.c.h.b16 %v2569
        %v2744 = vunpack.c.l.b16 %v2570
        %v2745 = vunpack.c.h.b16 %v2570
        %v2746 = vunpack.c.l.b16 %v2571
        %v2747 = vunpack.c.h.b16 %v2571
        %v2748 = vunpack.c.l.b16 %v2572
        %v2749 = vunpack.c.h.b16 %v2572
        %v2750 = vunpack.c.l.b16 %v2573
        %v2751 = vunpack.c.h.b16 %v2573
        %v2752 = vunpack.c.l.b16 %v2574
        %v2753 = vunpack.c.h.b16 %v2574
        %v2754 = vunpack.c.l.b16 %v2575
        %v2755 = vunpack.c.h.b16 %v2575
        %v2756 = vunpack.c.l.b16 %v2576
        %v2757 = vunpack.c.h.b16 %v2576
        %v2758 = vunpack.c.l.b16 %v2577
        %v2759 = vunpack.c.h.b16 %v2577
        %v2760 = vunpack.c.l.b16 %v2578
        %v2761 = vunpack.c.h.b16 %v2578
        %v2762 = vunpack.c.l.b16 %v2579
        %v2763 = vunpack.c.h.b16 %v2579
        %v2764 = vunpack.c.l.b16 %v2580
        %v2765 = vunpack.c.h.b16 %v2580
        %v2766 = vunpack.c.l.b16 %v2581
        %v2767 = vunpack.c.h.b16 %v2581
        %v2768 = vunpack.c.l.b16 %v2582
        %v2769 = vunpack.c.h.b16 %v2582
        %v2770 = vunpack.c.l.b16 %v2583
        %v2771 = vunpack.c.h.b16 %v2583
        %v2772 = vunpack.c.l.b16 %v2584
        %v2773 = vunpack.c.h.b16 %v2584
        %v2774 = vunpack.c.l.b16 %v2585
        %v2775 = vunpack.c.h.b16 %v2585
        %v2776 = vunpack.c.l.b16 %v2586
        %v2777 = vunpack.c.h.b16 %v2586
        %v2778 = vunpack.c.l.b16 %v2587
        %v2779 = vunpack.c.h.b16 %v2587
        %v2780 = vunpack.c.l.b16 %v2588
        %v2781 = vunpack.c.h.b16 %v2588
        %v2782 = vunpack.c.l.b16 %v2589
        %v2783 = vunpack.c.h.b16 %v2589
        %v2784 = vunpack.c.l.b16 %v2590
        %v2785 = vunpack.c.h.b16 %v2590
        %v2786 = vunpack.c.l.b16 %v2591
        %v2787 = vunpack.c.h.b16 %v2591
        %v2788 = vunpack.c.l.b16 %v2592
        %v2789 = vunpack.c.h.b16 %v2592
        %v2790 = vpack.c.b16 %v2664, %v2662
        %v2791 = vpack.c.b16 %v2665, %v2663
        %v2792 = vpack.c.b16 %v2668, %v2666
        %v2793 = vpack.c.b16 %v2669, %v2667
        %v2794 = vpack.c.b16 %v2672, %v2670
        %v2795 = vpack.c.b16 %v2673, %v2671
        %v2796 = vpack.c.b16 %v2676, %v2674
        %v2797 = vpack.c.b16 %v2677, %v2675
        %v2798 = vpack.c.b16 %v2680, %v2678
        %v2799 = vpack.c.b16 %v2681, %v2679
        %v2800 = vpack.c.b16 %v2684, %v2682
        %v2801 = vpack.c.b16 %v2685, %v2683
        %v2802 = vpack.c.b16 %v2688, %v2686
        %v2803 = vpack.c.b16 %v2689, %v2687
        %v2804 = vpack.c.b16 %v2692, %v2690
        %v2805 = vpack.c.b16 %v2693, %v2691
        %v2806 = vpack.c.b16 %v2696, %v2694
        %v2807 = vpack.c.b16 %v2697, %v2695
        %v2808 = vpack.c.b16 %v2700, %v2698
        %v2809 = vpack.c.b16 %v2701, %v2699
        %v2810 = vpack.c.b16 %v2704, %v2702
        %v2811 = vpack.c.b16 %v2705, %v2703
        %v2812 = vpack.c.b16 %v2708, %v2706
        %v2813 = vpack.c.b16 %v2709, %v2707
        %v2814 = vpack.c.b16 %v2712, %v2710
        %v2815 = vpack.c.b16 %v2713, %v2711
        %v2816 = vpack.c.b16 %v2716, %v2714
        %v2817 = vpack.c.b16 %v2717, %v2715
        %v2818 = vpack.c.b16 %v2720, %v2718
        %v2819 = vpack.c.b16 %v2721, %v2719
        %v2820 = vpack.c.b16 %v2724, %v2722
        %v2821 = vpack.c.b16 %v2725, %v2723
        %v2822 = vpack.c.b16 %v2728, %v2726
        %v2823 = vpack.c.b16 %v2729, %v2727
        %v2824 = vpack.c.b16 %v2732, %v2730
        %v2825 = vpack.c.b16 %v2733, %v2731
        %v2826 = vpack.c.b16 %v2736, %v2734
        %v2827 = vpack.c.b16 %v2737, %v2735
        %v2828 = vpack.c.b16 %v2740, %v2738
        %v2829 = vpack.c.b16 %v2741, %v2739
        %v2830 = vpack.c.b16 %v2744, %v2742
        %v2831 = vpack.c.b16 %v2745, %v2743
        %v2832 = vpack.c.b16 %v2748, %v2746
        %v2833 = vpack.c.b16 %v2749, %v2747
        %v2834 = vpack.c.b16 %v2752, %v2750
        %v2835 = vpack.c.b16 %v2753, %v2751
        %v2836 = vpack.c.b16 %v2756, %v2754
        %v2837 = vpack.c.b16 %v2757, %v2755
        %v2838 = vpack.c.b16 %v2760, %v2758
        %v2839 = vpack.c.b16 %v2761, %v2759
        %v2840 = vpack.c.b16 %v2764, %v2762
        %v2841 = vpack.c.b16 %v2765, %v2763
        %v2842 = vpack.c.b16 %v2768, %v2766
        %v2843 = vpack.c.b16 %v2769, %v2767
        %v2844 = vpack.c.b16 %v2772, %v2770
        %v2845 = vpack.c.b16 %v2773, %v2771
        %v2846 = vpack.c.b16 %v2776, %v2774
        %v2847 = vpack.c.b16 %v2777, %v2775
        %v2848 = vpack.c.b16 %v2780, %v2778
        %v2849 = vpack.c.b16 %v2781, %v2779
        %v2850 = vpack.c.b16 %v2784, %v2782
        %v2851 = vpack.c.b16 %v2785, %v2783
        %v2852 = vpack.c.b16 %v2788, %v2786
        %v2853 = vpack.c.b16 %v2789, %v2787
        %2918 = vmatpush.bf16.msra.mxu0 %v2804
        %2919 = vmatpush.bf16.msra.mxu0 %v2802
        %2920 = vmatpush.bf16.msra.mxu0 %v2800
        %2921 = vmatpush.bf16.msra.mxu0 %v2798
        %2922 = vmatpush.bf16.msra.mxu0 %v2796
        %2923 = vmatpush.bf16.msra.mxu0 %v2794
        %2924 = vmatpush.bf16.msra.mxu0 %v2792
        %2925 = vmatpush.bf16.msra.mxu0 %v2790
        %2926 = vmatmul.bf16.gmra.mxu0 %v2525
        %v2927 = vpop.f32.mrf.mxu0
        %v2928 = vadd.f32 %v2594, %v2927
        %v2929 = vpop.f32.mrf.mxu0
        %2930 = vdwg.mxu0
        %2931 = vmatpush.bf16.msra.mxu0 %v2820
        %2932 = vmatpush.bf16.msra.mxu0 %v2818
        %2933 = vmatpush.bf16.msra.mxu0 %v2816
        %2934 = vmatpush.bf16.msra.mxu0 %v2814
        %2935 = vmatpush.bf16.msra.mxu0 %v2812
        %2936 = vmatpush.bf16.msra.mxu0 %v2810
        %2937 = vmatpush.bf16.msra.mxu0 %v2808
        %2938 = vmatpush.bf16.msra.mxu0 %v2806
        %2939 = vmatmul.bf16.gmra.mxu0 %v2526
        %v2940 = vpop.f32.mrf.mxu0
        %v2941 = vadd.f32 %v2928, %v2940
        %v2942 = vpop.f32.mrf.mxu0
        %2943 = vdwg.mxu0
        %2944 = vmatpush.bf16.msra.mxu0 %v2836
        %2945 = vmatpush.bf16.msra.mxu0 %v2834
        %2946 = vmatpush.bf16.msra.mxu0 %v2832
        %2947 = vmatpush.bf16.msra.mxu0 %v2830
        %2948 = vmatpush.bf16.msra.mxu0 %v2828
        %2949 = vmatpush.bf16.msra.mxu0 %v2826
        %2950 = vmatpush.bf16.msra.mxu0 %v2824
        %2951 = vmatpush.bf16.msra.mxu0 %v2822
        %2952 = vmatmul.bf16.gmra.mxu0 %v2527
        %v2953 = vpop.f32.mrf.mxu0
        %v2954 = vadd.f32 %v2941, %v2953
        %v2955 = vpop.f32.mrf.mxu0
        %2956 = vdwg.mxu0
        %2957 = vmatpush.bf16.msra.mxu0 %v2852
        %2958 = vmatpush.bf16.msra.mxu0 %v2850
        %2959 = vmatpush.bf16.msra.mxu0 %v2848
        %2960 = vmatpush.bf16.msra.mxu0 %v2846
        %2961 = vmatpush.bf16.msra.mxu0 %v2844
        %2962 = vmatpush.bf16.msra.mxu0 %v2842
        %2963 = vmatpush.bf16.msra.mxu0 %v2840
        %2964 = vmatpush.bf16.msra.mxu0 %v2838
        %2965 = vmatmul.bf16.gmra.mxu0 %v2528
        %v2966 = vpop.f32.mrf.mxu0
        %v2967 = vadd.f32 %v2954, %v2966
        %v2968 = vpop.f32.mrf.mxu0
        %2969 = vdwg.mxu0
        %2970 = vmatpush.bf16.msra.mxu0 %v2805
        %2971 = vmatpush.bf16.msra.mxu0 %v2803
        %2972 = vmatpush.bf16.msra.mxu0 %v2801
        %2973 = vmatpush.bf16.msra.mxu0 %v2799
        %2974 = vmatpush.bf16.msra.mxu0 %v2797
        %2975 = vmatpush.bf16.msra.mxu0 %v2795
        %2976 = vmatpush.bf16.msra.mxu0 %v2793
        %2977 = vmatpush.bf16.msra.mxu0 %v2791
        %2978 = vmatmul.bf16.gmra.mxu0 %v2525
        %v2979 = vpop.f32.mrf.mxu0
        %v2980 = vadd.f32 %v2595, %v2979
        %v2981 = vpop.f32.mrf.mxu0
        %2982 = vdwg.mxu0
        %2983 = vmatpush.bf16.msra.mxu0 %v2821
        %2984 = vmatpush.bf16.msra.mxu0 %v2819
        %2985 = vmatpush.bf16.msra.mxu0 %v2817
        %2986 = vmatpush.bf16.msra.mxu0 %v2815
        %2987 = vmatpush.bf16.msra.mxu0 %v2813
        %2988 = vmatpush.bf16.msra.mxu0 %v2811
        %2989 = vmatpush.bf16.msra.mxu0 %v2809
        %2990 = vmatpush.bf16.msra.mxu0 %v2807
        %2991 = vmatmul.bf16.gmra.mxu0 %v2526
        %v2992 = vpop.f32.mrf.mxu0
        %v2993 = vadd.f32 %v2980, %v2992
        %v2994 = vpop.f32.mrf.mxu0
        %2995 = vdwg.mxu0
        %2996 = vmatpush.bf16.msra.mxu0 %v2837
        %2997 = vmatpush.bf16.msra.mxu0 %v2835
        %2998 = vmatpush.bf16.msra.mxu0 %v2833
        %2999 = vmatpush.bf16.msra.mxu0 %v2831
        %3000 = vmatpush.bf16.msra.mxu0 %v2829
        %3001 = vmatpush.bf16.msra.mxu0 %v2827
        %3002 = vmatpush.bf16.msra.mxu0 %v2825
        %3003 = vmatpush.bf16.msra.mxu0 %v2823
        %3004 = vmatmul.bf16.gmra.mxu0 %v2527
        %v3005 = vpop.f32.mrf.mxu0
        %v3006 = vadd.f32 %v2993, %v3005
        %v3007 = vpop.f32.mrf.mxu0
        %3008 = vdwg.mxu0
        %3009 = vmatpush.bf16.msra.mxu0 %v2853
        %3010 = vmatpush.bf16.msra.mxu0 %v2851
        %3011 = vmatpush.bf16.msra.mxu0 %v2849
        %3012 = vmatpush.bf16.msra.mxu0 %v2847
        %3013 = vmatpush.bf16.msra.mxu0 %v2845
        %3014 = vmatpush.bf16.msra.mxu0 %v2843
        %3015 = vmatpush.bf16.msra.mxu0 %v2841
        %3016 = vmatpush.bf16.msra.mxu0 %v2839
        %3017 = vmatmul.bf16.gmra.mxu0 %v2528
        %v3018 = vpop.f32.mrf.mxu0
        %v3019 = vadd.f32 %v3006, %v3018
        %v3020 = vpop.f32.mrf.mxu0
        %3021 = vdwg.mxu0
        %v3022 = vadd.f32 %v1901, %v2967
        %v3023 = vadd.f32 %v1902, %v3019
        %v3024 = vadd.f32 %v3022, %v3023
        %3025 = vadd.xlane.f32.xlu0 %v3024
        %v3026 = vpop.xlane.xlu0 %3025
        %v3027 = vmul.f32 %v3026, %v731
        %v3028 = vsub.f32 %v3022, %v3027
        %v3029 = vsub.f32 %v3023, %v3027
        %v3030 = vmul.f32 %v3028, %v3028
        %v3031 = vmul.f32 %v3029, %v3029
        %v3032 = vadd.f32 %v3030, %v3031
        %3033 = vadd.xlane.f32.xlu0 %v3032
        %v3034 = vpop.xlane.xlu0 %3033
        %v3035 = vmul.f32 %v3034, %v731
        %v3036 = vadd.f32 %v3035, 1e-05
        %v3037 = vrsqrt.pop %v3036
        %v3038 = vmul.f32 %v3037, %v3036
        %v3039 = vmul.f32 %v3038, %v3037
        %v3040 = vmul.f32 0.5, %v3039
        %v3041 = vsub.f32 1.5, %v3040
        %v3042 = vmul.f32 %v3037, %v3041
        %vm3043 = vweird.f32 %v3036
        %vm3044 = vweird.f32 %v3037
        %vm3045 = vmor %vm3043, %vm3044
        %v3046 = vsel %vm3045, %v3037, %v3042
        %v3047 = vmul.f32 %v3028, %v3046
        %v3048 = vmul.f32 %v3029, %v3046
        %v3050 = vperm.slane %v560, 0
        %v3051 = vperm.slane %v560, 1
        %v3054 = vmul.f32 %v3047, %v3050
        %v3055 = vmul.f32 %v3048, %v3051
        %v3057 = vperm.slane %v562, 0
        %v3058 = vperm.slane %v562, 1
        %v3061 = vadd.f32 %v3054, %v3057
        %v3062 = vadd.f32 %v3055, %v3058
        %s3063 = sld [smem:[#allocation4 + %s48]]
        %v3064 = vstv %s3063
        %vm3065 = vcmp.eq.s32.totalorder %v576, %v3064
        %v3066 = vsel %vm3065, 1, 0
        %v3067 = vcvt.s32.f32 %v3066
        %v3068 = vmul.f32 %v3061, %v3067
        %v3069 = vmul.f32 %v3062, %v3067
        %v3070 = vrot.slane %v3068, 4
        %v3071 = vadd.f32 %v3068, %v3070
        %v3072 = vrot.slane %v3071, 2
        %v3073 = vadd.f32 %v3071, %v3072
        %v3074 = vrot.slane %v3073, 1
        %v3075 = vadd.f32 %v3073, %v3074
        %v3076 = vrot.slane %v3069, 4
        %v3077 = vadd.f32 %v3069, %v3076
        %v3078 = vrot.slane %v3077, 2
        %v3079 = vadd.f32 %v3077, %v3078
        %v3080 = vrot.slane %v3079, 1
        %v3081 = vadd.f32 %v3079, %v3080
        %v3082 = vpack.c.bf16 %v3075, %v3075
        %v3083 = vpack.c.bf16 %v3081, %v3081
        %v3084 = vld [vmem:[%s10] sm:$0xf]
        %v3085 = vld [vmem:[%s10 + $0x4] sm:$0xf]
        %v3086 = vld [vmem:[%s10 + $0x8] sm:$0xf]
        %v3087 = vld [vmem:[%s10 + $0xc] sm:$0xf]
        %v3088 = vld [vmem:[%s10 + $0x10] sm:$0xf]
        %v3089 = vld [vmem:[%s10 + $0x14] sm:$0xf]
        %v3090 = vld [vmem:[%s10 + $0x18] sm:$0xf]
        %v3091 = vld [vmem:[%s10 + $0x1c] sm:$0xf]
        %v3092 = vld [vmem:[%s10 + $0x20] sm:$0xf]
        %v3093 = vld [vmem:[%s10 + $0x24] sm:$0xf]
        %v3094 = vld [vmem:[%s10 + $0x28] sm:$0xf]
        %v3095 = vld [vmem:[%s10 + $0x2c] sm:$0xf]
        %v3096 = vld [vmem:[%s10 + $0x30] sm:$0xf]
        %v3097 = vld [vmem:[%s10 + $0x34] sm:$0xf]
        %v3098 = vld [vmem:[%s10 + $0x38] sm:$0xf]
        %v3099 = vld [vmem:[%s10 + $0x3c] sm:$0xf]
        %v3100 = vld [vmem:[%s10 + $0x40] sm:$0xf]
        %v3101 = vld [vmem:[%s10 + $0x44] sm:$0xf]
        %v3102 = vld [vmem:[%s10 + $0x48] sm:$0xf]
        %v3103 = vld [vmem:[%s10 + $0x4c] sm:$0xf]
        %v3104 = vld [vmem:[%s10 + $0x50] sm:$0xf]
        %v3105 = vld [vmem:[%s10 + $0x54] sm:$0xf]
        %v3106 = vld [vmem:[%s10 + $0x58] sm:$0xf]
        %v3107 = vld [vmem:[%s10 + $0x5c] sm:$0xf]
        %v3108 = vld [vmem:[%s10 + $0x60] sm:$0xf]
        %v3109 = vld [vmem:[%s10 + $0x64] sm:$0xf]
        %v3110 = vld [vmem:[%s10 + $0x68] sm:$0xf]
        %v3111 = vld [vmem:[%s10 + $0x6c] sm:$0xf]
        %v3112 = vld [vmem:[%s10 + $0x70] sm:$0xf]
        %v3113 = vld [vmem:[%s10 + $0x74] sm:$0xf]
        %v3114 = vld [vmem:[%s10 + $0x78] sm:$0xf]
        %v3115 = vld [vmem:[%s10 + $0x7c] sm:$0xf]
        %v3148 = vunpack.c.l.b16 %v3084
        %v3149 = vunpack.c.l.b16 %v3085
        %v3150 = vunpack.c.l.b16 %v3086
        %v3151 = vunpack.c.l.b16 %v3087
        %v3152 = vunpack.c.l.b16 %v3088
        %v3153 = vunpack.c.l.b16 %v3089
        %v3154 = vunpack.c.l.b16 %v3090
        %v3155 = vunpack.c.l.b16 %v3091
        %v3156 = vunpack.c.l.b16 %v3092
        %v3157 = vunpack.c.l.b16 %v3093
        %v3158 = vunpack.c.l.b16 %v3094
        %v3159 = vunpack.c.l.b16 %v3095
        %v3160 = vunpack.c.l.b16 %v3096
        %v3161 = vunpack.c.l.b16 %v3097
        %v3162 = vunpack.c.l.b16 %v3098
        %v3163 = vunpack.c.l.b16 %v3099
        %v3164 = vunpack.c.l.b16 %v3100
        %v3165 = vunpack.c.l.b16 %v3101
        %v3166 = vunpack.c.l.b16 %v3102
        %v3167 = vunpack.c.l.b16 %v3103
        %v3168 = vunpack.c.l.b16 %v3104
        %v3169 = vunpack.c.l.b16 %v3105
        %v3170 = vunpack.c.l.b16 %v3106
        %v3171 = vunpack.c.l.b16 %v3107
        %v3172 = vunpack.c.l.b16 %v3108
        %v3173 = vunpack.c.l.b16 %v3109
        %v3174 = vunpack.c.l.b16 %v3110
        %v3175 = vunpack.c.l.b16 %v3111
        %v3176 = vunpack.c.l.b16 %v3112
        %v3177 = vunpack.c.l.b16 %v3113
        %v3178 = vunpack.c.l.b16 %v3114
        %v3179 = vunpack.c.l.b16 %v3115
        %v3180 = vpack.c.b16 %v3149, %v3148
        %v3181 = vpack.c.b16 %v3151, %v3150
        %v3182 = vpack.c.b16 %v3153, %v3152
        %v3183 = vpack.c.b16 %v3155, %v3154
        %v3184 = vpack.c.b16 %v3157, %v3156
        %v3185 = vpack.c.b16 %v3159, %v3158
        %v3186 = vpack.c.b16 %v3161, %v3160
        %v3187 = vpack.c.b16 %v3163, %v3162
        %v3188 = vpack.c.b16 %v3165, %v3164
        %v3189 = vpack.c.b16 %v3167, %v3166
        %v3190 = vpack.c.b16 %v3169, %v3168
        %v3191 = vpack.c.b16 %v3171, %v3170
        %v3192 = vpack.c.b16 %v3173, %v3172
        %v3193 = vpack.c.b16 %v3175, %v3174
        %v3194 = vpack.c.b16 %v3177, %v3176
        %v3195 = vpack.c.b16 %v3179, %v3178
        %3212 = vmatpush.bf16.msra.mxu0 %v3187
        %3213 = vmatpush.bf16.msra.mxu0 %v3186
        %3214 = vmatpush.bf16.msra.mxu0 %v3185
        %3215 = vmatpush.bf16.msra.mxu0 %v3184
        %3216 = vmatpush.bf16.msra.mxu0 %v3183
        %3217 = vmatpush.bf16.msra.mxu0 %v3182
        %3218 = vmatpush.bf16.msra.mxu0 %v3181
        %3219 = vmatpush.bf16.msra.mxu0 %v3180
        %3220 = vmatmul.bf16.gmra.mxu0 %v3082
        %v3221 = vpop.f32.mrf.mxu0
        %v3222 = vadd.f32 0.0, %v3221
        %v3223 = vpop.f32.mrf.mxu0
        %3224 = vdwg.mxu0
        %3225 = vmatpush.bf16.msra.mxu0 %v3195
        %3226 = vmatpush.bf16.msra.mxu0 %v3194
        %3227 = vmatpush.bf16.msra.mxu0 %v3193
        %3228 = vmatpush.bf16.msra.mxu0 %v3192
        %3229 = vmatpush.bf16.msra.mxu0 %v3191
        %3230 = vmatpush.bf16.msra.mxu0 %v3190
        %3231 = vmatpush.bf16.msra.mxu0 %v3189
        %3232 = vmatpush.bf16.msra.mxu0 %v3188
        %3233 = vmatmul.bf16.gmra.mxu0 %v3083
        %v3234 = vpop.f32.mrf.mxu0
        %v3235 = vadd.f32 %v3222, %v3234
        %v3236 = vpop.f32.mrf.mxu0
        %3237 = vdwg.mxu0
        %3238 = vst [vmem:[%s537] sm:$0x1] %v3235
        %s3239 = sand.u32 %s302, 1
        %s3240 = scalar_lea.sflag [#allocation7], %s3239
        %s3241 = sand.u32 %s302, 1
        %s3242 = scalar_lea.vmem [#allocation14], %s3241
        %s3243 = sand.u32 %s328, 1
        %s3244 = scalar_lea.sflag [#allocation16], %s3243
        %s3245 = sand.u32 %s328, 1
        %s3246 = scalar_lea.vmem [#allocation15], %s3245
        // Predicated region
        $region85: #{clip_motion_align_forward.1} parent=63 // pred_check
          %p3247 = pneg %p312
        $region86: #{clip_motion_align_forward.1} parent=63 // pred_check_branch
          %3249 = sbr.rel (%p3247) target = $region88
        $region87: #{clip_motion_align_forward.1} parent=63 // pred_region
          %3251 = vsyncadd %s3240, 0
          %s3252 = scalar_lea.hbm %s13, %s48
          %s3254 = sshll.u32 %s3242, 4
          %s3255 = int_to_ptr.vmem [resolvable:$true] %s3254
          %s3256 = sshll.u32 %s3252, 4
          %s3257 = int_to_ptr.hbm [resolvable:$true] %s3256
          %3259 = dma.vmem_to_hbm [thread:$0]  %s3255, 16, %s3257, %s3240
        $region88: #{clip_motion_align_forward.1} parent=63 // pred_fallthru
          _
        // Predicated region
        $region89: #{clip_motion_align_forward.1} parent=63 // pred_check
          %p3260 = pneg %p338
        $region90: #{clip_motion_align_forward.1} parent=63 // pred_check_branch
          %3262 = sbr.rel (%p3260) target = $region92
        $region91: #{clip_motion_align_forward.1} parent=63 // pred_region
          %3264 = vsyncadd %s3244, 0
          %s3265 = scalar_lea.hbm %s14, %s48
          %s3267 = sshll.u32 %s3246, 4
          %s3268 = int_to_ptr.vmem [resolvable:$true] %s3267
          %s3269 = sshll.u32 %s3265, 4
          %s3270 = int_to_ptr.hbm [resolvable:$true] %s3269
          %3272 = dma.vmem_to_hbm [thread:$0]  %s3268, 16, %s3270, %s3244
        $region92: #{clip_motion_align_forward.1} parent=63 // pred_fallthru
          _
      $region64: #{clip_motion_align_forward.1} parent=5 // pred_fallthru
        _
      %p3273 = scmp.le.s32.totalorder 2, %s43
      // Predicated region
      $region93: #{clip_motion_align_forward.1} parent=5 // pred_check
        %p3274 = pneg %p3273
      $region94: #{clip_motion_align_forward.1} parent=5 // pred_check_branch
        %3276 = sbr.rel (%p3274) target = $region96
      $region95: #{clip_motion_align_forward.1} parent=5 // pred_region
        %s3277 = ssub.s32 %s43, 2
        // Predicated region
        $region97: #{clip_motion_align_forward.1} parent=95 // pred_check
          %p3278 = pneg %p318
        $region98: #{clip_motion_align_forward.1} parent=95 // pred_check_branch
          %3280 = sbr.rel (%p3278) target = $region100
        $region99: #{clip_motion_align_forward.1} parent=95 // pred_region
          %s3281 = sand.u32 %s303, 1
          %s3282 = scalar_lea.sflag [#allocation7], %s3281
          %s3283 = sand.u32 %s303, 1
          %s3284 = scalar_lea.vmem [#allocation14], %s3283
          %3286 = dma.done %s3282, 16
        $region100: #{clip_motion_align_forward.1} parent=95 // pred_fallthru
          _
        // Predicated region
        $region101: #{clip_motion_align_forward.1} parent=95 // pred_check
          %p3287 = pneg %p344
        $region102: #{clip_motion_align_forward.1} parent=95 // pred_check_branch
          %3289 = sbr.rel (%p3287) target = $region104
        $region103: #{clip_motion_align_forward.1} parent=95 // pred_region
          %s3290 = sand.u32 %s329, 1
          %s3291 = scalar_lea.sflag [#allocation16], %s3290
          %s3292 = sand.u32 %s329, 1
          %s3293 = scalar_lea.vmem [#allocation15], %s3292
          %3295 = dma.done %s3291, 16
        $region104: #{clip_motion_align_forward.1} parent=95 // pred_fallthru
          _
      $region96: #{clip_motion_align_forward.1} parent=5 // pred_fallthru
        _
    $region6: #{clip_motion_align_forward.1} parent=1 // loop_footer
      %s47 = sadd.s32 1, %s43
    $region7: #{clip_motion_align_forward.1} parent=1 // loop_footer_branch
      %42 = sbr.rel target = $region3
    $region8: #{clip_motion_align_forward.1} parent=1 // loop_exit
      _
    %3296 = vsyncpa [#allocation6], 1
    %s3297 = scalar_lea.sflag [#allocation6], 1
    %3298 = vsyncpa %s3297, 1
    %3299 = vsyncpa [#allocation9], 1
    %3300 = vsyncpa [#allocation12], 1
    %3301 = vsyncpa [#allocation7], 1
    %s3302 = scalar_lea.sflag [#allocation7], 1
    %3303 = vsyncpa %s3302, 1
    %3304 = vsyncpa [#allocation16], 1
    %s3305 = scalar_lea.sflag [#allocation16], 1
    %3306 = vsyncpa %s3305, 1

</llo_original>
